<compile_context>
chip_gen: v5e
topology: v5e:2x2
jax: 0.10.0
libtpu: 0.0.40
codegen_flags: <defaults>
</compile_context>

<pallas_src>
import jax
import jax.numpy as jnp
from jax.experimental import pallas as pl
from jax.experimental.pallas import tpu as pltpu


def _fc_kernel(x_ref, w_ref, b_ref, o_ref):
    """y = x @ W + b in one shot (full K, full N) with f32 MXU accumulation."""
    x_bf = x_ref[...].astype(jnp.bfloat16)          # fold activation cast in-kernel
    o_ref[...] = (
        jnp.dot(x_bf, w_ref[...], preferred_element_type=jnp.float32)
        + b_ref[...]
    ).astype(o_ref.dtype)


def make_fc(w, b, *, transpose_w=False):
    """Bake Linear params once (cast/reshape at parameter-load time).

    w: (K, N) f32 weights (set transpose_w=True for a PyTorch (N, K) weight).
    b: (N,) f32 bias.
    Returns fc(x_flat) computing x_flat @ w + b with bf16-quantized weights.
    """
    if transpose_w:
        w = w.T
    K, N = w.shape
    w_bf = jnp.asarray(w, jnp.bfloat16)              # baked once, reused per call
    b_2d = jnp.asarray(b, jnp.float32).reshape(1, N)

    def fc(x_flat):
        B, K2 = x_flat.shape
        assert K2 == K
        return pl.pallas_call(
            _fc_kernel,
            out_shape=jax.ShapeDtypeStruct((B, N), jnp.float32),
            grid_spec=pltpu.PrefetchScalarGridSpec(
                num_scalar_prefetch=0,
                grid=(1,),
                in_specs=[
                    pl.BlockSpec((B, K), lambda i: (0, 0)),   # x (full array)
                    pl.BlockSpec((K, N), lambda i: (0, 0)),   # W (full array, bf16)
                    pl.BlockSpec((1, N), lambda i: (0, 0)),   # bias
                ],
                out_specs=pl.BlockSpec((B, N), lambda i: (0, 0)),
            ),
            compiler_params=pltpu.CompilerParams(
                dimension_semantics=("arbitrary",),
            ),
            cost_estimate=pl.CostEstimate(
                flops=2 * B * K * N,
                transcendentals=0,
                bytes_accessed=(B * K * 4) + (K * N * 2) + (N * 4) + (B * N * 4),
            ),
        )(x_flat, w_bf, b_2d)

    return fc


def net_forward(feat_nchw, fc):
    """feat_nchw: (B, 512, 3, 3) backbone output. Returns (B, 212) logits."""
    B = feat_nchw.shape[0]
    # torch's x.view(B, -1) flattens NCHW in C,H,W order; reshape matches that.
    x_flat = feat_nchw.reshape(B, -1)
    return fc(x_flat)


if __name__ == "__main__":
    key = jax.random.PRNGKey(0)
    k_x, k_w, k_b = jax.random.split(key, 3)

    B, C, H, W = 2, 512, 3, 3          # 512*3*3 = 4608 = fc.in_features
    IN_F, OUT_F = C * H * W, 212

    # Deterministic synthetic parameters (nn.Linear-like uniform init).
    bound = 1.0 / jnp.sqrt(IN_F)
    w = jax.random.uniform(k_w, (IN_F, OUT_F), jnp.float32, -bound, bound)
    b = jax.random.uniform(k_b, (OUT_F,), jnp.float32, -bound, bound)

    # One-time parameter bake (done at load time, not per forward).
    fc = make_fc(w, b)

    # Backbone feature map (stand-in for resnet_layer output).
    feat = jax.random.normal(k_x, (B, C, H, W), jnp.float32)

    out = net_forward(feat, fc)
    out = jax.block_until_ready(out)
    assert out.shape == (B, OUT_F)

    # Reference check against the same bf16 quantization (f32 accumulate).
    x_flat = feat.reshape(B, -1)
    x_bf = x_flat.astype(jnp.bfloat16).astype(jnp.float32)
    w_bf = w.astype(jnp.bfloat16).astype(jnp.float32)
    ref_bf = x_bf @ w_bf + b
    assert jnp.allclose(out, ref_bf, atol=1e-2, rtol=1e-2)

    # Looser sanity check against the full-f32 reference (bf16 quant noise).
    ref_f32 = x_flat @ w + b
    assert jnp.allclose(out, ref_f32, atol=5e-2, rtol=5e-2)

    print("KERNEL_OK")
</pallas_src>

<mosaic_0001>
module attributes {stable_mosaic.version = 11 : i64} {
  func.func @_fc_kernel(%arg0: i32, %arg1: memref<2x4608xf32, #tpu.memory_space<vmem>>, %arg2: memref<4608x212xbf16, #tpu.memory_space<vmem>>, %arg3: memref<1x212xf32, #tpu.memory_space<vmem>>, %arg4: memref<2x212xf32, #tpu.memory_space<vmem>>) attributes {dimension_semantics = [#tpu.dimension_semantics<arbitrary>], iteration_bounds = array<i64: 1>, scalar_prefetch = 0 : i64, scratch_operands = 0 : i64, tpu.core_type = #tpu.core_type<tc>, window_params = [{pipeline_mode = #tpu.pipeline_mode<synchronous>, transform_indices = @transform_0, window_bounds = array<i64: 2, 4608>}, {pipeline_mode = #tpu.pipeline_mode<synchronous>, transform_indices = @transform_1, window_bounds = array<i64: 4608, 212>}, {pipeline_mode = #tpu.pipeline_mode<synchronous>, transform_indices = @transform_2, window_bounds = array<i64: 1, 212>}, {pipeline_mode = #tpu.pipeline_mode<synchronous>, transform_indices = @transform_3, window_bounds = array<i64: 2, 212>}]} {
    %c0 = arith.constant 0 : index
    %c0_0 = arith.constant 0 : index
    %0 = vector.load %arg1[%c0, %c0_0] : memref<2x4608xf32, #tpu.memory_space<vmem>>, vector<2x4608xf32>
    %1 = arith.truncf %0 : vector<2x4608xf32> to vector<2x4608xbf16>
    %c0_1 = arith.constant 0 : index
    %c0_2 = arith.constant 0 : index
    %2 = vector.load %arg2[%c0_1, %c0_2] : memref<4608x212xbf16, #tpu.memory_space<vmem>>, vector<4608x212xbf16>
    %cst = arith.constant dense<0.000000e+00> : vector<2x212xf32>
    %3 = tpu.matmul %1, %2, %cst {dimension_numbers = #tpu.dot_dimension_numbers<[1], [0], [0], [1], [0, 0, 1, 1], [], []>} : vector<2x4608xbf16>, vector<4608x212xbf16>, vector<2x212xf32> -> vector<2x212xf32>
    %c0_3 = arith.constant 0 : index
    %c0_4 = arith.constant 0 : index
    %4 = vector.load %arg3[%c0_3, %c0_4] : memref<1x212xf32, #tpu.memory_space<vmem>>, vector<1x212xf32>
    %5 = vector.broadcast %4 : vector<1x212xf32> to vector<2x212xf32>
    %6 = arith.addf %3, %5 : vector<2x212xf32>
    %c0_5 = arith.constant 0 : index
    %c0_6 = arith.constant 0 : index
    %7 = vector.load %arg4[%c0_5, %c0_6] : memref<2x212xf32, #tpu.memory_space<vmem>>, vector<2x212xf32>
    tpu.vector_store %arg4[%c0_5, %c0_6], %6 {strides = array<i32>} : memref<2x212xf32, #tpu.memory_space<vmem>>, vector<2x212xf32>,
    return
  }
  func.func @transform_0(%arg0: i32) -> (i32, i32) {
    %c0_i32 = arith.constant 0 : i32
    %c0_i32_0 = arith.constant 0 : i32
    %c0_i32_1 = arith.constant 0 : i32
    return %c0_i32, %c0_i32_0 : i32, i32
  }
  func.func @transform_1(%arg0: i32) -> (i32, i32) {
    %c0_i32 = arith.constant 0 : i32
    %c0_i32_0 = arith.constant 0 : i32
    %c0_i32_1 = arith.constant 0 : i32
    return %c0_i32, %c0_i32_0 : i32, i32
  }
  func.func @transform_2(%arg0: i32) -> (i32, i32) {
    %c0_i32 = arith.constant 0 : i32
    %c0_i32_0 = arith.constant 0 : i32
    %c0_i32_1 = arith.constant 0 : i32
    return %c0_i32, %c0_i32_0 : i32, i32
  }
  func.func @transform_3(%arg0: i32) -> (i32, i32) {
    %c0_i32 = arith.constant 0 : i32
    %c0_i32_0 = arith.constant 0 : i32
    %c0_i32_1 = arith.constant 0 : i32
    return %c0_i32, %c0_i32_0 : i32, i32
  }
}

</mosaic_0001>

<llo_original>
// kernel: tpu_custom_call.1
$region0: #{tpu_custom_call.1}
  #allocation0 [shape = 'u32[]', space=smem, size = 0x4, offset = 0x4, fixed_abs, tag = 'smem constant byte address 0x4 - core index']
  #allocation1 [shape = 'u32[72,128]{1,0:T(1,128)}', space=vmem, size = 0x9000, scoped, tag = 'internal scratch']
  %s0 = inlined_call_operand.vmem [shape: f32[2,4608], index: 0, kind: input, shape index: {}]
  %s1 = inlined_call_operand.vmem [shape: bf16[4608,212], index: 1, kind: input, shape index: {}]
  %s2 = inlined_call_operand.vmem [shape: f32[1,212], index: 2, kind: input, shape index: {}]
  %s3 = inlined_call_operand.hbm [shape: f32[2,212], index: 3, kind: output, shape index: {}]
  %s4 = sld [smem:[#allocation0]]
  $region22: #{tpu_custom_call.1} parent=0
    _
  %s6 = ssub.s32 1, %s4
  %s7 = scalar_select 0, %s6, %s4
  $region1: #{tpu_custom_call.1} parent=0
    #allocation2 [shape = 'u8[2048]{0}', space=vmem, size = 0x800, scoped, tag = 'output window, operand 0, single buffered']
    #allocation3 [shape = 's32[1]{0}', space=sflag, size = 0x4, scoped, tag = 'scoped memory for tpu_custom_call.1']
    %8 = vsyncpa [#allocation3], 0
    // Predicated region
    $region2: #{tpu_custom_call.1} parent=1 // pred_check
      _
    $region3: #{tpu_custom_call.1} parent=1 // pred_check_branch
      %10 = sbr.rel (0) target = $region5
    $region4: #{tpu_custom_call.1} parent=1 // pred_region
      _
    $region5: #{tpu_custom_call.1} parent=1 // pred_fallthru
      _
    // Predicated region
    $region6: #{tpu_custom_call.1} parent=1 // pred_check
      _
    $region7: #{tpu_custom_call.1} parent=1 // pred_check_branch
      %12 = sbr.rel (0) target = $region9
    $region8: #{tpu_custom_call.1} parent=1 // pred_region
      _
    $region9: #{tpu_custom_call.1} parent=1 // pred_fallthru
      _
    // Predicated region
    $region10: #{tpu_custom_call.1} parent=1 // pred_check
      _
    $region11: #{tpu_custom_call.1} parent=1 // pred_check_branch
      %14 = sbr.rel (0) target = $region13
    $region12: #{tpu_custom_call.1} parent=1 // pred_region
      _
    $region13: #{tpu_custom_call.1} parent=1 // pred_fallthru
      _
    %v15 = vld [vmem:[%s0] sm:$0xff]
    %v16 = vld [vmem:[%s0 + $0x8] sm:$0xff]
    %v17 = vld [vmem:[%s0 + $0x10] sm:$0xff]
    %v18 = vld [vmem:[%s0 + $0x18] sm:$0xff]
    %v19 = vld [vmem:[%s0 + $0x20] sm:$0xff]
    %v20 = vld [vmem:[%s0 + $0x28] sm:$0xff]
    %v21 = vld [vmem:[%s0 + $0x30] sm:$0xff]
    %v22 = vld [vmem:[%s0 + $0x38] sm:$0xff]
    %v23 = vld [vmem:[%s0 + $0x40] sm:$0xff]
    %33 = vst [vmem:[#allocation1] ss:$4 sm:$0xff] %v15
    %s34 = scalar_lea.vmem [#allocation1], 32
    %35 = vst [vmem:[%s34] ss:$4 sm:$0xff] %v16
    %v36 = vld.sshfl [vmem:[#allocation1] sm:$0xff pattern:$0x73625140]
    %v37 = vld.sshfl [vmem:[#allocation1 + $0x8] sm:$0xff pattern:$0x73625140]
    %v38 = vld.sshfl [vmem:[#allocation1 + $0x10] sm:$0xff pattern:$0x73625140]
    %v39 = vld.sshfl [vmem:[#allocation1 + $0x18] sm:$0xff pattern:$0x73625140]
    %v40 = vld.sshfl [vmem:[#allocation1 + $0x20] sm:$0xff pattern:$0x73625140]
    %v41 = vld.sshfl [vmem:[#allocation1 + $0x28] sm:$0xff pattern:$0x73625140]
    %v42 = vld.sshfl [vmem:[#allocation1 + $0x30] sm:$0xff pattern:$0x73625140]
    %v43 = vld.sshfl [vmem:[#allocation1 + $0x38] sm:$0xff pattern:$0x73625140]
    %44 = vst [vmem:[#allocation1] ss:$4 sm:$0xff] %v17
    %45 = vst [vmem:[%s34] ss:$4 sm:$0xff] %v18
    %v46 = vld.sshfl [vmem:[#allocation1] sm:$0xff pattern:$0x73625140]
    %v47 = vld.sshfl [vmem:[#allocation1 + $0x8] sm:$0xff pattern:$0x73625140]
    %v48 = vld.sshfl [vmem:[#allocation1 + $0x10] sm:$0xff pattern:$0x73625140]
    %v49 = vld.sshfl [vmem:[#allocation1 + $0x18] sm:$0xff pattern:$0x73625140]
    %v50 = vld.sshfl [vmem:[#allocation1 + $0x20] sm:$0xff pattern:$0x73625140]
    %v51 = vld.sshfl [vmem:[#allocation1 + $0x28] sm:$0xff pattern:$0x73625140]
    %v52 = vld.sshfl [vmem:[#allocation1 + $0x30] sm:$0xff pattern:$0x73625140]
    %v53 = vld.sshfl [vmem:[#allocation1 + $0x38] sm:$0xff pattern:$0x73625140]
    %54 = vst [vmem:[#allocation1] ss:$4 sm:$0xff] %v19
    %55 = vst [vmem:[%s34] ss:$4 sm:$0xff] %v20
    %v56 = vld.sshfl [vmem:[#allocation1] sm:$0xff pattern:$0x73625140]
    %v57 = vld.sshfl [vmem:[#allocation1 + $0x8] sm:$0xff pattern:$0x73625140]
    %v58 = vld.sshfl [vmem:[#allocation1 + $0x10] sm:$0xff pattern:$0x73625140]
    %v59 = vld.sshfl [vmem:[#allocation1 + $0x18] sm:$0xff pattern:$0x73625140]
    %v60 = vld.sshfl [vmem:[#allocation1 + $0x20] sm:$0xff pattern:$0x73625140]
    %v61 = vld.sshfl [vmem:[#allocation1 + $0x28] sm:$0xff pattern:$0x73625140]
    %v62 = vld.sshfl [vmem:[#allocation1 + $0x30] sm:$0xff pattern:$0x73625140]
    %v63 = vld.sshfl [vmem:[#allocation1 + $0x38] sm:$0xff pattern:$0x73625140]
    %64 = vst [vmem:[#allocation1] ss:$4 sm:$0xff] %v21
    %65 = vst [vmem:[%s34] ss:$4 sm:$0xff] %v22
    %v66 = vld.sshfl [vmem:[#allocation1] sm:$0xff pattern:$0x73625140]
    %v67 = vld.sshfl [vmem:[#allocation1 + $0x8] sm:$0xff pattern:$0x73625140]
    %v68 = vld.sshfl [vmem:[#allocation1 + $0x10] sm:$0xff pattern:$0x73625140]
    %v69 = vld.sshfl [vmem:[#allocation1 + $0x18] sm:$0xff pattern:$0x73625140]
    %v70 = vld.sshfl [vmem:[#allocation1 + $0x20] sm:$0xff pattern:$0x73625140]
    %v71 = vld.sshfl [vmem:[#allocation1 + $0x28] sm:$0xff pattern:$0x73625140]
    %v72 = vld.sshfl [vmem:[#allocation1 + $0x30] sm:$0xff pattern:$0x73625140]
    %v73 = vld.sshfl [vmem:[#allocation1 + $0x38] sm:$0xff pattern:$0x73625140]
    %74 = vst [vmem:[#allocation1] ss:$4 sm:$0xff] %v23
    %v75 = vld.sshfl [vmem:[#allocation1] sm:$0xff pattern:$0x73625140]
    %v76 = vld.sshfl [vmem:[#allocation1 + $0x8] sm:$0xff pattern:$0x73625140]
    %v77 = vld.sshfl [vmem:[#allocation1 + $0x10] sm:$0xff pattern:$0x73625140]
    %v78 = vld.sshfl [vmem:[#allocation1 + $0x18] sm:$0xff pattern:$0x73625140]
    %v115 = vpack.c.bf16 %v36, %v36
    %v116 = vpack.c.bf16 %v37, %v37
    %v117 = vpack.c.bf16 %v38, %v38
    %v118 = vpack.c.bf16 %v39, %v39
    %v119 = vpack.c.bf16 %v40, %v40
    %v120 = vpack.c.bf16 %v41, %v41
    %v121 = vpack.c.bf16 %v42, %v42
    %v122 = vpack.c.bf16 %v43, %v43
    %v123 = vpack.c.bf16 %v46, %v46
    %v124 = vpack.c.bf16 %v47, %v47
    %v125 = vpack.c.bf16 %v48, %v48
    %v126 = vpack.c.bf16 %v49, %v49
    %v127 = vpack.c.bf16 %v50, %v50
    %v128 = vpack.c.bf16 %v51, %v51
    %v129 = vpack.c.bf16 %v52, %v52
    %v130 = vpack.c.bf16 %v53, %v53
    %v131 = vpack.c.bf16 %v56, %v56
    %v132 = vpack.c.bf16 %v57, %v57
    %v133 = vpack.c.bf16 %v58, %v58
    %v134 = vpack.c.bf16 %v59, %v59
    %v135 = vpack.c.bf16 %v60, %v60
    %v136 = vpack.c.bf16 %v61, %v61
    %v137 = vpack.c.bf16 %v62, %v62
    %v138 = vpack.c.bf16 %v63, %v63
    %v139 = vpack.c.bf16 %v66, %v66
    %v140 = vpack.c.bf16 %v67, %v67
    %v141 = vpack.c.bf16 %v68, %v68
    %v142 = vpack.c.bf16 %v69, %v69
    %v143 = vpack.c.bf16 %v70, %v70
    %v144 = vpack.c.bf16 %v71, %v71
    %v145 = vpack.c.bf16 %v72, %v72
    %v146 = vpack.c.bf16 %v73, %v73
    %v147 = vpack.c.bf16 %v75, %v75
    %v148 = vpack.c.bf16 %v76, %v76
    %v149 = vpack.c.bf16 %v77, %v77
    %v150 = vpack.c.bf16 %v78, %v78
    %v151 = vld [vmem:[%s1] sm:$0xff]
    %v152 = vld [vmem:[%s1 + $0x8] sm:$0xff]
    %v153 = vld [vmem:[%s1 + $0x10] sm:$0xff]
    %v154 = vld [vmem:[%s1 + $0x18] sm:$0xff]
    %v155 = vld [vmem:[%s1 + $0x20] sm:$0xff]
    %v156 = vld [vmem:[%s1 + $0x28] sm:$0xff]
    %v157 = vld [vmem:[%s1 + $0x30] sm:$0xff]
    %v158 = vld [vmem:[%s1 + $0x38] sm:$0xff]
    %v159 = vld [vmem:[%s1 + $0x40] sm:$0xff]
    %v160 = vld [vmem:[%s1 + $0x48] sm:$0xff]
    %v161 = vld [vmem:[%s1 + $0x50] sm:$0xff]
    %v162 = vld [vmem:[%s1 + $0x58] sm:$0xff]
    %v163 = vld [vmem:[%s1 + $0x60] sm:$0xff]
    %v164 = vld [vmem:[%s1 + $0x68] sm:$0xff]
    %v165 = vld [vmem:[%s1 + $0x70] sm:$0xff]
    %v166 = vld [vmem:[%s1 + $0x78] sm:$0xff]
    %v167 = vld [vmem:[%s1 + $0x80] sm:$0xff]
    %v168 = vld [vmem:[%s1 + $0x88] sm:$0xff]
    %v169 = vld [vmem:[%s1 + $0x90] sm:$0xff]
    %v170 = vld [vmem:[%s1 + $0x98] sm:$0xff]
    %v171 = vld [vmem:[%s1 + $0xa0] sm:$0xff]
    %v172 = vld [vmem:[%s1 + $0xa8] sm:$0xff]
    %v173 = vld [vmem:[%s1 + $0xb0] sm:$0xff]
    %v174 = vld [vmem:[%s1 + $0xb8] sm:$0xff]
    %v175 = vld [vmem:[%s1 + $0xc0] sm:$0xff]
    %v176 = vld [vmem:[%s1 + $0xc8] sm:$0xff]
    %v177 = vld [vmem:[%s1 + $0xd0] sm:$0xff]
    %v178 = vld [vmem:[%s1 + $0xd8] sm:$0xff]
    %v179 = vld [vmem:[%s1 + $0xe0] sm:$0xff]
    %v180 = vld [vmem:[%s1 + $0xe8] sm:$0xff]
    %v181 = vld [vmem:[%s1 + $0xf0] sm:$0xff]
    %v182 = vld [vmem:[%s1 + $0xf8] sm:$0xff]
    %v183 = vld [vmem:[%s1 + $0x100] sm:$0xff]
    %v184 = vld [vmem:[%s1 + $0x108] sm:$0xff]
    %v185 = vld [vmem:[%s1 + $0x110] sm:$0xff]
    %v186 = vld [vmem:[%s1 + $0x118] sm:$0xff]
    %v187 = vld [vmem:[%s1 + $0x120] sm:$0xff]
    %v188 = vld [vmem:[%s1 + $0x128] sm:$0xff]
    %v189 = vld [vmem:[%s1 + $0x130] sm:$0xff]
    %v190 = vld [vmem:[%s1 + $0x138] sm:$0xff]
    %v191 = vld [vmem:[%s1 + $0x140] sm:$0xff]
    %v192 = vld [vmem:[%s1 + $0x148] sm:$0xff]
    %v193 = vld [vmem:[%s1 + $0x150] sm:$0xff]
    %v194 = vld [vmem:[%s1 + $0x158] sm:$0xff]
    %v195 = vld [vmem:[%s1 + $0x160] sm:$0xff]
    %v196 = vld [vmem:[%s1 + $0x168] sm:$0xff]
    %v197 = vld [vmem:[%s1 + $0x170] sm:$0xff]
    %v198 = vld [vmem:[%s1 + $0x178] sm:$0xff]
    %v199 = vld [vmem:[%s1 + $0x180] sm:$0xff]
    %v200 = vld [vmem:[%s1 + $0x188] sm:$0xff]
    %v201 = vld [vmem:[%s1 + $0x190] sm:$0xff]
    %v202 = vld [vmem:[%s1 + $0x198] sm:$0xff]
    %v203 = vld [vmem:[%s1 + $0x1a0] sm:$0xff]
    %v204 = vld [vmem:[%s1 + $0x1a8] sm:$0xff]
    %v205 = vld [vmem:[%s1 + $0x1b0] sm:$0xff]
    %v206 = vld [vmem:[%s1 + $0x1b8] sm:$0xff]
    %v207 = vld [vmem:[%s1 + $0x1c0] sm:$0xff]
    %v208 = vld [vmem:[%s1 + $0x1c8] sm:$0xff]
    %v209 = vld [vmem:[%s1 + $0x1d0] sm:$0xff]
    %v210 = vld [vmem:[%s1 + $0x1d8] sm:$0xff]
    %v211 = vld [vmem:[%s1 + $0x1e0] sm:$0xff]
    %v212 = vld [vmem:[%s1 + $0x1e8] sm:$0xff]
    %v213 = vld [vmem:[%s1 + $0x1f0] sm:$0xff]
    %v214 = vld [vmem:[%s1 + $0x1f8] sm:$0xff]
    %v215 = vld [vmem:[%s1 + $0x200] sm:$0xff]
    %v216 = vld [vmem:[%s1 + $0x208] sm:$0xff]
    %v217 = vld [vmem:[%s1 + $0x210] sm:$0xff]
    %v218 = vld [vmem:[%s1 + $0x218] sm:$0xff]
    %v219 = vld [vmem:[%s1 + $0x220] sm:$0xff]
    %v220 = vld [vmem:[%s1 + $0x228] sm:$0xff]
    %v221 = vld [vmem:[%s1 + $0x230] sm:$0xff]
    %v222 = vld [vmem:[%s1 + $0x238] sm:$0xff]
    %v223 = vld [vmem:[%s1 + $0x240] sm:$0xff]
    %v224 = vld [vmem:[%s1 + $0x248] sm:$0xff]
    %v225 = vld [vmem:[%s1 + $0x250] sm:$0xff]
    %v226 = vld [vmem:[%s1 + $0x258] sm:$0xff]
    %v227 = vld [vmem:[%s1 + $0x260] sm:$0xff]
    %v228 = vld [vmem:[%s1 + $0x268] sm:$0xff]
    %v229 = vld [vmem:[%s1 + $0x270] sm:$0xff]
    %v230 = vld [vmem:[%s1 + $0x278] sm:$0xff]
    %v231 = vld [vmem:[%s1 + $0x280] sm:$0xff]
    %v232 = vld [vmem:[%s1 + $0x288] sm:$0xff]
    %v233 = vld [vmem:[%s1 + $0x290] sm:$0xff]
    %v234 = vld [vmem:[%s1 + $0x298] sm:$0xff]
    %v235 = vld [vmem:[%s1 + $0x2a0] sm:$0xff]
    %v236 = vld [vmem:[%s1 + $0x2a8] sm:$0xff]
    %v237 = vld [vmem:[%s1 + $0x2b0] sm:$0xff]
    %v238 = vld [vmem:[%s1 + $0x2b8] sm:$0xff]
    %v239 = vld [vmem:[%s1 + $0x2c0] sm:$0xff]
    %v240 = vld [vmem:[%s1 + $0x2c8] sm:$0xff]
    %v241 = vld [vmem:[%s1 + $0x2d0] sm:$0xff]
    %v242 = vld [vmem:[%s1 + $0x2d8] sm:$0xff]
    %v243 = vld [vmem:[%s1 + $0x2e0] sm:$0xff]
    %v244 = vld [vmem:[%s1 + $0x2e8] sm:$0xff]
    %v245 = vld [vmem:[%s1 + $0x2f0] sm:$0xff]
    %v246 = vld [vmem:[%s1 + $0x2f8] sm:$0xff]
    %v247 = vld [vmem:[%s1 + $0x300] sm:$0xff]
    %v248 = vld [vmem:[%s1 + $0x308] sm:$0xff]
    %v249 = vld [vmem:[%s1 + $0x310] sm:$0xff]
    %v250 = vld [vmem:[%s1 + $0x318] sm:$0xff]
    %v251 = vld [vmem:[%s1 + $0x320] sm:$0xff]
    %v252 = vld [vmem:[%s1 + $0x328] sm:$0xff]
    %v253 = vld [vmem:[%s1 + $0x330] sm:$0xff]
    %v254 = vld [vmem:[%s1 + $0x338] sm:$0xff]
    %v255 = vld [vmem:[%s1 + $0x340] sm:$0xff]
    %v256 = vld [vmem:[%s1 + $0x348] sm:$0xff]
    %v257 = vld [vmem:[%s1 + $0x350] sm:$0xff]
    %v258 = vld [vmem:[%s1 + $0x358] sm:$0xff]
    %v259 = vld [vmem:[%s1 + $0x360] sm:$0xff]
    %v260 = vld [vmem:[%s1 + $0x368] sm:$0xff]
    %v261 = vld [vmem:[%s1 + $0x370] sm:$0xff]
    %v262 = vld [vmem:[%s1 + $0x378] sm:$0xff]
    %v263 = vld [vmem:[%s1 + $0x380] sm:$0xff]
    %v264 = vld [vmem:[%s1 + $0x388] sm:$0xff]
    %v265 = vld [vmem:[%s1 + $0x390] sm:$0xff]
    %v266 = vld [vmem:[%s1 + $0x398] sm:$0xff]
    %v267 = vld [vmem:[%s1 + $0x3a0] sm:$0xff]
    %v268 = vld [vmem:[%s1 + $0x3a8] sm:$0xff]
    %v269 = vld [vmem:[%s1 + $0x3b0] sm:$0xff]
    %v270 = vld [vmem:[%s1 + $0x3b8] sm:$0xff]
    %v271 = vld [vmem:[%s1 + $0x3c0] sm:$0xff]
    %v272 = vld [vmem:[%s1 + $0x3c8] sm:$0xff]
    %v273 = vld [vmem:[%s1 + $0x3d0] sm:$0xff]
    %v274 = vld [vmem:[%s1 + $0x3d8] sm:$0xff]
    %v275 = vld [vmem:[%s1 + $0x3e0] sm:$0xff]
    %v276 = vld [vmem:[%s1 + $0x3e8] sm:$0xff]
    %v277 = vld [vmem:[%s1 + $0x3f0] sm:$0xff]
    %v278 = vld [vmem:[%s1 + $0x3f8] sm:$0xff]
    %v279 = vld [vmem:[%s1 + $0x400] sm:$0xff]
    %v280 = vld [vmem:[%s1 + $0x408] sm:$0xff]
    %v281 = vld [vmem:[%s1 + $0x410] sm:$0xff]
    %v282 = vld [vmem:[%s1 + $0x418] sm:$0xff]
    %v283 = vld [vmem:[%s1 + $0x420] sm:$0xff]
    %v284 = vld [vmem:[%s1 + $0x428] sm:$0xff]
    %v285 = vld [vmem:[%s1 + $0x430] sm:$0xff]
    %v286 = vld [vmem:[%s1 + $0x438] sm:$0xff]
    %v287 = vld [vmem:[%s1 + $0x440] sm:$0xff]
    %v288 = vld [vmem:[%s1 + $0x448] sm:$0xff]
    %v289 = vld [vmem:[%s1 + $0x450] sm:$0xff]
    %v290 = vld [vmem:[%s1 + $0x458] sm:$0xff]
    %v291 = vld [vmem:[%s1 + $0x460] sm:$0xff]
    %v292 = vld [vmem:[%s1 + $0x468] sm:$0xff]
    %v293 = vld [vmem:[%s1 + $0x470] sm:$0xff]
    %v294 = vld [vmem:[%s1 + $0x478] sm:$0xff]
    %v295 = vld [vmem:[%s1 + $0x480] sm:$0xff]
    %v296 = vld [vmem:[%s1 + $0x488] sm:$0xff]
    %v297 = vld [vmem:[%s1 + $0x490] sm:$0xff]
    %v298 = vld [vmem:[%s1 + $0x498] sm:$0xff]
    %v299 = vld [vmem:[%s1 + $0x4a0] sm:$0xff]
    %v300 = vld [vmem:[%s1 + $0x4a8] sm:$0xff]
    %v301 = vld [vmem:[%s1 + $0x4b0] sm:$0xff]
    %v302 = vld [vmem:[%s1 + $0x4b8] sm:$0xff]
    %v303 = vld [vmem:[%s1 + $0x4c0] sm:$0xff]
    %v304 = vld [vmem:[%s1 + $0x4c8] sm:$0xff]
    %v305 = vld [vmem:[%s1 + $0x4d0] sm:$0xff]
    %v306 = vld [vmem:[%s1 + $0x4d8] sm:$0xff]
    %v307 = vld [vmem:[%s1 + $0x4e0] sm:$0xff]
    %v308 = vld [vmem:[%s1 + $0x4e8] sm:$0xff]
    %v309 = vld [vmem:[%s1 + $0x4f0] sm:$0xff]
    %v310 = vld [vmem:[%s1 + $0x4f8] sm:$0xff]
    %v311 = vld [vmem:[%s1 + $0x500] sm:$0xff]
    %v312 = vld [vmem:[%s1 + $0x508] sm:$0xff]
    %v313 = vld [vmem:[%s1 + $0x510] sm:$0xff]
    %v314 = vld [vmem:[%s1 + $0x518] sm:$0xff]
    %v315 = vld [vmem:[%s1 + $0x520] sm:$0xff]
    %v316 = vld [vmem:[%s1 + $0x528] sm:$0xff]
    %v317 = vld [vmem:[%s1 + $0x530] sm:$0xff]
    %v318 = vld [vmem:[%s1 + $0x538] sm:$0xff]
    %v319 = vld [vmem:[%s1 + $0x540] sm:$0xff]
    %v320 = vld [vmem:[%s1 + $0x548] sm:$0xff]
    %v321 = vld [vmem:[%s1 + $0x550] sm:$0xff]
    %v322 = vld [vmem:[%s1 + $0x558] sm:$0xff]
    %v323 = vld [vmem:[%s1 + $0x560] sm:$0xff]
    %v324 = vld [vmem:[%s1 + $0x568] sm:$0xff]
    %v325 = vld [vmem:[%s1 + $0x570] sm:$0xff]
    %v326 = vld [vmem:[%s1 + $0x578] sm:$0xff]
    %v327 = vld [vmem:[%s1 + $0x580] sm:$0xff]
    %v328 = vld [vmem:[%s1 + $0x588] sm:$0xff]
    %v329 = vld [vmem:[%s1 + $0x590] sm:$0xff]
    %v330 = vld [vmem:[%s1 + $0x598] sm:$0xff]
    %v331 = vld [vmem:[%s1 + $0x5a0] sm:$0xff]
    %v332 = vld [vmem:[%s1 + $0x5a8] sm:$0xff]
    %v333 = vld [vmem:[%s1 + $0x5b0] sm:$0xff]
    %v334 = vld [vmem:[%s1 + $0x5b8] sm:$0xff]
    %v335 = vld [vmem:[%s1 + $0x5c0] sm:$0xff]
    %v336 = vld [vmem:[%s1 + $0x5c8] sm:$0xff]
    %v337 = vld [vmem:[%s1 + $0x5d0] sm:$0xff]
    %v338 = vld [vmem:[%s1 + $0x5d8] sm:$0xff]
    %v339 = vld [vmem:[%s1 + $0x5e0] sm:$0xff]
    %v340 = vld [vmem:[%s1 + $0x5e8] sm:$0xff]
    %v341 = vld [vmem:[%s1 + $0x5f0] sm:$0xff]
    %v342 = vld [vmem:[%s1 + $0x5f8] sm:$0xff]
    %v343 = vld [vmem:[%s1 + $0x600] sm:$0xff]
    %v344 = vld [vmem:[%s1 + $0x608] sm:$0xff]
    %v345 = vld [vmem:[%s1 + $0x610] sm:$0xff]
    %v346 = vld [vmem:[%s1 + $0x618] sm:$0xff]
    %v347 = vld [vmem:[%s1 + $0x620] sm:$0xff]
    %v348 = vld [vmem:[%s1 + $0x628] sm:$0xff]
    %v349 = vld [vmem:[%s1 + $0x630] sm:$0xff]
    %v350 = vld [vmem:[%s1 + $0x638] sm:$0xff]
    %v351 = vld [vmem:[%s1 + $0x640] sm:$0xff]
    %v352 = vld [vmem:[%s1 + $0x648] sm:$0xff]
    %v353 = vld [vmem:[%s1 + $0x650] sm:$0xff]
    %v354 = vld [vmem:[%s1 + $0x658] sm:$0xff]
    %v355 = vld [vmem:[%s1 + $0x660] sm:$0xff]
    %v356 = vld [vmem:[%s1 + $0x668] sm:$0xff]
    %v357 = vld [vmem:[%s1 + $0x670] sm:$0xff]
    %v358 = vld [vmem:[%s1 + $0x678] sm:$0xff]
    %v359 = vld [vmem:[%s1 + $0x680] sm:$0xff]
    %v360 = vld [vmem:[%s1 + $0x688] sm:$0xff]
    %v361 = vld [vmem:[%s1 + $0x690] sm:$0xff]
    %v362 = vld [vmem:[%s1 + $0x698] sm:$0xff]
    %v363 = vld [vmem:[%s1 + $0x6a0] sm:$0xff]
    %v364 = vld [vmem:[%s1 + $0x6a8] sm:$0xff]
    %v365 = vld [vmem:[%s1 + $0x6b0] sm:$0xff]
    %v366 = vld [vmem:[%s1 + $0x6b8] sm:$0xff]
    %v367 = vld [vmem:[%s1 + $0x6c0] sm:$0xff]
    %v368 = vld [vmem:[%s1 + $0x6c8] sm:$0xff]
    %v369 = vld [vmem:[%s1 + $0x6d0] sm:$0xff]
    %v370 = vld [vmem:[%s1 + $0x6d8] sm:$0xff]
    %v371 = vld [vmem:[%s1 + $0x6e0] sm:$0xff]
    %v372 = vld [vmem:[%s1 + $0x6e8] sm:$0xff]
    %v373 = vld [vmem:[%s1 + $0x6f0] sm:$0xff]
    %v374 = vld [vmem:[%s1 + $0x6f8] sm:$0xff]
    %v375 = vld [vmem:[%s1 + $0x700] sm:$0xff]
    %v376 = vld [vmem:[%s1 + $0x708] sm:$0xff]
    %v377 = vld [vmem:[%s1 + $0x710] sm:$0xff]
    %v378 = vld [vmem:[%s1 + $0x718] sm:$0xff]
    %v379 = vld [vmem:[%s1 + $0x720] sm:$0xff]
    %v380 = vld [vmem:[%s1 + $0x728] sm:$0xff]
    %v381 = vld [vmem:[%s1 + $0x730] sm:$0xff]
    %v382 = vld [vmem:[%s1 + $0x738] sm:$0xff]
    %v383 = vld [vmem:[%s1 + $0x740] sm:$0xff]
    %v384 = vld [vmem:[%s1 + $0x748] sm:$0xff]
    %v385 = vld [vmem:[%s1 + $0x750] sm:$0xff]
    %v386 = vld [vmem:[%s1 + $0x758] sm:$0xff]
    %v387 = vld [vmem:[%s1 + $0x760] sm:$0xff]
    %v388 = vld [vmem:[%s1 + $0x768] sm:$0xff]
    %v389 = vld [vmem:[%s1 + $0x770] sm:$0xff]
    %v390 = vld [vmem:[%s1 + $0x778] sm:$0xff]
    %v391 = vld [vmem:[%s1 + $0x780] sm:$0xff]
    %v392 = vld [vmem:[%s1 + $0x788] sm:$0xff]
    %v393 = vld [vmem:[%s1 + $0x790] sm:$0xff]
    %v394 = vld [vmem:[%s1 + $0x798] sm:$0xff]
    %v395 = vld [vmem:[%s1 + $0x7a0] sm:$0xff]
    %v396 = vld [vmem:[%s1 + $0x7a8] sm:$0xff]
    %v397 = vld [vmem:[%s1 + $0x7b0] sm:$0xff]
    %v398 = vld [vmem:[%s1 + $0x7b8] sm:$0xff]
    %v399 = vld [vmem:[%s1 + $0x7c0] sm:$0xff]
    %v400 = vld [vmem:[%s1 + $0x7c8] sm:$0xff]
    %v401 = vld [vmem:[%s1 + $0x7d0] sm:$0xff]
    %v402 = vld [vmem:[%s1 + $0x7d8] sm:$0xff]
    %v403 = vld [vmem:[%s1 + $0x7e0] sm:$0xff]
    %v404 = vld [vmem:[%s1 + $0x7e8] sm:$0xff]
    %v405 = vld [vmem:[%s1 + $0x7f0] sm:$0xff]
    %v406 = vld [vmem:[%s1 + $0x7f8] sm:$0xff]
    %v407 = vld [vmem:[%s1 + $0x800] sm:$0xff]
    %v408 = vld [vmem:[%s1 + $0x808] sm:$0xff]
    %v409 = vld [vmem:[%s1 + $0x810] sm:$0xff]
    %v410 = vld [vmem:[%s1 + $0x818] sm:$0xff]
    %v411 = vld [vmem:[%s1 + $0x820] sm:$0xff]
    %v412 = vld [vmem:[%s1 + $0x828] sm:$0xff]
    %v413 = vld [vmem:[%s1 + $0x830] sm:$0xff]
    %v414 = vld [vmem:[%s1 + $0x838] sm:$0xff]
    %v415 = vld [vmem:[%s1 + $0x840] sm:$0xff]
    %v416 = vld [vmem:[%s1 + $0x848] sm:$0xff]
    %v417 = vld [vmem:[%s1 + $0x850] sm:$0xff]
    %v418 = vld [vmem:[%s1 + $0x858] sm:$0xff]
    %v419 = vld [vmem:[%s1 + $0x860] sm:$0xff]
    %v420 = vld [vmem:[%s1 + $0x868] sm:$0xff]
    %v421 = vld [vmem:[%s1 + $0x870] sm:$0xff]
    %v422 = vld [vmem:[%s1 + $0x878] sm:$0xff]
    %v423 = vld [vmem:[%s1 + $0x880] sm:$0xff]
    %v424 = vld [vmem:[%s1 + $0x888] sm:$0xff]
    %v425 = vld [vmem:[%s1 + $0x890] sm:$0xff]
    %v426 = vld [vmem:[%s1 + $0x898] sm:$0xff]
    %v427 = vld [vmem:[%s1 + $0x8a0] sm:$0xff]
    %v428 = vld [vmem:[%s1 + $0x8a8] sm:$0xff]
    %v429 = vld [vmem:[%s1 + $0x8b0] sm:$0xff]
    %v430 = vld [vmem:[%s1 + $0x8b8] sm:$0xff]
    %v431 = vld [vmem:[%s1 + $0x8c0] sm:$0xff]
    %v432 = vld [vmem:[%s1 + $0x8c8] sm:$0xff]
    %v433 = vld [vmem:[%s1 + $0x8d0] sm:$0xff]
    %v434 = vld [vmem:[%s1 + $0x8d8] sm:$0xff]
    %v435 = vld [vmem:[%s1 + $0x8e0] sm:$0xff]
    %v436 = vld [vmem:[%s1 + $0x8e8] sm:$0xff]
    %v437 = vld [vmem:[%s1 + $0x8f0] sm:$0xff]
    %v438 = vld [vmem:[%s1 + $0x8f8] sm:$0xff]
    %v439 = vld [vmem:[%s1 + $0x900] sm:$0xff]
    %v440 = vld [vmem:[%s1 + $0x908] sm:$0xff]
    %v441 = vld [vmem:[%s1 + $0x910] sm:$0xff]
    %v442 = vld [vmem:[%s1 + $0x918] sm:$0xff]
    %v443 = vld [vmem:[%s1 + $0x920] sm:$0xff]
    %v444 = vld [vmem:[%s1 + $0x928] sm:$0xff]
    %v445 = vld [vmem:[%s1 + $0x930] sm:$0xff]
    %v446 = vld [vmem:[%s1 + $0x938] sm:$0xff]
    %v447 = vld [vmem:[%s1 + $0x940] sm:$0xff]
    %v448 = vld [vmem:[%s1 + $0x948] sm:$0xff]
    %v449 = vld [vmem:[%s1 + $0x950] sm:$0xff]
    %v450 = vld [vmem:[%s1 + $0x958] sm:$0xff]
    %v451 = vld [vmem:[%s1 + $0x960] sm:$0xff]
    %v452 = vld [vmem:[%s1 + $0x968] sm:$0xff]
    %v453 = vld [vmem:[%s1 + $0x970] sm:$0xff]
    %v454 = vld [vmem:[%s1 + $0x978] sm:$0xff]
    %v455 = vld [vmem:[%s1 + $0x980] sm:$0xff]
    %v456 = vld [vmem:[%s1 + $0x988] sm:$0xff]
    %v457 = vld [vmem:[%s1 + $0x990] sm:$0xff]
    %v458 = vld [vmem:[%s1 + $0x998] sm:$0xff]
    %v459 = vld [vmem:[%s1 + $0x9a0] sm:$0xff]
    %v460 = vld [vmem:[%s1 + $0x9a8] sm:$0xff]
    %v461 = vld [vmem:[%s1 + $0x9b0] sm:$0xff]
    %v462 = vld [vmem:[%s1 + $0x9b8] sm:$0xff]
    %v463 = vld [vmem:[%s1 + $0x9c0] sm:$0xff]
    %v464 = vld [vmem:[%s1 + $0x9c8] sm:$0xff]
    %v465 = vld [vmem:[%s1 + $0x9d0] sm:$0xff]
    %v466 = vld [vmem:[%s1 + $0x9d8] sm:$0xff]
    %v467 = vld [vmem:[%s1 + $0x9e0] sm:$0xff]
    %v468 = vld [vmem:[%s1 + $0x9e8] sm:$0xff]
    %v469 = vld [vmem:[%s1 + $0x9f0] sm:$0xff]
    %v470 = vld [vmem:[%s1 + $0x9f8] sm:$0xff]
    %v471 = vld [vmem:[%s1 + $0xa00] sm:$0xff]
    %v472 = vld [vmem:[%s1 + $0xa08] sm:$0xff]
    %v473 = vld [vmem:[%s1 + $0xa10] sm:$0xff]
    %v474 = vld [vmem:[%s1 + $0xa18] sm:$0xff]
    %v475 = vld [vmem:[%s1 + $0xa20] sm:$0xff]
    %v476 = vld [vmem:[%s1 + $0xa28] sm:$0xff]
    %v477 = vld [vmem:[%s1 + $0xa30] sm:$0xff]
    %v478 = vld [vmem:[%s1 + $0xa38] sm:$0xff]
    %v479 = vld [vmem:[%s1 + $0xa40] sm:$0xff]
    %v480 = vld [vmem:[%s1 + $0xa48] sm:$0xff]
    %v481 = vld [vmem:[%s1 + $0xa50] sm:$0xff]
    %v482 = vld [vmem:[%s1 + $0xa58] sm:$0xff]
    %v483 = vld [vmem:[%s1 + $0xa60] sm:$0xff]
    %v484 = vld [vmem:[%s1 + $0xa68] sm:$0xff]
    %v485 = vld [vmem:[%s1 + $0xa70] sm:$0xff]
    %v486 = vld [vmem:[%s1 + $0xa78] sm:$0xff]
    %v487 = vld [vmem:[%s1 + $0xa80] sm:$0xff]
    %v488 = vld [vmem:[%s1 + $0xa88] sm:$0xff]
    %v489 = vld [vmem:[%s1 + $0xa90] sm:$0xff]
    %v490 = vld [vmem:[%s1 + $0xa98] sm:$0xff]
    %v491 = vld [vmem:[%s1 + $0xaa0] sm:$0xff]
    %v492 = vld [vmem:[%s1 + $0xaa8] sm:$0xff]
    %v493 = vld [vmem:[%s1 + $0xab0] sm:$0xff]
    %v494 = vld [vmem:[%s1 + $0xab8] sm:$0xff]
    %v495 = vld [vmem:[%s1 + $0xac0] sm:$0xff]
    %v496 = vld [vmem:[%s1 + $0xac8] sm:$0xff]
    %v497 = vld [vmem:[%s1 + $0xad0] sm:$0xff]
    %v498 = vld [vmem:[%s1 + $0xad8] sm:$0xff]
    %v499 = vld [vmem:[%s1 + $0xae0] sm:$0xff]
    %v500 = vld [vmem:[%s1 + $0xae8] sm:$0xff]
    %v501 = vld [vmem:[%s1 + $0xaf0] sm:$0xff]
    %v502 = vld [vmem:[%s1 + $0xaf8] sm:$0xff]
    %v503 = vld [vmem:[%s1 + $0xb00] sm:$0xff]
    %v504 = vld [vmem:[%s1 + $0xb08] sm:$0xff]
    %v505 = vld [vmem:[%s1 + $0xb10] sm:$0xff]
    %v506 = vld [vmem:[%s1 + $0xb18] sm:$0xff]
    %v507 = vld [vmem:[%s1 + $0xb20] sm:$0xff]
    %v508 = vld [vmem:[%s1 + $0xb28] sm:$0xff]
    %v509 = vld [vmem:[%s1 + $0xb30] sm:$0xff]
    %v510 = vld [vmem:[%s1 + $0xb38] sm:$0xff]
    %v511 = vld [vmem:[%s1 + $0xb40] sm:$0xff]
    %v512 = vld [vmem:[%s1 + $0xb48] sm:$0xff]
    %v513 = vld [vmem:[%s1 + $0xb50] sm:$0xff]
    %v514 = vld [vmem:[%s1 + $0xb58] sm:$0xff]
    %v515 = vld [vmem:[%s1 + $0xb60] sm:$0xff]
    %v516 = vld [vmem:[%s1 + $0xb68] sm:$0xff]
    %v517 = vld [vmem:[%s1 + $0xb70] sm:$0xff]
    %v518 = vld [vmem:[%s1 + $0xb78] sm:$0xff]
    %v519 = vld [vmem:[%s1 + $0xb80] sm:$0xff]
    %v520 = vld [vmem:[%s1 + $0xb88] sm:$0xff]
    %v521 = vld [vmem:[%s1 + $0xb90] sm:$0xff]
    %v522 = vld [vmem:[%s1 + $0xb98] sm:$0xff]
    %v523 = vld [vmem:[%s1 + $0xba0] sm:$0xff]
    %v524 = vld [vmem:[%s1 + $0xba8] sm:$0xff]
    %v525 = vld [vmem:[%s1 + $0xbb0] sm:$0xff]
    %v526 = vld [vmem:[%s1 + $0xbb8] sm:$0xff]
    %v527 = vld [vmem:[%s1 + $0xbc0] sm:$0xff]
    %v528 = vld [vmem:[%s1 + $0xbc8] sm:$0xff]
    %v529 = vld [vmem:[%s1 + $0xbd0] sm:$0xff]
    %v530 = vld [vmem:[%s1 + $0xbd8] sm:$0xff]
    %v531 = vld [vmem:[%s1 + $0xbe0] sm:$0xff]
    %v532 = vld [vmem:[%s1 + $0xbe8] sm:$0xff]
    %v533 = vld [vmem:[%s1 + $0xbf0] sm:$0xff]
    %v534 = vld [vmem:[%s1 + $0xbf8] sm:$0xff]
    %v535 = vld [vmem:[%s1 + $0xc00] sm:$0xff]
    %v536 = vld [vmem:[%s1 + $0xc08] sm:$0xff]
    %v537 = vld [vmem:[%s1 + $0xc10] sm:$0xff]
    %v538 = vld [vmem:[%s1 + $0xc18] sm:$0xff]
    %v539 = vld [vmem:[%s1 + $0xc20] sm:$0xff]
    %v540 = vld [vmem:[%s1 + $0xc28] sm:$0xff]
    %v541 = vld [vmem:[%s1 + $0xc30] sm:$0xff]
    %v542 = vld [vmem:[%s1 + $0xc38] sm:$0xff]
    %v543 = vld [vmem:[%s1 + $0xc40] sm:$0xff]
    %v544 = vld [vmem:[%s1 + $0xc48] sm:$0xff]
    %v545 = vld [vmem:[%s1 + $0xc50] sm:$0xff]
    %v546 = vld [vmem:[%s1 + $0xc58] sm:$0xff]
    %v547 = vld [vmem:[%s1 + $0xc60] sm:$0xff]
    %v548 = vld [vmem:[%s1 + $0xc68] sm:$0xff]
    %v549 = vld [vmem:[%s1 + $0xc70] sm:$0xff]
    %v550 = vld [vmem:[%s1 + $0xc78] sm:$0xff]
    %v551 = vld [vmem:[%s1 + $0xc80] sm:$0xff]
    %v552 = vld [vmem:[%s1 + $0xc88] sm:$0xff]
    %v553 = vld [vmem:[%s1 + $0xc90] sm:$0xff]
    %v554 = vld [vmem:[%s1 + $0xc98] sm:$0xff]
    %v555 = vld [vmem:[%s1 + $0xca0] sm:$0xff]
    %v556 = vld [vmem:[%s1 + $0xca8] sm:$0xff]
    %v557 = vld [vmem:[%s1 + $0xcb0] sm:$0xff]
    %v558 = vld [vmem:[%s1 + $0xcb8] sm:$0xff]
    %v559 = vld [vmem:[%s1 + $0xcc0] sm:$0xff]
    %v560 = vld [vmem:[%s1 + $0xcc8] sm:$0xff]
    %v561 = vld [vmem:[%s1 + $0xcd0] sm:$0xff]
    %v562 = vld [vmem:[%s1 + $0xcd8] sm:$0xff]
    %v563 = vld [vmem:[%s1 + $0xce0] sm:$0xff]
    %v564 = vld [vmem:[%s1 + $0xce8] sm:$0xff]
    %v565 = vld [vmem:[%s1 + $0xcf0] sm:$0xff]
    %v566 = vld [vmem:[%s1 + $0xcf8] sm:$0xff]
    %v567 = vld [vmem:[%s1 + $0xd00] sm:$0xff]
    %v568 = vld [vmem:[%s1 + $0xd08] sm:$0xff]
    %v569 = vld [vmem:[%s1 + $0xd10] sm:$0xff]
    %v570 = vld [vmem:[%s1 + $0xd18] sm:$0xff]
    %v571 = vld [vmem:[%s1 + $0xd20] sm:$0xff]
    %v572 = vld [vmem:[%s1 + $0xd28] sm:$0xff]
    %v573 = vld [vmem:[%s1 + $0xd30] sm:$0xff]
    %v574 = vld [vmem:[%s1 + $0xd38] sm:$0xff]
    %v575 = vld [vmem:[%s1 + $0xd40] sm:$0xff]
    %v576 = vld [vmem:[%s1 + $0xd48] sm:$0xff]
    %v577 = vld [vmem:[%s1 + $0xd50] sm:$0xff]
    %v578 = vld [vmem:[%s1 + $0xd58] sm:$0xff]
    %v579 = vld [vmem:[%s1 + $0xd60] sm:$0xff]
    %v580 = vld [vmem:[%s1 + $0xd68] sm:$0xff]
    %v581 = vld [vmem:[%s1 + $0xd70] sm:$0xff]
    %v582 = vld [vmem:[%s1 + $0xd78] sm:$0xff]
    %v583 = vld [vmem:[%s1 + $0xd80] sm:$0xff]
    %v584 = vld [vmem:[%s1 + $0xd88] sm:$0xff]
    %v585 = vld [vmem:[%s1 + $0xd90] sm:$0xff]
    %v586 = vld [vmem:[%s1 + $0xd98] sm:$0xff]
    %v587 = vld [vmem:[%s1 + $0xda0] sm:$0xff]
    %v588 = vld [vmem:[%s1 + $0xda8] sm:$0xff]
    %v589 = vld [vmem:[%s1 + $0xdb0] sm:$0xff]
    %v590 = vld [vmem:[%s1 + $0xdb8] sm:$0xff]
    %v591 = vld [vmem:[%s1 + $0xdc0] sm:$0xff]
    %v592 = vld [vmem:[%s1 + $0xdc8] sm:$0xff]
    %v593 = vld [vmem:[%s1 + $0xdd0] sm:$0xff]
    %v594 = vld [vmem:[%s1 + $0xdd8] sm:$0xff]
    %v595 = vld [vmem:[%s1 + $0xde0] sm:$0xff]
    %v596 = vld [vmem:[%s1 + $0xde8] sm:$0xff]
    %v597 = vld [vmem:[%s1 + $0xdf0] sm:$0xff]
    %v598 = vld [vmem:[%s1 + $0xdf8] sm:$0xff]
    %v599 = vld [vmem:[%s1 + $0xe00] sm:$0xff]
    %v600 = vld [vmem:[%s1 + $0xe08] sm:$0xff]
    %v601 = vld [vmem:[%s1 + $0xe10] sm:$0xff]
    %v602 = vld [vmem:[%s1 + $0xe18] sm:$0xff]
    %v603 = vld [vmem:[%s1 + $0xe20] sm:$0xff]
    %v604 = vld [vmem:[%s1 + $0xe28] sm:$0xff]
    %v605 = vld [vmem:[%s1 + $0xe30] sm:$0xff]
    %v606 = vld [vmem:[%s1 + $0xe38] sm:$0xff]
    %v607 = vld [vmem:[%s1 + $0xe40] sm:$0xff]
    %v608 = vld [vmem:[%s1 + $0xe48] sm:$0xff]
    %v609 = vld [vmem:[%s1 + $0xe50] sm:$0xff]
    %v610 = vld [vmem:[%s1 + $0xe58] sm:$0xff]
    %v611 = vld [vmem:[%s1 + $0xe60] sm:$0xff]
    %v612 = vld [vmem:[%s1 + $0xe68] sm:$0xff]
    %v613 = vld [vmem:[%s1 + $0xe70] sm:$0xff]
    %v614 = vld [vmem:[%s1 + $0xe78] sm:$0xff]
    %v615 = vld [vmem:[%s1 + $0xe80] sm:$0xff]
    %v616 = vld [vmem:[%s1 + $0xe88] sm:$0xff]
    %v617 = vld [vmem:[%s1 + $0xe90] sm:$0xff]
    %v618 = vld [vmem:[%s1 + $0xe98] sm:$0xff]
    %v619 = vld [vmem:[%s1 + $0xea0] sm:$0xff]
    %v620 = vld [vmem:[%s1 + $0xea8] sm:$0xff]
    %v621 = vld [vmem:[%s1 + $0xeb0] sm:$0xff]
    %v622 = vld [vmem:[%s1 + $0xeb8] sm:$0xff]
    %v623 = vld [vmem:[%s1 + $0xec0] sm:$0xff]
    %v624 = vld [vmem:[%s1 + $0xec8] sm:$0xff]
    %v625 = vld [vmem:[%s1 + $0xed0] sm:$0xff]
    %v626 = vld [vmem:[%s1 + $0xed8] sm:$0xff]
    %v627 = vld [vmem:[%s1 + $0xee0] sm:$0xff]
    %v628 = vld [vmem:[%s1 + $0xee8] sm:$0xff]
    %v629 = vld [vmem:[%s1 + $0xef0] sm:$0xff]
    %v630 = vld [vmem:[%s1 + $0xef8] sm:$0xff]
    %v631 = vld [vmem:[%s1 + $0xf00] sm:$0xff]
    %v632 = vld [vmem:[%s1 + $0xf08] sm:$0xff]
    %v633 = vld [vmem:[%s1 + $0xf10] sm:$0xff]
    %v634 = vld [vmem:[%s1 + $0xf18] sm:$0xff]
    %v635 = vld [vmem:[%s1 + $0xf20] sm:$0xff]
    %v636 = vld [vmem:[%s1 + $0xf28] sm:$0xff]
    %v637 = vld [vmem:[%s1 + $0xf30] sm:$0xff]
    %v638 = vld [vmem:[%s1 + $0xf38] sm:$0xff]
    %v639 = vld [vmem:[%s1 + $0xf40] sm:$0xff]
    %v640 = vld [vmem:[%s1 + $0xf48] sm:$0xff]
    %v641 = vld [vmem:[%s1 + $0xf50] sm:$0xff]
    %v642 = vld [vmem:[%s1 + $0xf58] sm:$0xff]
    %v643 = vld [vmem:[%s1 + $0xf60] sm:$0xff]
    %v644 = vld [vmem:[%s1 + $0xf68] sm:$0xff]
    %v645 = vld [vmem:[%s1 + $0xf70] sm:$0xff]
    %v646 = vld [vmem:[%s1 + $0xf78] sm:$0xff]
    %v647 = vld [vmem:[%s1 + $0xf80] sm:$0xff]
    %v648 = vld [vmem:[%s1 + $0xf88] sm:$0xff]
    %v649 = vld [vmem:[%s1 + $0xf90] sm:$0xff]
    %v650 = vld [vmem:[%s1 + $0xf98] sm:$0xff]
    %v651 = vld [vmem:[%s1 + $0xfa0] sm:$0xff]
    %v652 = vld [vmem:[%s1 + $0xfa8] sm:$0xff]
    %v653 = vld [vmem:[%s1 + $0xfb0] sm:$0xff]
    %v654 = vld [vmem:[%s1 + $0xfb8] sm:$0xff]
    %v655 = vld [vmem:[%s1 + $0xfc0] sm:$0xff]
    %v656 = vld [vmem:[%s1 + $0xfc8] sm:$0xff]
    %v657 = vld [vmem:[%s1 + $0xfd0] sm:$0xff]
    %v658 = vld [vmem:[%s1 + $0xfd8] sm:$0xff]
    %v659 = vld [vmem:[%s1 + $0xfe0] sm:$0xff]
    %v660 = vld [vmem:[%s1 + $0xfe8] sm:$0xff]
    %v661 = vld [vmem:[%s1 + $0xff0] sm:$0xff]
    %v662 = vld [vmem:[%s1 + $0xff8] sm:$0xff]
    %v663 = vld [vmem:[%s1 + $0x1000] sm:$0xff]
    %v664 = vld [vmem:[%s1 + $0x1008] sm:$0xff]
    %v665 = vld [vmem:[%s1 + $0x1010] sm:$0xff]
    %v666 = vld [vmem:[%s1 + $0x1018] sm:$0xff]
    %v667 = vld [vmem:[%s1 + $0x1020] sm:$0xff]
    %v668 = vld [vmem:[%s1 + $0x1028] sm:$0xff]
    %v669 = vld [vmem:[%s1 + $0x1030] sm:$0xff]
    %v670 = vld [vmem:[%s1 + $0x1038] sm:$0xff]
    %v671 = vld [vmem:[%s1 + $0x1040] sm:$0xff]
    %v672 = vld [vmem:[%s1 + $0x1048] sm:$0xff]
    %v673 = vld [vmem:[%s1 + $0x1050] sm:$0xff]
    %v674 = vld [vmem:[%s1 + $0x1058] sm:$0xff]
    %v675 = vld [vmem:[%s1 + $0x1060] sm:$0xff]
    %v676 = vld [vmem:[%s1 + $0x1068] sm:$0xff]
    %v677 = vld [vmem:[%s1 + $0x1070] sm:$0xff]
    %v678 = vld [vmem:[%s1 + $0x1078] sm:$0xff]
    %v679 = vld [vmem:[%s1 + $0x1080] sm:$0xff]
    %v680 = vld [vmem:[%s1 + $0x1088] sm:$0xff]
    %v681 = vld [vmem:[%s1 + $0x1090] sm:$0xff]
    %v682 = vld [vmem:[%s1 + $0x1098] sm:$0xff]
    %v683 = vld [vmem:[%s1 + $0x10a0] sm:$0xff]
    %v684 = vld [vmem:[%s1 + $0x10a8] sm:$0xff]
    %v685 = vld [vmem:[%s1 + $0x10b0] sm:$0xff]
    %v686 = vld [vmem:[%s1 + $0x10b8] sm:$0xff]
    %v687 = vld [vmem:[%s1 + $0x10c0] sm:$0xff]
    %v688 = vld [vmem:[%s1 + $0x10c8] sm:$0xff]
    %v689 = vld [vmem:[%s1 + $0x10d0] sm:$0xff]
    %v690 = vld [vmem:[%s1 + $0x10d8] sm:$0xff]
    %v691 = vld [vmem:[%s1 + $0x10e0] sm:$0xff]
    %v692 = vld [vmem:[%s1 + $0x10e8] sm:$0xff]
    %v693 = vld [vmem:[%s1 + $0x10f0] sm:$0xff]
    %v694 = vld [vmem:[%s1 + $0x10f8] sm:$0xff]
    %v695 = vld [vmem:[%s1 + $0x1100] sm:$0xff]
    %v696 = vld [vmem:[%s1 + $0x1108] sm:$0xff]
    %v697 = vld [vmem:[%s1 + $0x1110] sm:$0xff]
    %v698 = vld [vmem:[%s1 + $0x1118] sm:$0xff]
    %v699 = vld [vmem:[%s1 + $0x1120] sm:$0xff]
    %v700 = vld [vmem:[%s1 + $0x1128] sm:$0xff]
    %v701 = vld [vmem:[%s1 + $0x1130] sm:$0xff]
    %v702 = vld [vmem:[%s1 + $0x1138] sm:$0xff]
    %v703 = vld [vmem:[%s1 + $0x1140] sm:$0xff]
    %v704 = vld [vmem:[%s1 + $0x1148] sm:$0xff]
    %v705 = vld [vmem:[%s1 + $0x1150] sm:$0xff]
    %v706 = vld [vmem:[%s1 + $0x1158] sm:$0xff]
    %v707 = vld [vmem:[%s1 + $0x1160] sm:$0xff]
    %v708 = vld [vmem:[%s1 + $0x1168] sm:$0xff]
    %v709 = vld [vmem:[%s1 + $0x1170] sm:$0xff]
    %v710 = vld [vmem:[%s1 + $0x1178] sm:$0xff]
    %v711 = vld [vmem:[%s1 + $0x1180] sm:$0xff]
    %v712 = vld [vmem:[%s1 + $0x1188] sm:$0xff]
    %v713 = vld [vmem:[%s1 + $0x1190] sm:$0xff]
    %v714 = vld [vmem:[%s1 + $0x1198] sm:$0xff]
    %v715 = vld [vmem:[%s1 + $0x11a0] sm:$0xff]
    %v716 = vld [vmem:[%s1 + $0x11a8] sm:$0xff]
    %v717 = vld [vmem:[%s1 + $0x11b0] sm:$0xff]
    %v718 = vld [vmem:[%s1 + $0x11b8] sm:$0xff]
    %v719 = vld [vmem:[%s1 + $0x11c0] sm:$0xff]
    %v720 = vld [vmem:[%s1 + $0x11c8] sm:$0xff]
    %v721 = vld [vmem:[%s1 + $0x11d0] sm:$0xff]
    %v722 = vld [vmem:[%s1 + $0x11d8] sm:$0xff]
    %v723 = vld [vmem:[%s1 + $0x11e0] sm:$0xff]
    %v724 = vld [vmem:[%s1 + $0x11e8] sm:$0xff]
    %v725 = vld [vmem:[%s1 + $0x11f0] sm:$0xff]
    %v726 = vld [vmem:[%s1 + $0x11f8] sm:$0xff]
    %v727 = vld [vmem:[%s2] sm:$0x3]
    %v729 = vperm.slane %v727, 0
    %v730 = vperm.slane %v727, 1
    %v1309 = vunpack.c.l.b16 %v151
    %v1310 = vunpack.c.h.b16 %v151
    %v1311 = vunpack.c.l.b16 %v152
    %v1312 = vunpack.c.h.b16 %v152
    %v1313 = vunpack.c.l.b16 %v153
    %v1314 = vunpack.c.h.b16 %v153
    %v1315 = vunpack.c.l.b16 %v154
    %v1316 = vunpack.c.h.b16 %v154
    %v1317 = vunpack.c.l.b16 %v155
    %v1318 = vunpack.c.h.b16 %v155
    %v1319 = vunpack.c.l.b16 %v156
    %v1320 = vunpack.c.h.b16 %v156
    %v1321 = vunpack.c.l.b16 %v157
    %v1322 = vunpack.c.h.b16 %v157
    %v1323 = vunpack.c.l.b16 %v158
    %v1324 = vunpack.c.h.b16 %v158
    %v1325 = vunpack.c.l.b16 %v159
    %v1326 = vunpack.c.h.b16 %v159
    %v1327 = vunpack.c.l.b16 %v160
    %v1328 = vunpack.c.h.b16 %v160
    %v1329 = vunpack.c.l.b16 %v161
    %v1330 = vunpack.c.h.b16 %v161
    %v1331 = vunpack.c.l.b16 %v162
    %v1332 = vunpack.c.h.b16 %v162
    %v1333 = vunpack.c.l.b16 %v163
    %v1334 = vunpack.c.h.b16 %v163
    %v1335 = vunpack.c.l.b16 %v164
    %v1336 = vunpack.c.h.b16 %v164
    %v1337 = vunpack.c.l.b16 %v165
    %v1338 = vunpack.c.h.b16 %v165
    %v1339 = vunpack.c.l.b16 %v166
    %v1340 = vunpack.c.h.b16 %v166
    %v1341 = vunpack.c.l.b16 %v167
    %v1342 = vunpack.c.h.b16 %v167
    %v1343 = vunpack.c.l.b16 %v168
    %v1344 = vunpack.c.h.b16 %v168
    %v1345 = vunpack.c.l.b16 %v169
    %v1346 = vunpack.c.h.b16 %v169
    %v1347 = vunpack.c.l.b16 %v170
    %v1348 = vunpack.c.h.b16 %v170
    %v1349 = vunpack.c.l.b16 %v171
    %v1350 = vunpack.c.h.b16 %v171
    %v1351 = vunpack.c.l.b16 %v172
    %v1352 = vunpack.c.h.b16 %v172
    %v1353 = vunpack.c.l.b16 %v173
    %v1354 = vunpack.c.h.b16 %v173
    %v1355 = vunpack.c.l.b16 %v174
    %v1356 = vunpack.c.h.b16 %v174
    %v1357 = vunpack.c.l.b16 %v175
    %v1358 = vunpack.c.h.b16 %v175
    %v1359 = vunpack.c.l.b16 %v176
    %v1360 = vunpack.c.h.b16 %v176
    %v1361 = vunpack.c.l.b16 %v177
    %v1362 = vunpack.c.h.b16 %v177
    %v1363 = vunpack.c.l.b16 %v178
    %v1364 = vunpack.c.h.b16 %v178
    %v1365 = vunpack.c.l.b16 %v179
    %v1366 = vunpack.c.h.b16 %v179
    %v1367 = vunpack.c.l.b16 %v180
    %v1368 = vunpack.c.h.b16 %v180
    %v1369 = vunpack.c.l.b16 %v181
    %v1370 = vunpack.c.h.b16 %v181
    %v1371 = vunpack.c.l.b16 %v182
    %v1372 = vunpack.c.h.b16 %v182
    %v1373 = vunpack.c.l.b16 %v183
    %v1374 = vunpack.c.h.b16 %v183
    %v1375 = vunpack.c.l.b16 %v184
    %v1376 = vunpack.c.h.b16 %v184
    %v1377 = vunpack.c.l.b16 %v185
    %v1378 = vunpack.c.h.b16 %v185
    %v1379 = vunpack.c.l.b16 %v186
    %v1380 = vunpack.c.h.b16 %v186
    %v1381 = vunpack.c.l.b16 %v187
    %v1382 = vunpack.c.h.b16 %v187
    %v1383 = vunpack.c.l.b16 %v188
    %v1384 = vunpack.c.h.b16 %v188
    %v1385 = vunpack.c.l.b16 %v189
    %v1386 = vunpack.c.h.b16 %v189
    %v1387 = vunpack.c.l.b16 %v190
    %v1388 = vunpack.c.h.b16 %v190
    %v1389 = vunpack.c.l.b16 %v191
    %v1390 = vunpack.c.h.b16 %v191
    %v1391 = vunpack.c.l.b16 %v192
    %v1392 = vunpack.c.h.b16 %v192
    %v1393 = vunpack.c.l.b16 %v193
    %v1394 = vunpack.c.h.b16 %v193
    %v1395 = vunpack.c.l.b16 %v194
    %v1396 = vunpack.c.h.b16 %v194
    %v1397 = vunpack.c.l.b16 %v195
    %v1398 = vunpack.c.h.b16 %v195
    %v1399 = vunpack.c.l.b16 %v196
    %v1400 = vunpack.c.h.b16 %v196
    %v1401 = vunpack.c.l.b16 %v197
    %v1402 = vunpack.c.h.b16 %v197
    %v1403 = vunpack.c.l.b16 %v198
    %v1404 = vunpack.c.h.b16 %v198
    %v1405 = vunpack.c.l.b16 %v199
    %v1406 = vunpack.c.h.b16 %v199
    %v1407 = vunpack.c.l.b16 %v200
    %v1408 = vunpack.c.h.b16 %v200
    %v1409 = vunpack.c.l.b16 %v201
    %v1410 = vunpack.c.h.b16 %v201
    %v1411 = vunpack.c.l.b16 %v202
    %v1412 = vunpack.c.h.b16 %v202
    %v1413 = vunpack.c.l.b16 %v203
    %v1414 = vunpack.c.h.b16 %v203
    %v1415 = vunpack.c.l.b16 %v204
    %v1416 = vunpack.c.h.b16 %v204
    %v1417 = vunpack.c.l.b16 %v205
    %v1418 = vunpack.c.h.b16 %v205
    %v1419 = vunpack.c.l.b16 %v206
    %v1420 = vunpack.c.h.b16 %v206
    %v1421 = vunpack.c.l.b16 %v207
    %v1422 = vunpack.c.h.b16 %v207
    %v1423 = vunpack.c.l.b16 %v208
    %v1424 = vunpack.c.h.b16 %v208
    %v1425 = vunpack.c.l.b16 %v209
    %v1426 = vunpack.c.h.b16 %v209
    %v1427 = vunpack.c.l.b16 %v210
    %v1428 = vunpack.c.h.b16 %v210
    %v1429 = vunpack.c.l.b16 %v211
    %v1430 = vunpack.c.h.b16 %v211
    %v1431 = vunpack.c.l.b16 %v212
    %v1432 = vunpack.c.h.b16 %v212
    %v1433 = vunpack.c.l.b16 %v213
    %v1434 = vunpack.c.h.b16 %v213
    %v1435 = vunpack.c.l.b16 %v214
    %v1436 = vunpack.c.h.b16 %v214
    %v1437 = vunpack.c.l.b16 %v215
    %v1438 = vunpack.c.h.b16 %v215
    %v1439 = vunpack.c.l.b16 %v216
    %v1440 = vunpack.c.h.b16 %v216
    %v1441 = vunpack.c.l.b16 %v217
    %v1442 = vunpack.c.h.b16 %v217
    %v1443 = vunpack.c.l.b16 %v218
    %v1444 = vunpack.c.h.b16 %v218
    %v1445 = vunpack.c.l.b16 %v219
    %v1446 = vunpack.c.h.b16 %v219
    %v1447 = vunpack.c.l.b16 %v220
    %v1448 = vunpack.c.h.b16 %v220
    %v1449 = vunpack.c.l.b16 %v221
    %v1450 = vunpack.c.h.b16 %v221
    %v1451 = vunpack.c.l.b16 %v222
    %v1452 = vunpack.c.h.b16 %v222
    %v1453 = vunpack.c.l.b16 %v223
    %v1454 = vunpack.c.h.b16 %v223
    %v1455 = vunpack.c.l.b16 %v224
    %v1456 = vunpack.c.h.b16 %v224
    %v1457 = vunpack.c.l.b16 %v225
    %v1458 = vunpack.c.h.b16 %v225
    %v1459 = vunpack.c.l.b16 %v226
    %v1460 = vunpack.c.h.b16 %v226
    %v1461 = vunpack.c.l.b16 %v227
    %v1462 = vunpack.c.h.b16 %v227
    %v1463 = vunpack.c.l.b16 %v228
    %v1464 = vunpack.c.h.b16 %v228
    %v1465 = vunpack.c.l.b16 %v229
    %v1466 = vunpack.c.h.b16 %v229
    %v1467 = vunpack.c.l.b16 %v230
    %v1468 = vunpack.c.h.b16 %v230
    %v1469 = vunpack.c.l.b16 %v231
    %v1470 = vunpack.c.h.b16 %v231
    %v1471 = vunpack.c.l.b16 %v232
    %v1472 = vunpack.c.h.b16 %v232
    %v1473 = vunpack.c.l.b16 %v233
    %v1474 = vunpack.c.h.b16 %v233
    %v1475 = vunpack.c.l.b16 %v234
    %v1476 = vunpack.c.h.b16 %v234
    %v1477 = vunpack.c.l.b16 %v235
    %v1478 = vunpack.c.h.b16 %v235
    %v1479 = vunpack.c.l.b16 %v236
    %v1480 = vunpack.c.h.b16 %v236
    %v1481 = vunpack.c.l.b16 %v237
    %v1482 = vunpack.c.h.b16 %v237
    %v1483 = vunpack.c.l.b16 %v238
    %v1484 = vunpack.c.h.b16 %v238
    %v1485 = vunpack.c.l.b16 %v239
    %v1486 = vunpack.c.h.b16 %v239
    %v1487 = vunpack.c.l.b16 %v240
    %v1488 = vunpack.c.h.b16 %v240
    %v1489 = vunpack.c.l.b16 %v241
    %v1490 = vunpack.c.h.b16 %v241
    %v1491 = vunpack.c.l.b16 %v242
    %v1492 = vunpack.c.h.b16 %v242
    %v1493 = vunpack.c.l.b16 %v243
    %v1494 = vunpack.c.h.b16 %v243
    %v1495 = vunpack.c.l.b16 %v244
    %v1496 = vunpack.c.h.b16 %v244
    %v1497 = vunpack.c.l.b16 %v245
    %v1498 = vunpack.c.h.b16 %v245
    %v1499 = vunpack.c.l.b16 %v246
    %v1500 = vunpack.c.h.b16 %v246
    %v1501 = vunpack.c.l.b16 %v247
    %v1502 = vunpack.c.h.b16 %v247
    %v1503 = vunpack.c.l.b16 %v248
    %v1504 = vunpack.c.h.b16 %v248
    %v1505 = vunpack.c.l.b16 %v249
    %v1506 = vunpack.c.h.b16 %v249
    %v1507 = vunpack.c.l.b16 %v250
    %v1508 = vunpack.c.h.b16 %v250
    %v1509 = vunpack.c.l.b16 %v251
    %v1510 = vunpack.c.h.b16 %v251
    %v1511 = vunpack.c.l.b16 %v252
    %v1512 = vunpack.c.h.b16 %v252
    %v1513 = vunpack.c.l.b16 %v253
    %v1514 = vunpack.c.h.b16 %v253
    %v1515 = vunpack.c.l.b16 %v254
    %v1516 = vunpack.c.h.b16 %v254
    %v1517 = vunpack.c.l.b16 %v255
    %v1518 = vunpack.c.h.b16 %v255
    %v1519 = vunpack.c.l.b16 %v256
    %v1520 = vunpack.c.h.b16 %v256
    %v1521 = vunpack.c.l.b16 %v257
    %v1522 = vunpack.c.h.b16 %v257
    %v1523 = vunpack.c.l.b16 %v258
    %v1524 = vunpack.c.h.b16 %v258
    %v1525 = vunpack.c.l.b16 %v259
    %v1526 = vunpack.c.h.b16 %v259
    %v1527 = vunpack.c.l.b16 %v260
    %v1528 = vunpack.c.h.b16 %v260
    %v1529 = vunpack.c.l.b16 %v261
    %v1530 = vunpack.c.h.b16 %v261
    %v1531 = vunpack.c.l.b16 %v262
    %v1532 = vunpack.c.h.b16 %v262
    %v1533 = vunpack.c.l.b16 %v263
    %v1534 = vunpack.c.h.b16 %v263
    %v1535 = vunpack.c.l.b16 %v264
    %v1536 = vunpack.c.h.b16 %v264
    %v1537 = vunpack.c.l.b16 %v265
    %v1538 = vunpack.c.h.b16 %v265
    %v1539 = vunpack.c.l.b16 %v266
    %v1540 = vunpack.c.h.b16 %v266
    %v1541 = vunpack.c.l.b16 %v267
    %v1542 = vunpack.c.h.b16 %v267
    %v1543 = vunpack.c.l.b16 %v268
    %v1544 = vunpack.c.h.b16 %v268
    %v1545 = vunpack.c.l.b16 %v269
    %v1546 = vunpack.c.h.b16 %v269
    %v1547 = vunpack.c.l.b16 %v270
    %v1548 = vunpack.c.h.b16 %v270
    %v1549 = vunpack.c.l.b16 %v271
    %v1550 = vunpack.c.h.b16 %v271
    %v1551 = vunpack.c.l.b16 %v272
    %v1552 = vunpack.c.h.b16 %v272
    %v1553 = vunpack.c.l.b16 %v273
    %v1554 = vunpack.c.h.b16 %v273
    %v1555 = vunpack.c.l.b16 %v274
    %v1556 = vunpack.c.h.b16 %v274
    %v1557 = vunpack.c.l.b16 %v275
    %v1558 = vunpack.c.h.b16 %v275
    %v1559 = vunpack.c.l.b16 %v276
    %v1560 = vunpack.c.h.b16 %v276
    %v1561 = vunpack.c.l.b16 %v277
    %v1562 = vunpack.c.h.b16 %v277
    %v1563 = vunpack.c.l.b16 %v278
    %v1564 = vunpack.c.h.b16 %v278
    %v1565 = vunpack.c.l.b16 %v279
    %v1566 = vunpack.c.h.b16 %v279
    %v1567 = vunpack.c.l.b16 %v280
    %v1568 = vunpack.c.h.b16 %v280
    %v1569 = vunpack.c.l.b16 %v281
    %v1570 = vunpack.c.h.b16 %v281
    %v1571 = vunpack.c.l.b16 %v282
    %v1572 = vunpack.c.h.b16 %v282
    %v1573 = vunpack.c.l.b16 %v283
    %v1574 = vunpack.c.h.b16 %v283
    %v1575 = vunpack.c.l.b16 %v284
    %v1576 = vunpack.c.h.b16 %v284
    %v1577 = vunpack.c.l.b16 %v285
    %v1578 = vunpack.c.h.b16 %v285
    %v1579 = vunpack.c.l.b16 %v286
    %v1580 = vunpack.c.h.b16 %v286
    %v1581 = vunpack.c.l.b16 %v287
    %v1582 = vunpack.c.h.b16 %v287
    %v1583 = vunpack.c.l.b16 %v288
    %v1584 = vunpack.c.h.b16 %v288
    %v1585 = vunpack.c.l.b16 %v289
    %v1586 = vunpack.c.h.b16 %v289
    %v1587 = vunpack.c.l.b16 %v290
    %v1588 = vunpack.c.h.b16 %v290
    %v1589 = vunpack.c.l.b16 %v291
    %v1590 = vunpack.c.h.b16 %v291
    %v1591 = vunpack.c.l.b16 %v292
    %v1592 = vunpack.c.h.b16 %v292
    %v1593 = vunpack.c.l.b16 %v293
    %v1594 = vunpack.c.h.b16 %v293
    %v1595 = vunpack.c.l.b16 %v294
    %v1596 = vunpack.c.h.b16 %v294
    %v1597 = vunpack.c.l.b16 %v295
    %v1598 = vunpack.c.h.b16 %v295
    %v1599 = vunpack.c.l.b16 %v296
    %v1600 = vunpack.c.h.b16 %v296
    %v1601 = vunpack.c.l.b16 %v297
    %v1602 = vunpack.c.h.b16 %v297
    %v1603 = vunpack.c.l.b16 %v298
    %v1604 = vunpack.c.h.b16 %v298
    %v1605 = vunpack.c.l.b16 %v299
    %v1606 = vunpack.c.h.b16 %v299
    %v1607 = vunpack.c.l.b16 %v300
    %v1608 = vunpack.c.h.b16 %v300
    %v1609 = vunpack.c.l.b16 %v301
    %v1610 = vunpack.c.h.b16 %v301
    %v1611 = vunpack.c.l.b16 %v302
    %v1612 = vunpack.c.h.b16 %v302
    %v1613 = vunpack.c.l.b16 %v303
    %v1614 = vunpack.c.h.b16 %v303
    %v1615 = vunpack.c.l.b16 %v304
    %v1616 = vunpack.c.h.b16 %v304
    %v1617 = vunpack.c.l.b16 %v305
    %v1618 = vunpack.c.h.b16 %v305
    %v1619 = vunpack.c.l.b16 %v306
    %v1620 = vunpack.c.h.b16 %v306
    %v1621 = vunpack.c.l.b16 %v307
    %v1622 = vunpack.c.h.b16 %v307
    %v1623 = vunpack.c.l.b16 %v308
    %v1624 = vunpack.c.h.b16 %v308
    %v1625 = vunpack.c.l.b16 %v309
    %v1626 = vunpack.c.h.b16 %v309
    %v1627 = vunpack.c.l.b16 %v310
    %v1628 = vunpack.c.h.b16 %v310
    %v1629 = vunpack.c.l.b16 %v311
    %v1630 = vunpack.c.h.b16 %v311
    %v1631 = vunpack.c.l.b16 %v312
    %v1632 = vunpack.c.h.b16 %v312
    %v1633 = vunpack.c.l.b16 %v313
    %v1634 = vunpack.c.h.b16 %v313
    %v1635 = vunpack.c.l.b16 %v314
    %v1636 = vunpack.c.h.b16 %v314
    %v1637 = vunpack.c.l.b16 %v315
    %v1638 = vunpack.c.h.b16 %v315
    %v1639 = vunpack.c.l.b16 %v316
    %v1640 = vunpack.c.h.b16 %v316
    %v1641 = vunpack.c.l.b16 %v317
    %v1642 = vunpack.c.h.b16 %v317
    %v1643 = vunpack.c.l.b16 %v318
    %v1644 = vunpack.c.h.b16 %v318
    %v1645 = vunpack.c.l.b16 %v319
    %v1646 = vunpack.c.h.b16 %v319
    %v1647 = vunpack.c.l.b16 %v320
    %v1648 = vunpack.c.h.b16 %v320
    %v1649 = vunpack.c.l.b16 %v321
    %v1650 = vunpack.c.h.b16 %v321
    %v1651 = vunpack.c.l.b16 %v322
    %v1652 = vunpack.c.h.b16 %v322
    %v1653 = vunpack.c.l.b16 %v323
    %v1654 = vunpack.c.h.b16 %v323
    %v1655 = vunpack.c.l.b16 %v324
    %v1656 = vunpack.c.h.b16 %v324
    %v1657 = vunpack.c.l.b16 %v325
    %v1658 = vunpack.c.h.b16 %v325
    %v1659 = vunpack.c.l.b16 %v326
    %v1660 = vunpack.c.h.b16 %v326
    %v1661 = vunpack.c.l.b16 %v327
    %v1662 = vunpack.c.h.b16 %v327
    %v1663 = vunpack.c.l.b16 %v328
    %v1664 = vunpack.c.h.b16 %v328
    %v1665 = vunpack.c.l.b16 %v329
    %v1666 = vunpack.c.h.b16 %v329
    %v1667 = vunpack.c.l.b16 %v330
    %v1668 = vunpack.c.h.b16 %v330
    %v1669 = vunpack.c.l.b16 %v331
    %v1670 = vunpack.c.h.b16 %v331
    %v1671 = vunpack.c.l.b16 %v332
    %v1672 = vunpack.c.h.b16 %v332
    %v1673 = vunpack.c.l.b16 %v333
    %v1674 = vunpack.c.h.b16 %v333
    %v1675 = vunpack.c.l.b16 %v334
    %v1676 = vunpack.c.h.b16 %v334
    %v1677 = vunpack.c.l.b16 %v335
    %v1678 = vunpack.c.h.b16 %v335
    %v1679 = vunpack.c.l.b16 %v336
    %v1680 = vunpack.c.h.b16 %v336
    %v1681 = vunpack.c.l.b16 %v337
    %v1682 = vunpack.c.h.b16 %v337
    %v1683 = vunpack.c.l.b16 %v338
    %v1684 = vunpack.c.h.b16 %v338
    %v1685 = vunpack.c.l.b16 %v339
    %v1686 = vunpack.c.h.b16 %v339
    %v1687 = vunpack.c.l.b16 %v340
    %v1688 = vunpack.c.h.b16 %v340
    %v1689 = vunpack.c.l.b16 %v341
    %v1690 = vunpack.c.h.b16 %v341
    %v1691 = vunpack.c.l.b16 %v342
    %v1692 = vunpack.c.h.b16 %v342
    %v1693 = vunpack.c.l.b16 %v343
    %v1694 = vunpack.c.h.b16 %v343
    %v1695 = vunpack.c.l.b16 %v344
    %v1696 = vunpack.c.h.b16 %v344
    %v1697 = vunpack.c.l.b16 %v345
    %v1698 = vunpack.c.h.b16 %v345
    %v1699 = vunpack.c.l.b16 %v346
    %v1700 = vunpack.c.h.b16 %v346
    %v1701 = vunpack.c.l.b16 %v347
    %v1702 = vunpack.c.h.b16 %v347
    %v1703 = vunpack.c.l.b16 %v348
    %v1704 = vunpack.c.h.b16 %v348
    %v1705 = vunpack.c.l.b16 %v349
    %v1706 = vunpack.c.h.b16 %v349
    %v1707 = vunpack.c.l.b16 %v350
    %v1708 = vunpack.c.h.b16 %v350
    %v1709 = vunpack.c.l.b16 %v351
    %v1710 = vunpack.c.h.b16 %v351
    %v1711 = vunpack.c.l.b16 %v352
    %v1712 = vunpack.c.h.b16 %v352
    %v1713 = vunpack.c.l.b16 %v353
    %v1714 = vunpack.c.h.b16 %v353
    %v1715 = vunpack.c.l.b16 %v354
    %v1716 = vunpack.c.h.b16 %v354
    %v1717 = vunpack.c.l.b16 %v355
    %v1718 = vunpack.c.h.b16 %v355
    %v1719 = vunpack.c.l.b16 %v356
    %v1720 = vunpack.c.h.b16 %v356
    %v1721 = vunpack.c.l.b16 %v357
    %v1722 = vunpack.c.h.b16 %v357
    %v1723 = vunpack.c.l.b16 %v358
    %v1724 = vunpack.c.h.b16 %v358
    %v1725 = vunpack.c.l.b16 %v359
    %v1726 = vunpack.c.h.b16 %v359
    %v1727 = vunpack.c.l.b16 %v360
    %v1728 = vunpack.c.h.b16 %v360
    %v1729 = vunpack.c.l.b16 %v361
    %v1730 = vunpack.c.h.b16 %v361
    %v1731 = vunpack.c.l.b16 %v362
    %v1732 = vunpack.c.h.b16 %v362
    %v1733 = vunpack.c.l.b16 %v363
    %v1734 = vunpack.c.h.b16 %v363
    %v1735 = vunpack.c.l.b16 %v364
    %v1736 = vunpack.c.h.b16 %v364
    %v1737 = vunpack.c.l.b16 %v365
    %v1738 = vunpack.c.h.b16 %v365
    %v1739 = vunpack.c.l.b16 %v366
    %v1740 = vunpack.c.h.b16 %v366
    %v1741 = vunpack.c.l.b16 %v367
    %v1742 = vunpack.c.h.b16 %v367
    %v1743 = vunpack.c.l.b16 %v368
    %v1744 = vunpack.c.h.b16 %v368
    %v1745 = vunpack.c.l.b16 %v369
    %v1746 = vunpack.c.h.b16 %v369
    %v1747 = vunpack.c.l.b16 %v370
    %v1748 = vunpack.c.h.b16 %v370
    %v1749 = vunpack.c.l.b16 %v371
    %v1750 = vunpack.c.h.b16 %v371
    %v1751 = vunpack.c.l.b16 %v372
    %v1752 = vunpack.c.h.b16 %v372
    %v1753 = vunpack.c.l.b16 %v373
    %v1754 = vunpack.c.h.b16 %v373
    %v1755 = vunpack.c.l.b16 %v374
    %v1756 = vunpack.c.h.b16 %v374
    %v1757 = vunpack.c.l.b16 %v375
    %v1758 = vunpack.c.h.b16 %v375
    %v1759 = vunpack.c.l.b16 %v376
    %v1760 = vunpack.c.h.b16 %v376
    %v1761 = vunpack.c.l.b16 %v377
    %v1762 = vunpack.c.h.b16 %v377
    %v1763 = vunpack.c.l.b16 %v378
    %v1764 = vunpack.c.h.b16 %v378
    %v1765 = vunpack.c.l.b16 %v379
    %v1766 = vunpack.c.h.b16 %v379
    %v1767 = vunpack.c.l.b16 %v380
    %v1768 = vunpack.c.h.b16 %v380
    %v1769 = vunpack.c.l.b16 %v381
    %v1770 = vunpack.c.h.b16 %v381
    %v1771 = vunpack.c.l.b16 %v382
    %v1772 = vunpack.c.h.b16 %v382
    %v1773 = vunpack.c.l.b16 %v383
    %v1774 = vunpack.c.h.b16 %v383
    %v1775 = vunpack.c.l.b16 %v384
    %v1776 = vunpack.c.h.b16 %v384
    %v1777 = vunpack.c.l.b16 %v385
    %v1778 = vunpack.c.h.b16 %v385
    %v1779 = vunpack.c.l.b16 %v386
    %v1780 = vunpack.c.h.b16 %v386
    %v1781 = vunpack.c.l.b16 %v387
    %v1782 = vunpack.c.h.b16 %v387
    %v1783 = vunpack.c.l.b16 %v388
    %v1784 = vunpack.c.h.b16 %v388
    %v1785 = vunpack.c.l.b16 %v389
    %v1786 = vunpack.c.h.b16 %v389
    %v1787 = vunpack.c.l.b16 %v390
    %v1788 = vunpack.c.h.b16 %v390
    %v1789 = vunpack.c.l.b16 %v391
    %v1790 = vunpack.c.h.b16 %v391
    %v1791 = vunpack.c.l.b16 %v392
    %v1792 = vunpack.c.h.b16 %v392
    %v1793 = vunpack.c.l.b16 %v393
    %v1794 = vunpack.c.h.b16 %v393
    %v1795 = vunpack.c.l.b16 %v394
    %v1796 = vunpack.c.h.b16 %v394
    %v1797 = vunpack.c.l.b16 %v395
    %v1798 = vunpack.c.h.b16 %v395
    %v1799 = vunpack.c.l.b16 %v396
    %v1800 = vunpack.c.h.b16 %v396
    %v1801 = vunpack.c.l.b16 %v397
    %v1802 = vunpack.c.h.b16 %v397
    %v1803 = vunpack.c.l.b16 %v398
    %v1804 = vunpack.c.h.b16 %v398
    %v1805 = vunpack.c.l.b16 %v399
    %v1806 = vunpack.c.h.b16 %v399
    %v1807 = vunpack.c.l.b16 %v400
    %v1808 = vunpack.c.h.b16 %v400
    %v1809 = vunpack.c.l.b16 %v401
    %v1810 = vunpack.c.h.b16 %v401
    %v1811 = vunpack.c.l.b16 %v402
    %v1812 = vunpack.c.h.b16 %v402
    %v1813 = vunpack.c.l.b16 %v403
    %v1814 = vunpack.c.h.b16 %v403
    %v1815 = vunpack.c.l.b16 %v404
    %v1816 = vunpack.c.h.b16 %v404
    %v1817 = vunpack.c.l.b16 %v405
    %v1818 = vunpack.c.h.b16 %v405
    %v1819 = vunpack.c.l.b16 %v406
    %v1820 = vunpack.c.h.b16 %v406
    %v1821 = vunpack.c.l.b16 %v407
    %v1822 = vunpack.c.h.b16 %v407
    %v1823 = vunpack.c.l.b16 %v408
    %v1824 = vunpack.c.h.b16 %v408
    %v1825 = vunpack.c.l.b16 %v409
    %v1826 = vunpack.c.h.b16 %v409
    %v1827 = vunpack.c.l.b16 %v410
    %v1828 = vunpack.c.h.b16 %v410
    %v1829 = vunpack.c.l.b16 %v411
    %v1830 = vunpack.c.h.b16 %v411
    %v1831 = vunpack.c.l.b16 %v412
    %v1832 = vunpack.c.h.b16 %v412
    %v1833 = vunpack.c.l.b16 %v413
    %v1834 = vunpack.c.h.b16 %v413
    %v1835 = vunpack.c.l.b16 %v414
    %v1836 = vunpack.c.h.b16 %v414
    %v1837 = vunpack.c.l.b16 %v415
    %v1838 = vunpack.c.h.b16 %v415
    %v1839 = vunpack.c.l.b16 %v416
    %v1840 = vunpack.c.h.b16 %v416
    %v1841 = vunpack.c.l.b16 %v417
    %v1842 = vunpack.c.h.b16 %v417
    %v1843 = vunpack.c.l.b16 %v418
    %v1844 = vunpack.c.h.b16 %v418
    %v1845 = vunpack.c.l.b16 %v419
    %v1846 = vunpack.c.h.b16 %v419
    %v1847 = vunpack.c.l.b16 %v420
    %v1848 = vunpack.c.h.b16 %v420
    %v1849 = vunpack.c.l.b16 %v421
    %v1850 = vunpack.c.h.b16 %v421
    %v1851 = vunpack.c.l.b16 %v422
    %v1852 = vunpack.c.h.b16 %v422
    %v1853 = vunpack.c.l.b16 %v423
    %v1854 = vunpack.c.h.b16 %v423
    %v1855 = vunpack.c.l.b16 %v424
    %v1856 = vunpack.c.h.b16 %v424
    %v1857 = vunpack.c.l.b16 %v425
    %v1858 = vunpack.c.h.b16 %v425
    %v1859 = vunpack.c.l.b16 %v426
    %v1860 = vunpack.c.h.b16 %v426
    %v1861 = vunpack.c.l.b16 %v427
    %v1862 = vunpack.c.h.b16 %v427
    %v1863 = vunpack.c.l.b16 %v428
    %v1864 = vunpack.c.h.b16 %v428
    %v1865 = vunpack.c.l.b16 %v429
    %v1866 = vunpack.c.h.b16 %v429
    %v1867 = vunpack.c.l.b16 %v430
    %v1868 = vunpack.c.h.b16 %v430
    %v1869 = vunpack.c.l.b16 %v431
    %v1870 = vunpack.c.h.b16 %v431
    %v1871 = vunpack.c.l.b16 %v432
    %v1872 = vunpack.c.h.b16 %v432
    %v1873 = vunpack.c.l.b16 %v433
    %v1874 = vunpack.c.h.b16 %v433
    %v1875 = vunpack.c.l.b16 %v434
    %v1876 = vunpack.c.h.b16 %v434
    %v1877 = vunpack.c.l.b16 %v435
    %v1878 = vunpack.c.h.b16 %v435
    %v1879 = vunpack.c.l.b16 %v436
    %v1880 = vunpack.c.h.b16 %v436
    %v1881 = vunpack.c.l.b16 %v437
    %v1882 = vunpack.c.h.b16 %v437
    %v1883 = vunpack.c.l.b16 %v438
    %v1884 = vunpack.c.h.b16 %v438
    %v1885 = vunpack.c.l.b16 %v439
    %v1886 = vunpack.c.h.b16 %v439
    %v1887 = vunpack.c.l.b16 %v440
    %v1888 = vunpack.c.h.b16 %v440
    %v1889 = vunpack.c.l.b16 %v441
    %v1890 = vunpack.c.h.b16 %v441
    %v1891 = vunpack.c.l.b16 %v442
    %v1892 = vunpack.c.h.b16 %v442
    %v1893 = vunpack.c.l.b16 %v443
    %v1894 = vunpack.c.h.b16 %v443
    %v1895 = vunpack.c.l.b16 %v444
    %v1896 = vunpack.c.h.b16 %v444
    %v1897 = vunpack.c.l.b16 %v445
    %v1898 = vunpack.c.h.b16 %v445
    %v1899 = vunpack.c.l.b16 %v446
    %v1900 = vunpack.c.h.b16 %v446
    %v1901 = vunpack.c.l.b16 %v447
    %v1902 = vunpack.c.h.b16 %v447
    %v1903 = vunpack.c.l.b16 %v448
    %v1904 = vunpack.c.h.b16 %v448
    %v1905 = vunpack.c.l.b16 %v449
    %v1906 = vunpack.c.h.b16 %v449
    %v1907 = vunpack.c.l.b16 %v450
    %v1908 = vunpack.c.h.b16 %v450
    %v1909 = vunpack.c.l.b16 %v451
    %v1910 = vunpack.c.h.b16 %v451
    %v1911 = vunpack.c.l.b16 %v452
    %v1912 = vunpack.c.h.b16 %v452
    %v1913 = vunpack.c.l.b16 %v453
    %v1914 = vunpack.c.h.b16 %v453
    %v1915 = vunpack.c.l.b16 %v454
    %v1916 = vunpack.c.h.b16 %v454
    %v1917 = vunpack.c.l.b16 %v455
    %v1918 = vunpack.c.h.b16 %v455
    %v1919 = vunpack.c.l.b16 %v456
    %v1920 = vunpack.c.h.b16 %v456
    %v1921 = vunpack.c.l.b16 %v457
    %v1922 = vunpack.c.h.b16 %v457
    %v1923 = vunpack.c.l.b16 %v458
    %v1924 = vunpack.c.h.b16 %v458
    %v1925 = vunpack.c.l.b16 %v459
    %v1926 = vunpack.c.h.b16 %v459
    %v1927 = vunpack.c.l.b16 %v460
    %v1928 = vunpack.c.h.b16 %v460
    %v1929 = vunpack.c.l.b16 %v461
    %v1930 = vunpack.c.h.b16 %v461
    %v1931 = vunpack.c.l.b16 %v462
    %v1932 = vunpack.c.h.b16 %v462
    %v1933 = vunpack.c.l.b16 %v463
    %v1934 = vunpack.c.h.b16 %v463
    %v1935 = vunpack.c.l.b16 %v464
    %v1936 = vunpack.c.h.b16 %v464
    %v1937 = vunpack.c.l.b16 %v465
    %v1938 = vunpack.c.h.b16 %v465
    %v1939 = vunpack.c.l.b16 %v466
    %v1940 = vunpack.c.h.b16 %v466
    %v1941 = vunpack.c.l.b16 %v467
    %v1942 = vunpack.c.h.b16 %v467
    %v1943 = vunpack.c.l.b16 %v468
    %v1944 = vunpack.c.h.b16 %v468
    %v1945 = vunpack.c.l.b16 %v469
    %v1946 = vunpack.c.h.b16 %v469
    %v1947 = vunpack.c.l.b16 %v470
    %v1948 = vunpack.c.h.b16 %v470
    %v1949 = vunpack.c.l.b16 %v471
    %v1950 = vunpack.c.h.b16 %v471
    %v1951 = vunpack.c.l.b16 %v472
    %v1952 = vunpack.c.h.b16 %v472
    %v1953 = vunpack.c.l.b16 %v473
    %v1954 = vunpack.c.h.b16 %v473
    %v1955 = vunpack.c.l.b16 %v474
    %v1956 = vunpack.c.h.b16 %v474
    %v1957 = vunpack.c.l.b16 %v475
    %v1958 = vunpack.c.h.b16 %v475
    %v1959 = vunpack.c.l.b16 %v476
    %v1960 = vunpack.c.h.b16 %v476
    %v1961 = vunpack.c.l.b16 %v477
    %v1962 = vunpack.c.h.b16 %v477
    %v1963 = vunpack.c.l.b16 %v478
    %v1964 = vunpack.c.h.b16 %v478
    %v1965 = vunpack.c.l.b16 %v479
    %v1966 = vunpack.c.h.b16 %v479
    %v1967 = vunpack.c.l.b16 %v480
    %v1968 = vunpack.c.h.b16 %v480
    %v1969 = vunpack.c.l.b16 %v481
    %v1970 = vunpack.c.h.b16 %v481
    %v1971 = vunpack.c.l.b16 %v482
    %v1972 = vunpack.c.h.b16 %v482
    %v1973 = vunpack.c.l.b16 %v483
    %v1974 = vunpack.c.h.b16 %v483
    %v1975 = vunpack.c.l.b16 %v484
    %v1976 = vunpack.c.h.b16 %v484
    %v1977 = vunpack.c.l.b16 %v485
    %v1978 = vunpack.c.h.b16 %v485
    %v1979 = vunpack.c.l.b16 %v486
    %v1980 = vunpack.c.h.b16 %v486
    %v1981 = vunpack.c.l.b16 %v487
    %v1982 = vunpack.c.h.b16 %v487
    %v1983 = vunpack.c.l.b16 %v488
    %v1984 = vunpack.c.h.b16 %v488
    %v1985 = vunpack.c.l.b16 %v489
    %v1986 = vunpack.c.h.b16 %v489
    %v1987 = vunpack.c.l.b16 %v490
    %v1988 = vunpack.c.h.b16 %v490
    %v1989 = vunpack.c.l.b16 %v491
    %v1990 = vunpack.c.h.b16 %v491
    %v1991 = vunpack.c.l.b16 %v492
    %v1992 = vunpack.c.h.b16 %v492
    %v1993 = vunpack.c.l.b16 %v493
    %v1994 = vunpack.c.h.b16 %v493
    %v1995 = vunpack.c.l.b16 %v494
    %v1996 = vunpack.c.h.b16 %v494
    %v1997 = vunpack.c.l.b16 %v495
    %v1998 = vunpack.c.h.b16 %v495
    %v1999 = vunpack.c.l.b16 %v496
    %v2000 = vunpack.c.h.b16 %v496
    %v2001 = vunpack.c.l.b16 %v497
    %v2002 = vunpack.c.h.b16 %v497
    %v2003 = vunpack.c.l.b16 %v498
    %v2004 = vunpack.c.h.b16 %v498
    %v2005 = vunpack.c.l.b16 %v499
    %v2006 = vunpack.c.h.b16 %v499
    %v2007 = vunpack.c.l.b16 %v500
    %v2008 = vunpack.c.h.b16 %v500
    %v2009 = vunpack.c.l.b16 %v501
    %v2010 = vunpack.c.h.b16 %v501
    %v2011 = vunpack.c.l.b16 %v502
    %v2012 = vunpack.c.h.b16 %v502
    %v2013 = vunpack.c.l.b16 %v503
    %v2014 = vunpack.c.h.b16 %v503
    %v2015 = vunpack.c.l.b16 %v504
    %v2016 = vunpack.c.h.b16 %v504
    %v2017 = vunpack.c.l.b16 %v505
    %v2018 = vunpack.c.h.b16 %v505
    %v2019 = vunpack.c.l.b16 %v506
    %v2020 = vunpack.c.h.b16 %v506
    %v2021 = vunpack.c.l.b16 %v507
    %v2022 = vunpack.c.h.b16 %v507
    %v2023 = vunpack.c.l.b16 %v508
    %v2024 = vunpack.c.h.b16 %v508
    %v2025 = vunpack.c.l.b16 %v509
    %v2026 = vunpack.c.h.b16 %v509
    %v2027 = vunpack.c.l.b16 %v510
    %v2028 = vunpack.c.h.b16 %v510
    %v2029 = vunpack.c.l.b16 %v511
    %v2030 = vunpack.c.h.b16 %v511
    %v2031 = vunpack.c.l.b16 %v512
    %v2032 = vunpack.c.h.b16 %v512
    %v2033 = vunpack.c.l.b16 %v513
    %v2034 = vunpack.c.h.b16 %v513
    %v2035 = vunpack.c.l.b16 %v514
    %v2036 = vunpack.c.h.b16 %v514
    %v2037 = vunpack.c.l.b16 %v515
    %v2038 = vunpack.c.h.b16 %v515
    %v2039 = vunpack.c.l.b16 %v516
    %v2040 = vunpack.c.h.b16 %v516
    %v2041 = vunpack.c.l.b16 %v517
    %v2042 = vunpack.c.h.b16 %v517
    %v2043 = vunpack.c.l.b16 %v518
    %v2044 = vunpack.c.h.b16 %v518
    %v2045 = vunpack.c.l.b16 %v519
    %v2046 = vunpack.c.h.b16 %v519
    %v2047 = vunpack.c.l.b16 %v520
    %v2048 = vunpack.c.h.b16 %v520
    %v2049 = vunpack.c.l.b16 %v521
    %v2050 = vunpack.c.h.b16 %v521
    %v2051 = vunpack.c.l.b16 %v522
    %v2052 = vunpack.c.h.b16 %v522
    %v2053 = vunpack.c.l.b16 %v523
    %v2054 = vunpack.c.h.b16 %v523
    %v2055 = vunpack.c.l.b16 %v524
    %v2056 = vunpack.c.h.b16 %v524
    %v2057 = vunpack.c.l.b16 %v525
    %v2058 = vunpack.c.h.b16 %v525
    %v2059 = vunpack.c.l.b16 %v526
    %v2060 = vunpack.c.h.b16 %v526
    %v2061 = vunpack.c.l.b16 %v527
    %v2062 = vunpack.c.h.b16 %v527
    %v2063 = vunpack.c.l.b16 %v528
    %v2064 = vunpack.c.h.b16 %v528
    %v2065 = vunpack.c.l.b16 %v529
    %v2066 = vunpack.c.h.b16 %v529
    %v2067 = vunpack.c.l.b16 %v530
    %v2068 = vunpack.c.h.b16 %v530
    %v2069 = vunpack.c.l.b16 %v531
    %v2070 = vunpack.c.h.b16 %v531
    %v2071 = vunpack.c.l.b16 %v532
    %v2072 = vunpack.c.h.b16 %v532
    %v2073 = vunpack.c.l.b16 %v533
    %v2074 = vunpack.c.h.b16 %v533
    %v2075 = vunpack.c.l.b16 %v534
    %v2076 = vunpack.c.h.b16 %v534
    %v2077 = vunpack.c.l.b16 %v535
    %v2078 = vunpack.c.h.b16 %v535
    %v2079 = vunpack.c.l.b16 %v536
    %v2080 = vunpack.c.h.b16 %v536
    %v2081 = vunpack.c.l.b16 %v537
    %v2082 = vunpack.c.h.b16 %v537
    %v2083 = vunpack.c.l.b16 %v538
    %v2084 = vunpack.c.h.b16 %v538
    %v2085 = vunpack.c.l.b16 %v539
    %v2086 = vunpack.c.h.b16 %v539
    %v2087 = vunpack.c.l.b16 %v540
    %v2088 = vunpack.c.h.b16 %v540
    %v2089 = vunpack.c.l.b16 %v541
    %v2090 = vunpack.c.h.b16 %v541
    %v2091 = vunpack.c.l.b16 %v542
    %v2092 = vunpack.c.h.b16 %v542
    %v2093 = vunpack.c.l.b16 %v543
    %v2094 = vunpack.c.h.b16 %v543
    %v2095 = vunpack.c.l.b16 %v544
    %v2096 = vunpack.c.h.b16 %v544
    %v2097 = vunpack.c.l.b16 %v545
    %v2098 = vunpack.c.h.b16 %v545
    %v2099 = vunpack.c.l.b16 %v546
    %v2100 = vunpack.c.h.b16 %v546
    %v2101 = vunpack.c.l.b16 %v547
    %v2102 = vunpack.c.h.b16 %v547
    %v2103 = vunpack.c.l.b16 %v548
    %v2104 = vunpack.c.h.b16 %v548
    %v2105 = vunpack.c.l.b16 %v549
    %v2106 = vunpack.c.h.b16 %v549
    %v2107 = vunpack.c.l.b16 %v550
    %v2108 = vunpack.c.h.b16 %v550
    %v2109 = vunpack.c.l.b16 %v551
    %v2110 = vunpack.c.h.b16 %v551
    %v2111 = vunpack.c.l.b16 %v552
    %v2112 = vunpack.c.h.b16 %v552
    %v2113 = vunpack.c.l.b16 %v553
    %v2114 = vunpack.c.h.b16 %v553
    %v2115 = vunpack.c.l.b16 %v554
    %v2116 = vunpack.c.h.b16 %v554
    %v2117 = vunpack.c.l.b16 %v555
    %v2118 = vunpack.c.h.b16 %v555
    %v2119 = vunpack.c.l.b16 %v556
    %v2120 = vunpack.c.h.b16 %v556
    %v2121 = vunpack.c.l.b16 %v557
    %v2122 = vunpack.c.h.b16 %v557
    %v2123 = vunpack.c.l.b16 %v558
    %v2124 = vunpack.c.h.b16 %v558
    %v2125 = vunpack.c.l.b16 %v559
    %v2126 = vunpack.c.h.b16 %v559
    %v2127 = vunpack.c.l.b16 %v560
    %v2128 = vunpack.c.h.b16 %v560
    %v2129 = vunpack.c.l.b16 %v561
    %v2130 = vunpack.c.h.b16 %v561
    %v2131 = vunpack.c.l.b16 %v562
    %v2132 = vunpack.c.h.b16 %v562
    %v2133 = vunpack.c.l.b16 %v563
    %v2134 = vunpack.c.h.b16 %v563
    %v2135 = vunpack.c.l.b16 %v564
    %v2136 = vunpack.c.h.b16 %v564
    %v2137 = vunpack.c.l.b16 %v565
    %v2138 = vunpack.c.h.b16 %v565
    %v2139 = vunpack.c.l.b16 %v566
    %v2140 = vunpack.c.h.b16 %v566
    %v2141 = vunpack.c.l.b16 %v567
    %v2142 = vunpack.c.h.b16 %v567
    %v2143 = vunpack.c.l.b16 %v568
    %v2144 = vunpack.c.h.b16 %v568
    %v2145 = vunpack.c.l.b16 %v569
    %v2146 = vunpack.c.h.b16 %v569
    %v2147 = vunpack.c.l.b16 %v570
    %v2148 = vunpack.c.h.b16 %v570
    %v2149 = vunpack.c.l.b16 %v571
    %v2150 = vunpack.c.h.b16 %v571
    %v2151 = vunpack.c.l.b16 %v572
    %v2152 = vunpack.c.h.b16 %v572
    %v2153 = vunpack.c.l.b16 %v573
    %v2154 = vunpack.c.h.b16 %v573
    %v2155 = vunpack.c.l.b16 %v574
    %v2156 = vunpack.c.h.b16 %v574
    %v2157 = vunpack.c.l.b16 %v575
    %v2158 = vunpack.c.h.b16 %v575
    %v2159 = vunpack.c.l.b16 %v576
    %v2160 = vunpack.c.h.b16 %v576
    %v2161 = vunpack.c.l.b16 %v577
    %v2162 = vunpack.c.h.b16 %v577
    %v2163 = vunpack.c.l.b16 %v578
    %v2164 = vunpack.c.h.b16 %v578
    %v2165 = vunpack.c.l.b16 %v579
    %v2166 = vunpack.c.h.b16 %v579
    %v2167 = vunpack.c.l.b16 %v580
    %v2168 = vunpack.c.h.b16 %v580
    %v2169 = vunpack.c.l.b16 %v581
    %v2170 = vunpack.c.h.b16 %v581
    %v2171 = vunpack.c.l.b16 %v582
    %v2172 = vunpack.c.h.b16 %v582
    %v2173 = vunpack.c.l.b16 %v583
    %v2174 = vunpack.c.h.b16 %v583
    %v2175 = vunpack.c.l.b16 %v584
    %v2176 = vunpack.c.h.b16 %v584
    %v2177 = vunpack.c.l.b16 %v585
    %v2178 = vunpack.c.h.b16 %v585
    %v2179 = vunpack.c.l.b16 %v586
    %v2180 = vunpack.c.h.b16 %v586
    %v2181 = vunpack.c.l.b16 %v587
    %v2182 = vunpack.c.h.b16 %v587
    %v2183 = vunpack.c.l.b16 %v588
    %v2184 = vunpack.c.h.b16 %v588
    %v2185 = vunpack.c.l.b16 %v589
    %v2186 = vunpack.c.h.b16 %v589
    %v2187 = vunpack.c.l.b16 %v590
    %v2188 = vunpack.c.h.b16 %v590
    %v2189 = vunpack.c.l.b16 %v591
    %v2190 = vunpack.c.h.b16 %v591
    %v2191 = vunpack.c.l.b16 %v592
    %v2192 = vunpack.c.h.b16 %v592
    %v2193 = vunpack.c.l.b16 %v593
    %v2194 = vunpack.c.h.b16 %v593
    %v2195 = vunpack.c.l.b16 %v594
    %v2196 = vunpack.c.h.b16 %v594
    %v2197 = vunpack.c.l.b16 %v595
    %v2198 = vunpack.c.h.b16 %v595
    %v2199 = vunpack.c.l.b16 %v596
    %v2200 = vunpack.c.h.b16 %v596
    %v2201 = vunpack.c.l.b16 %v597
    %v2202 = vunpack.c.h.b16 %v597
    %v2203 = vunpack.c.l.b16 %v598
    %v2204 = vunpack.c.h.b16 %v598
    %v2205 = vunpack.c.l.b16 %v599
    %v2206 = vunpack.c.h.b16 %v599
    %v2207 = vunpack.c.l.b16 %v600
    %v2208 = vunpack.c.h.b16 %v600
    %v2209 = vunpack.c.l.b16 %v601
    %v2210 = vunpack.c.h.b16 %v601
    %v2211 = vunpack.c.l.b16 %v602
    %v2212 = vunpack.c.h.b16 %v602
    %v2213 = vunpack.c.l.b16 %v603
    %v2214 = vunpack.c.h.b16 %v603
    %v2215 = vunpack.c.l.b16 %v604
    %v2216 = vunpack.c.h.b16 %v604
    %v2217 = vunpack.c.l.b16 %v605
    %v2218 = vunpack.c.h.b16 %v605
    %v2219 = vunpack.c.l.b16 %v606
    %v2220 = vunpack.c.h.b16 %v606
    %v2221 = vunpack.c.l.b16 %v607
    %v2222 = vunpack.c.h.b16 %v607
    %v2223 = vunpack.c.l.b16 %v608
    %v2224 = vunpack.c.h.b16 %v608
    %v2225 = vunpack.c.l.b16 %v609
    %v2226 = vunpack.c.h.b16 %v609
    %v2227 = vunpack.c.l.b16 %v610
    %v2228 = vunpack.c.h.b16 %v610
    %v2229 = vunpack.c.l.b16 %v611
    %v2230 = vunpack.c.h.b16 %v611
    %v2231 = vunpack.c.l.b16 %v612
    %v2232 = vunpack.c.h.b16 %v612
    %v2233 = vunpack.c.l.b16 %v613
    %v2234 = vunpack.c.h.b16 %v613
    %v2235 = vunpack.c.l.b16 %v614
    %v2236 = vunpack.c.h.b16 %v614
    %v2237 = vunpack.c.l.b16 %v615
    %v2238 = vunpack.c.h.b16 %v615
    %v2239 = vunpack.c.l.b16 %v616
    %v2240 = vunpack.c.h.b16 %v616
    %v2241 = vunpack.c.l.b16 %v617
    %v2242 = vunpack.c.h.b16 %v617
    %v2243 = vunpack.c.l.b16 %v618
    %v2244 = vunpack.c.h.b16 %v618
    %v2245 = vunpack.c.l.b16 %v619
    %v2246 = vunpack.c.h.b16 %v619
    %v2247 = vunpack.c.l.b16 %v620
    %v2248 = vunpack.c.h.b16 %v620
    %v2249 = vunpack.c.l.b16 %v621
    %v2250 = vunpack.c.h.b16 %v621
    %v2251 = vunpack.c.l.b16 %v622
    %v2252 = vunpack.c.h.b16 %v622
    %v2253 = vunpack.c.l.b16 %v623
    %v2254 = vunpack.c.h.b16 %v623
    %v2255 = vunpack.c.l.b16 %v624
    %v2256 = vunpack.c.h.b16 %v624
    %v2257 = vunpack.c.l.b16 %v625
    %v2258 = vunpack.c.h.b16 %v625
    %v2259 = vunpack.c.l.b16 %v626
    %v2260 = vunpack.c.h.b16 %v626
    %v2261 = vunpack.c.l.b16 %v627
    %v2262 = vunpack.c.h.b16 %v627
    %v2263 = vunpack.c.l.b16 %v628
    %v2264 = vunpack.c.h.b16 %v628
    %v2265 = vunpack.c.l.b16 %v629
    %v2266 = vunpack.c.h.b16 %v629
    %v2267 = vunpack.c.l.b16 %v630
    %v2268 = vunpack.c.h.b16 %v630
    %v2269 = vunpack.c.l.b16 %v631
    %v2270 = vunpack.c.h.b16 %v631
    %v2271 = vunpack.c.l.b16 %v632
    %v2272 = vunpack.c.h.b16 %v632
    %v2273 = vunpack.c.l.b16 %v633
    %v2274 = vunpack.c.h.b16 %v633
    %v2275 = vunpack.c.l.b16 %v634
    %v2276 = vunpack.c.h.b16 %v634
    %v2277 = vunpack.c.l.b16 %v635
    %v2278 = vunpack.c.h.b16 %v635
    %v2279 = vunpack.c.l.b16 %v636
    %v2280 = vunpack.c.h.b16 %v636
    %v2281 = vunpack.c.l.b16 %v637
    %v2282 = vunpack.c.h.b16 %v637
    %v2283 = vunpack.c.l.b16 %v638
    %v2284 = vunpack.c.h.b16 %v638
    %v2285 = vunpack.c.l.b16 %v639
    %v2286 = vunpack.c.h.b16 %v639
    %v2287 = vunpack.c.l.b16 %v640
    %v2288 = vunpack.c.h.b16 %v640
    %v2289 = vunpack.c.l.b16 %v641
    %v2290 = vunpack.c.h.b16 %v641
    %v2291 = vunpack.c.l.b16 %v642
    %v2292 = vunpack.c.h.b16 %v642
    %v2293 = vunpack.c.l.b16 %v643
    %v2294 = vunpack.c.h.b16 %v643
    %v2295 = vunpack.c.l.b16 %v644
    %v2296 = vunpack.c.h.b16 %v644
    %v2297 = vunpack.c.l.b16 %v645
    %v2298 = vunpack.c.h.b16 %v645
    %v2299 = vunpack.c.l.b16 %v646
    %v2300 = vunpack.c.h.b16 %v646
    %v2301 = vunpack.c.l.b16 %v647
    %v2302 = vunpack.c.h.b16 %v647
    %v2303 = vunpack.c.l.b16 %v648
    %v2304 = vunpack.c.h.b16 %v648
    %v2305 = vunpack.c.l.b16 %v649
    %v2306 = vunpack.c.h.b16 %v649
    %v2307 = vunpack.c.l.b16 %v650
    %v2308 = vunpack.c.h.b16 %v650
    %v2309 = vunpack.c.l.b16 %v651
    %v2310 = vunpack.c.h.b16 %v651
    %v2311 = vunpack.c.l.b16 %v652
    %v2312 = vunpack.c.h.b16 %v652
    %v2313 = vunpack.c.l.b16 %v653
    %v2314 = vunpack.c.h.b16 %v653
    %v2315 = vunpack.c.l.b16 %v654
    %v2316 = vunpack.c.h.b16 %v654
    %v2317 = vunpack.c.l.b16 %v655
    %v2318 = vunpack.c.h.b16 %v655
    %v2319 = vunpack.c.l.b16 %v656
    %v2320 = vunpack.c.h.b16 %v656
    %v2321 = vunpack.c.l.b16 %v657
    %v2322 = vunpack.c.h.b16 %v657
    %v2323 = vunpack.c.l.b16 %v658
    %v2324 = vunpack.c.h.b16 %v658
    %v2325 = vunpack.c.l.b16 %v659
    %v2326 = vunpack.c.h.b16 %v659
    %v2327 = vunpack.c.l.b16 %v660
    %v2328 = vunpack.c.h.b16 %v660
    %v2329 = vunpack.c.l.b16 %v661
    %v2330 = vunpack.c.h.b16 %v661
    %v2331 = vunpack.c.l.b16 %v662
    %v2332 = vunpack.c.h.b16 %v662
    %v2333 = vunpack.c.l.b16 %v663
    %v2334 = vunpack.c.h.b16 %v663
    %v2335 = vunpack.c.l.b16 %v664
    %v2336 = vunpack.c.h.b16 %v664
    %v2337 = vunpack.c.l.b16 %v665
    %v2338 = vunpack.c.h.b16 %v665
    %v2339 = vunpack.c.l.b16 %v666
    %v2340 = vunpack.c.h.b16 %v666
    %v2341 = vunpack.c.l.b16 %v667
    %v2342 = vunpack.c.h.b16 %v667
    %v2343 = vunpack.c.l.b16 %v668
    %v2344 = vunpack.c.h.b16 %v668
    %v2345 = vunpack.c.l.b16 %v669
    %v2346 = vunpack.c.h.b16 %v669
    %v2347 = vunpack.c.l.b16 %v670
    %v2348 = vunpack.c.h.b16 %v670
    %v2349 = vunpack.c.l.b16 %v671
    %v2350 = vunpack.c.h.b16 %v671
    %v2351 = vunpack.c.l.b16 %v672
    %v2352 = vunpack.c.h.b16 %v672
    %v2353 = vunpack.c.l.b16 %v673
    %v2354 = vunpack.c.h.b16 %v673
    %v2355 = vunpack.c.l.b16 %v674
    %v2356 = vunpack.c.h.b16 %v674
    %v2357 = vunpack.c.l.b16 %v675
    %v2358 = vunpack.c.h.b16 %v675
    %v2359 = vunpack.c.l.b16 %v676
    %v2360 = vunpack.c.h.b16 %v676
    %v2361 = vunpack.c.l.b16 %v677
    %v2362 = vunpack.c.h.b16 %v677
    %v2363 = vunpack.c.l.b16 %v678
    %v2364 = vunpack.c.h.b16 %v678
    %v2365 = vunpack.c.l.b16 %v679
    %v2366 = vunpack.c.h.b16 %v679
    %v2367 = vunpack.c.l.b16 %v680
    %v2368 = vunpack.c.h.b16 %v680
    %v2369 = vunpack.c.l.b16 %v681
    %v2370 = vunpack.c.h.b16 %v681
    %v2371 = vunpack.c.l.b16 %v682
    %v2372 = vunpack.c.h.b16 %v682
    %v2373 = vunpack.c.l.b16 %v683
    %v2374 = vunpack.c.h.b16 %v683
    %v2375 = vunpack.c.l.b16 %v684
    %v2376 = vunpack.c.h.b16 %v684
    %v2377 = vunpack.c.l.b16 %v685
    %v2378 = vunpack.c.h.b16 %v685
    %v2379 = vunpack.c.l.b16 %v686
    %v2380 = vunpack.c.h.b16 %v686
    %v2381 = vunpack.c.l.b16 %v687
    %v2382 = vunpack.c.h.b16 %v687
    %v2383 = vunpack.c.l.b16 %v688
    %v2384 = vunpack.c.h.b16 %v688
    %v2385 = vunpack.c.l.b16 %v689
    %v2386 = vunpack.c.h.b16 %v689
    %v2387 = vunpack.c.l.b16 %v690
    %v2388 = vunpack.c.h.b16 %v690
    %v2389 = vunpack.c.l.b16 %v691
    %v2390 = vunpack.c.h.b16 %v691
    %v2391 = vunpack.c.l.b16 %v692
    %v2392 = vunpack.c.h.b16 %v692
    %v2393 = vunpack.c.l.b16 %v693
    %v2394 = vunpack.c.h.b16 %v693
    %v2395 = vunpack.c.l.b16 %v694
    %v2396 = vunpack.c.h.b16 %v694
    %v2397 = vunpack.c.l.b16 %v695
    %v2398 = vunpack.c.h.b16 %v695
    %v2399 = vunpack.c.l.b16 %v696
    %v2400 = vunpack.c.h.b16 %v696
    %v2401 = vunpack.c.l.b16 %v697
    %v2402 = vunpack.c.h.b16 %v697
    %v2403 = vunpack.c.l.b16 %v698
    %v2404 = vunpack.c.h.b16 %v698
    %v2405 = vunpack.c.l.b16 %v699
    %v2406 = vunpack.c.h.b16 %v699
    %v2407 = vunpack.c.l.b16 %v700
    %v2408 = vunpack.c.h.b16 %v700
    %v2409 = vunpack.c.l.b16 %v701
    %v2410 = vunpack.c.h.b16 %v701
    %v2411 = vunpack.c.l.b16 %v702
    %v2412 = vunpack.c.h.b16 %v702
    %v2413 = vunpack.c.l.b16 %v703
    %v2414 = vunpack.c.h.b16 %v703
    %v2415 = vunpack.c.l.b16 %v704
    %v2416 = vunpack.c.h.b16 %v704
    %v2417 = vunpack.c.l.b16 %v705
    %v2418 = vunpack.c.h.b16 %v705
    %v2419 = vunpack.c.l.b16 %v706
    %v2420 = vunpack.c.h.b16 %v706
    %v2421 = vunpack.c.l.b16 %v707
    %v2422 = vunpack.c.h.b16 %v707
    %v2423 = vunpack.c.l.b16 %v708
    %v2424 = vunpack.c.h.b16 %v708
    %v2425 = vunpack.c.l.b16 %v709
    %v2426 = vunpack.c.h.b16 %v709
    %v2427 = vunpack.c.l.b16 %v710
    %v2428 = vunpack.c.h.b16 %v710
    %v2429 = vunpack.c.l.b16 %v711
    %v2430 = vunpack.c.h.b16 %v711
    %v2431 = vunpack.c.l.b16 %v712
    %v2432 = vunpack.c.h.b16 %v712
    %v2433 = vunpack.c.l.b16 %v713
    %v2434 = vunpack.c.h.b16 %v713
    %v2435 = vunpack.c.l.b16 %v714
    %v2436 = vunpack.c.h.b16 %v714
    %v2437 = vunpack.c.l.b16 %v715
    %v2438 = vunpack.c.h.b16 %v715
    %v2439 = vunpack.c.l.b16 %v716
    %v2440 = vunpack.c.h.b16 %v716
    %v2441 = vunpack.c.l.b16 %v717
    %v2442 = vunpack.c.h.b16 %v717
    %v2443 = vunpack.c.l.b16 %v718
    %v2444 = vunpack.c.h.b16 %v718
    %v2445 = vunpack.c.l.b16 %v719
    %v2446 = vunpack.c.h.b16 %v719
    %v2447 = vunpack.c.l.b16 %v720
    %v2448 = vunpack.c.h.b16 %v720
    %v2449 = vunpack.c.l.b16 %v721
    %v2450 = vunpack.c.h.b16 %v721
    %v2451 = vunpack.c.l.b16 %v722
    %v2452 = vunpack.c.h.b16 %v722
    %v2453 = vunpack.c.l.b16 %v723
    %v2454 = vunpack.c.h.b16 %v723
    %v2455 = vunpack.c.l.b16 %v724
    %v2456 = vunpack.c.h.b16 %v724
    %v2457 = vunpack.c.l.b16 %v725
    %v2458 = vunpack.c.h.b16 %v725
    %v2459 = vunpack.c.l.b16 %v726
    %v2460 = vunpack.c.h.b16 %v726
    %v2461 = vpack.c.b16 %v1311, %v1309
    %v2462 = vpack.c.b16 %v1312, %v1310
    %v2463 = vpack.c.b16 %v1315, %v1313
    %v2464 = vpack.c.b16 %v1316, %v1314
    %v2465 = vpack.c.b16 %v1319, %v1317
    %v2466 = vpack.c.b16 %v1320, %v1318
    %v2467 = vpack.c.b16 %v1323, %v1321
    %v2468 = vpack.c.b16 %v1324, %v1322
    %v2469 = vpack.c.b16 %v1327, %v1325
    %v2470 = vpack.c.b16 %v1328, %v1326
    %v2471 = vpack.c.b16 %v1331, %v1329
    %v2472 = vpack.c.b16 %v1332, %v1330
    %v2473 = vpack.c.b16 %v1335, %v1333
    %v2474 = vpack.c.b16 %v1336, %v1334
    %v2475 = vpack.c.b16 %v1339, %v1337
    %v2476 = vpack.c.b16 %v1340, %v1338
    %v2477 = vpack.c.b16 %v1343, %v1341
    %v2478 = vpack.c.b16 %v1344, %v1342
    %v2479 = vpack.c.b16 %v1347, %v1345
    %v2480 = vpack.c.b16 %v1348, %v1346
    %v2481 = vpack.c.b16 %v1351, %v1349
    %v2482 = vpack.c.b16 %v1352, %v1350
    %v2483 = vpack.c.b16 %v1355, %v1353
    %v2484 = vpack.c.b16 %v1356, %v1354
    %v2485 = vpack.c.b16 %v1359, %v1357
    %v2486 = vpack.c.b16 %v1360, %v1358
    %v2487 = vpack.c.b16 %v1363, %v1361
    %v2488 = vpack.c.b16 %v1364, %v1362
    %v2489 = vpack.c.b16 %v1367, %v1365
    %v2490 = vpack.c.b16 %v1368, %v1366
    %v2491 = vpack.c.b16 %v1371, %v1369
    %v2492 = vpack.c.b16 %v1372, %v1370
    %v2493 = vpack.c.b16 %v1375, %v1373
    %v2494 = vpack.c.b16 %v1376, %v1374
    %v2495 = vpack.c.b16 %v1379, %v1377
    %v2496 = vpack.c.b16 %v1380, %v1378
    %v2497 = vpack.c.b16 %v1383, %v1381
    %v2498 = vpack.c.b16 %v1384, %v1382
    %v2499 = vpack.c.b16 %v1387, %v1385
    %v2500 = vpack.c.b16 %v1388, %v1386
    %v2501 = vpack.c.b16 %v1391, %v1389
    %v2502 = vpack.c.b16 %v1392, %v1390
    %v2503 = vpack.c.b16 %v1395, %v1393
    %v2504 = vpack.c.b16 %v1396, %v1394
    %v2505 = vpack.c.b16 %v1399, %v1397
    %v2506 = vpack.c.b16 %v1400, %v1398
    %v2507 = vpack.c.b16 %v1403, %v1401
    %v2508 = vpack.c.b16 %v1404, %v1402
    %v2509 = vpack.c.b16 %v1407, %v1405
    %v2510 = vpack.c.b16 %v1408, %v1406
    %v2511 = vpack.c.b16 %v1411, %v1409
    %v2512 = vpack.c.b16 %v1412, %v1410
    %v2513 = vpack.c.b16 %v1415, %v1413
    %v2514 = vpack.c.b16 %v1416, %v1414
    %v2515 = vpack.c.b16 %v1419, %v1417
    %v2516 = vpack.c.b16 %v1420, %v1418
    %v2517 = vpack.c.b16 %v1423, %v1421
    %v2518 = vpack.c.b16 %v1424, %v1422
    %v2519 = vpack.c.b16 %v1427, %v1425
    %v2520 = vpack.c.b16 %v1428, %v1426
    %v2521 = vpack.c.b16 %v1431, %v1429
    %v2522 = vpack.c.b16 %v1432, %v1430
    %v2523 = vpack.c.b16 %v1435, %v1433
    %v2524 = vpack.c.b16 %v1436, %v1434
    %v2525 = vpack.c.b16 %v1439, %v1437
    %v2526 = vpack.c.b16 %v1440, %v1438
    %v2527 = vpack.c.b16 %v1443, %v1441
    %v2528 = vpack.c.b16 %v1444, %v1442
    %v2529 = vpack.c.b16 %v1447, %v1445
    %v2530 = vpack.c.b16 %v1448, %v1446
    %v2531 = vpack.c.b16 %v1451, %v1449
    %v2532 = vpack.c.b16 %v1452, %v1450
    %v2533 = vpack.c.b16 %v1455, %v1453
    %v2534 = vpack.c.b16 %v1456, %v1454
    %v2535 = vpack.c.b16 %v1459, %v1457
    %v2536 = vpack.c.b16 %v1460, %v1458
    %v2537 = vpack.c.b16 %v1463, %v1461
    %v2538 = vpack.c.b16 %v1464, %v1462
    %v2539 = vpack.c.b16 %v1467, %v1465
    %v2540 = vpack.c.b16 %v1468, %v1466
    %v2541 = vpack.c.b16 %v1471, %v1469
    %v2542 = vpack.c.b16 %v1472, %v1470
    %v2543 = vpack.c.b16 %v1475, %v1473
    %v2544 = vpack.c.b16 %v1476, %v1474
    %v2545 = vpack.c.b16 %v1479, %v1477
    %v2546 = vpack.c.b16 %v1480, %v1478
    %v2547 = vpack.c.b16 %v1483, %v1481
    %v2548 = vpack.c.b16 %v1484, %v1482
    %v2549 = vpack.c.b16 %v1487, %v1485
    %v2550 = vpack.c.b16 %v1488, %v1486
    %v2551 = vpack.c.b16 %v1491, %v1489
    %v2552 = vpack.c.b16 %v1492, %v1490
    %v2553 = vpack.c.b16 %v1495, %v1493
    %v2554 = vpack.c.b16 %v1496, %v1494
    %v2555 = vpack.c.b16 %v1499, %v1497
    %v2556 = vpack.c.b16 %v1500, %v1498
    %v2557 = vpack.c.b16 %v1503, %v1501
    %v2558 = vpack.c.b16 %v1504, %v1502
    %v2559 = vpack.c.b16 %v1507, %v1505
    %v2560 = vpack.c.b16 %v1508, %v1506
    %v2561 = vpack.c.b16 %v1511, %v1509
    %v2562 = vpack.c.b16 %v1512, %v1510
    %v2563 = vpack.c.b16 %v1515, %v1513
    %v2564 = vpack.c.b16 %v1516, %v1514
    %v2565 = vpack.c.b16 %v1519, %v1517
    %v2566 = vpack.c.b16 %v1520, %v1518
    %v2567 = vpack.c.b16 %v1523, %v1521
    %v2568 = vpack.c.b16 %v1524, %v1522
    %v2569 = vpack.c.b16 %v1527, %v1525
    %v2570 = vpack.c.b16 %v1528, %v1526
    %v2571 = vpack.c.b16 %v1531, %v1529
    %v2572 = vpack.c.b16 %v1532, %v1530
    %v2573 = vpack.c.b16 %v1535, %v1533
    %v2574 = vpack.c.b16 %v1536, %v1534
    %v2575 = vpack.c.b16 %v1539, %v1537
    %v2576 = vpack.c.b16 %v1540, %v1538
    %v2577 = vpack.c.b16 %v1543, %v1541
    %v2578 = vpack.c.b16 %v1544, %v1542
    %v2579 = vpack.c.b16 %v1547, %v1545
    %v2580 = vpack.c.b16 %v1548, %v1546
    %v2581 = vpack.c.b16 %v1551, %v1549
    %v2582 = vpack.c.b16 %v1552, %v1550
    %v2583 = vpack.c.b16 %v1555, %v1553
    %v2584 = vpack.c.b16 %v1556, %v1554
    %v2585 = vpack.c.b16 %v1559, %v1557
    %v2586 = vpack.c.b16 %v1560, %v1558
    %v2587 = vpack.c.b16 %v1563, %v1561
    %v2588 = vpack.c.b16 %v1564, %v1562
    %v2589 = vpack.c.b16 %v1567, %v1565
    %v2590 = vpack.c.b16 %v1568, %v1566
    %v2591 = vpack.c.b16 %v1571, %v1569
    %v2592 = vpack.c.b16 %v1572, %v1570
    %v2593 = vpack.c.b16 %v1575, %v1573
    %v2594 = vpack.c.b16 %v1576, %v1574
    %v2595 = vpack.c.b16 %v1579, %v1577
    %v2596 = vpack.c.b16 %v1580, %v1578
    %v2597 = vpack.c.b16 %v1583, %v1581
    %v2598 = vpack.c.b16 %v1584, %v1582
    %v2599 = vpack.c.b16 %v1587, %v1585
    %v2600 = vpack.c.b16 %v1588, %v1586
    %v2601 = vpack.c.b16 %v1591, %v1589
    %v2602 = vpack.c.b16 %v1592, %v1590
    %v2603 = vpack.c.b16 %v1595, %v1593
    %v2604 = vpack.c.b16 %v1596, %v1594
    %v2605 = vpack.c.b16 %v1599, %v1597
    %v2606 = vpack.c.b16 %v1600, %v1598
    %v2607 = vpack.c.b16 %v1603, %v1601
    %v2608 = vpack.c.b16 %v1604, %v1602
    %v2609 = vpack.c.b16 %v1607, %v1605
    %v2610 = vpack.c.b16 %v1608, %v1606
    %v2611 = vpack.c.b16 %v1611, %v1609
    %v2612 = vpack.c.b16 %v1612, %v1610
    %v2613 = vpack.c.b16 %v1615, %v1613
    %v2614 = vpack.c.b16 %v1616, %v1614
    %v2615 = vpack.c.b16 %v1619, %v1617
    %v2616 = vpack.c.b16 %v1620, %v1618
    %v2617 = vpack.c.b16 %v1623, %v1621
    %v2618 = vpack.c.b16 %v1624, %v1622
    %v2619 = vpack.c.b16 %v1627, %v1625
    %v2620 = vpack.c.b16 %v1628, %v1626
    %v2621 = vpack.c.b16 %v1631, %v1629
    %v2622 = vpack.c.b16 %v1632, %v1630
    %v2623 = vpack.c.b16 %v1635, %v1633
    %v2624 = vpack.c.b16 %v1636, %v1634
    %v2625 = vpack.c.b16 %v1639, %v1637
    %v2626 = vpack.c.b16 %v1640, %v1638
    %v2627 = vpack.c.b16 %v1643, %v1641
    %v2628 = vpack.c.b16 %v1644, %v1642
    %v2629 = vpack.c.b16 %v1647, %v1645
    %v2630 = vpack.c.b16 %v1648, %v1646
    %v2631 = vpack.c.b16 %v1651, %v1649
    %v2632 = vpack.c.b16 %v1652, %v1650
    %v2633 = vpack.c.b16 %v1655, %v1653
    %v2634 = vpack.c.b16 %v1656, %v1654
    %v2635 = vpack.c.b16 %v1659, %v1657
    %v2636 = vpack.c.b16 %v1660, %v1658
    %v2637 = vpack.c.b16 %v1663, %v1661
    %v2638 = vpack.c.b16 %v1664, %v1662
    %v2639 = vpack.c.b16 %v1667, %v1665
    %v2640 = vpack.c.b16 %v1668, %v1666
    %v2641 = vpack.c.b16 %v1671, %v1669
    %v2642 = vpack.c.b16 %v1672, %v1670
    %v2643 = vpack.c.b16 %v1675, %v1673
    %v2644 = vpack.c.b16 %v1676, %v1674
    %v2645 = vpack.c.b16 %v1679, %v1677
    %v2646 = vpack.c.b16 %v1680, %v1678
    %v2647 = vpack.c.b16 %v1683, %v1681
    %v2648 = vpack.c.b16 %v1684, %v1682
    %v2649 = vpack.c.b16 %v1687, %v1685
    %v2650 = vpack.c.b16 %v1688, %v1686
    %v2651 = vpack.c.b16 %v1691, %v1689
    %v2652 = vpack.c.b16 %v1692, %v1690
    %v2653 = vpack.c.b16 %v1695, %v1693
    %v2654 = vpack.c.b16 %v1696, %v1694
    %v2655 = vpack.c.b16 %v1699, %v1697
    %v2656 = vpack.c.b16 %v1700, %v1698
    %v2657 = vpack.c.b16 %v1703, %v1701
    %v2658 = vpack.c.b16 %v1704, %v1702
    %v2659 = vpack.c.b16 %v1707, %v1705
    %v2660 = vpack.c.b16 %v1708, %v1706
    %v2661 = vpack.c.b16 %v1711, %v1709
    %v2662 = vpack.c.b16 %v1712, %v1710
    %v2663 = vpack.c.b16 %v1715, %v1713
    %v2664 = vpack.c.b16 %v1716, %v1714
    %v2665 = vpack.c.b16 %v1719, %v1717
    %v2666 = vpack.c.b16 %v1720, %v1718
    %v2667 = vpack.c.b16 %v1723, %v1721
    %v2668 = vpack.c.b16 %v1724, %v1722
    %v2669 = vpack.c.b16 %v1727, %v1725
    %v2670 = vpack.c.b16 %v1728, %v1726
    %v2671 = vpack.c.b16 %v1731, %v1729
    %v2672 = vpack.c.b16 %v1732, %v1730
    %v2673 = vpack.c.b16 %v1735, %v1733
    %v2674 = vpack.c.b16 %v1736, %v1734
    %v2675 = vpack.c.b16 %v1739, %v1737
    %v2676 = vpack.c.b16 %v1740, %v1738
    %v2677 = vpack.c.b16 %v1743, %v1741
    %v2678 = vpack.c.b16 %v1744, %v1742
    %v2679 = vpack.c.b16 %v1747, %v1745
    %v2680 = vpack.c.b16 %v1748, %v1746
    %v2681 = vpack.c.b16 %v1751, %v1749
    %v2682 = vpack.c.b16 %v1752, %v1750
    %v2683 = vpack.c.b16 %v1755, %v1753
    %v2684 = vpack.c.b16 %v1756, %v1754
    %v2685 = vpack.c.b16 %v1759, %v1757
    %v2686 = vpack.c.b16 %v1760, %v1758
    %v2687 = vpack.c.b16 %v1763, %v1761
    %v2688 = vpack.c.b16 %v1764, %v1762
    %v2689 = vpack.c.b16 %v1767, %v1765
    %v2690 = vpack.c.b16 %v1768, %v1766
    %v2691 = vpack.c.b16 %v1771, %v1769
    %v2692 = vpack.c.b16 %v1772, %v1770
    %v2693 = vpack.c.b16 %v1775, %v1773
    %v2694 = vpack.c.b16 %v1776, %v1774
    %v2695 = vpack.c.b16 %v1779, %v1777
    %v2696 = vpack.c.b16 %v1780, %v1778
    %v2697 = vpack.c.b16 %v1783, %v1781
    %v2698 = vpack.c.b16 %v1784, %v1782
    %v2699 = vpack.c.b16 %v1787, %v1785
    %v2700 = vpack.c.b16 %v1788, %v1786
    %v2701 = vpack.c.b16 %v1791, %v1789
    %v2702 = vpack.c.b16 %v1792, %v1790
    %v2703 = vpack.c.b16 %v1795, %v1793
    %v2704 = vpack.c.b16 %v1796, %v1794
    %v2705 = vpack.c.b16 %v1799, %v1797
    %v2706 = vpack.c.b16 %v1800, %v1798
    %v2707 = vpack.c.b16 %v1803, %v1801
    %v2708 = vpack.c.b16 %v1804, %v1802
    %v2709 = vpack.c.b16 %v1807, %v1805
    %v2710 = vpack.c.b16 %v1808, %v1806
    %v2711 = vpack.c.b16 %v1811, %v1809
    %v2712 = vpack.c.b16 %v1812, %v1810
    %v2713 = vpack.c.b16 %v1815, %v1813
    %v2714 = vpack.c.b16 %v1816, %v1814
    %v2715 = vpack.c.b16 %v1819, %v1817
    %v2716 = vpack.c.b16 %v1820, %v1818
    %v2717 = vpack.c.b16 %v1823, %v1821
    %v2718 = vpack.c.b16 %v1824, %v1822
    %v2719 = vpack.c.b16 %v1827, %v1825
    %v2720 = vpack.c.b16 %v1828, %v1826
    %v2721 = vpack.c.b16 %v1831, %v1829
    %v2722 = vpack.c.b16 %v1832, %v1830
    %v2723 = vpack.c.b16 %v1835, %v1833
    %v2724 = vpack.c.b16 %v1836, %v1834
    %v2725 = vpack.c.b16 %v1839, %v1837
    %v2726 = vpack.c.b16 %v1840, %v1838
    %v2727 = vpack.c.b16 %v1843, %v1841
    %v2728 = vpack.c.b16 %v1844, %v1842
    %v2729 = vpack.c.b16 %v1847, %v1845
    %v2730 = vpack.c.b16 %v1848, %v1846
    %v2731 = vpack.c.b16 %v1851, %v1849
    %v2732 = vpack.c.b16 %v1852, %v1850
    %v2733 = vpack.c.b16 %v1855, %v1853
    %v2734 = vpack.c.b16 %v1856, %v1854
    %v2735 = vpack.c.b16 %v1859, %v1857
    %v2736 = vpack.c.b16 %v1860, %v1858
    %v2737 = vpack.c.b16 %v1863, %v1861
    %v2738 = vpack.c.b16 %v1864, %v1862
    %v2739 = vpack.c.b16 %v1867, %v1865
    %v2740 = vpack.c.b16 %v1868, %v1866
    %v2741 = vpack.c.b16 %v1871, %v1869
    %v2742 = vpack.c.b16 %v1872, %v1870
    %v2743 = vpack.c.b16 %v1875, %v1873
    %v2744 = vpack.c.b16 %v1876, %v1874
    %v2745 = vpack.c.b16 %v1879, %v1877
    %v2746 = vpack.c.b16 %v1880, %v1878
    %v2747 = vpack.c.b16 %v1883, %v1881
    %v2748 = vpack.c.b16 %v1884, %v1882
    %v2749 = vpack.c.b16 %v1887, %v1885
    %v2750 = vpack.c.b16 %v1888, %v1886
    %v2751 = vpack.c.b16 %v1891, %v1889
    %v2752 = vpack.c.b16 %v1892, %v1890
    %v2753 = vpack.c.b16 %v1895, %v1893
    %v2754 = vpack.c.b16 %v1896, %v1894
    %v2755 = vpack.c.b16 %v1899, %v1897
    %v2756 = vpack.c.b16 %v1900, %v1898
    %v2757 = vpack.c.b16 %v1903, %v1901
    %v2758 = vpack.c.b16 %v1904, %v1902
    %v2759 = vpack.c.b16 %v1907, %v1905
    %v2760 = vpack.c.b16 %v1908, %v1906
    %v2761 = vpack.c.b16 %v1911, %v1909
    %v2762 = vpack.c.b16 %v1912, %v1910
    %v2763 = vpack.c.b16 %v1915, %v1913
    %v2764 = vpack.c.b16 %v1916, %v1914
    %v2765 = vpack.c.b16 %v1919, %v1917
    %v2766 = vpack.c.b16 %v1920, %v1918
    %v2767 = vpack.c.b16 %v1923, %v1921
    %v2768 = vpack.c.b16 %v1924, %v1922
    %v2769 = vpack.c.b16 %v1927, %v1925
    %v2770 = vpack.c.b16 %v1928, %v1926
    %v2771 = vpack.c.b16 %v1931, %v1929
    %v2772 = vpack.c.b16 %v1932, %v1930
    %v2773 = vpack.c.b16 %v1935, %v1933
    %v2774 = vpack.c.b16 %v1936, %v1934
    %v2775 = vpack.c.b16 %v1939, %v1937
    %v2776 = vpack.c.b16 %v1940, %v1938
    %v2777 = vpack.c.b16 %v1943, %v1941
    %v2778 = vpack.c.b16 %v1944, %v1942
    %v2779 = vpack.c.b16 %v1947, %v1945
    %v2780 = vpack.c.b16 %v1948, %v1946
    %v2781 = vpack.c.b16 %v1951, %v1949
    %v2782 = vpack.c.b16 %v1952, %v1950
    %v2783 = vpack.c.b16 %v1955, %v1953
    %v2784 = vpack.c.b16 %v1956, %v1954
    %v2785 = vpack.c.b16 %v1959, %v1957
    %v2786 = vpack.c.b16 %v1960, %v1958
    %v2787 = vpack.c.b16 %v1963, %v1961
    %v2788 = vpack.c.b16 %v1964, %v1962
    %v2789 = vpack.c.b16 %v1967, %v1965
    %v2790 = vpack.c.b16 %v1968, %v1966
    %v2791 = vpack.c.b16 %v1971, %v1969
    %v2792 = vpack.c.b16 %v1972, %v1970
    %v2793 = vpack.c.b16 %v1975, %v1973
    %v2794 = vpack.c.b16 %v1976, %v1974
    %v2795 = vpack.c.b16 %v1979, %v1977
    %v2796 = vpack.c.b16 %v1980, %v1978
    %v2797 = vpack.c.b16 %v1983, %v1981
    %v2798 = vpack.c.b16 %v1984, %v1982
    %v2799 = vpack.c.b16 %v1987, %v1985
    %v2800 = vpack.c.b16 %v1988, %v1986
    %v2801 = vpack.c.b16 %v1991, %v1989
    %v2802 = vpack.c.b16 %v1992, %v1990
    %v2803 = vpack.c.b16 %v1995, %v1993
    %v2804 = vpack.c.b16 %v1996, %v1994
    %v2805 = vpack.c.b16 %v1999, %v1997
    %v2806 = vpack.c.b16 %v2000, %v1998
    %v2807 = vpack.c.b16 %v2003, %v2001
    %v2808 = vpack.c.b16 %v2004, %v2002
    %v2809 = vpack.c.b16 %v2007, %v2005
    %v2810 = vpack.c.b16 %v2008, %v2006
    %v2811 = vpack.c.b16 %v2011, %v2009
    %v2812 = vpack.c.b16 %v2012, %v2010
    %v2813 = vpack.c.b16 %v2015, %v2013
    %v2814 = vpack.c.b16 %v2016, %v2014
    %v2815 = vpack.c.b16 %v2019, %v2017
    %v2816 = vpack.c.b16 %v2020, %v2018
    %v2817 = vpack.c.b16 %v2023, %v2021
    %v2818 = vpack.c.b16 %v2024, %v2022
    %v2819 = vpack.c.b16 %v2027, %v2025
    %v2820 = vpack.c.b16 %v2028, %v2026
    %v2821 = vpack.c.b16 %v2031, %v2029
    %v2822 = vpack.c.b16 %v2032, %v2030
    %v2823 = vpack.c.b16 %v2035, %v2033
    %v2824 = vpack.c.b16 %v2036, %v2034
    %v2825 = vpack.c.b16 %v2039, %v2037
    %v2826 = vpack.c.b16 %v2040, %v2038
    %v2827 = vpack.c.b16 %v2043, %v2041
    %v2828 = vpack.c.b16 %v2044, %v2042
    %v2829 = vpack.c.b16 %v2047, %v2045
    %v2830 = vpack.c.b16 %v2048, %v2046
    %v2831 = vpack.c.b16 %v2051, %v2049
    %v2832 = vpack.c.b16 %v2052, %v2050
    %v2833 = vpack.c.b16 %v2055, %v2053
    %v2834 = vpack.c.b16 %v2056, %v2054
    %v2835 = vpack.c.b16 %v2059, %v2057
    %v2836 = vpack.c.b16 %v2060, %v2058
    %v2837 = vpack.c.b16 %v2063, %v2061
    %v2838 = vpack.c.b16 %v2064, %v2062
    %v2839 = vpack.c.b16 %v2067, %v2065
    %v2840 = vpack.c.b16 %v2068, %v2066
    %v2841 = vpack.c.b16 %v2071, %v2069
    %v2842 = vpack.c.b16 %v2072, %v2070
    %v2843 = vpack.c.b16 %v2075, %v2073
    %v2844 = vpack.c.b16 %v2076, %v2074
    %v2845 = vpack.c.b16 %v2079, %v2077
    %v2846 = vpack.c.b16 %v2080, %v2078
    %v2847 = vpack.c.b16 %v2083, %v2081
    %v2848 = vpack.c.b16 %v2084, %v2082
    %v2849 = vpack.c.b16 %v2087, %v2085
    %v2850 = vpack.c.b16 %v2088, %v2086
    %v2851 = vpack.c.b16 %v2091, %v2089
    %v2852 = vpack.c.b16 %v2092, %v2090
    %v2853 = vpack.c.b16 %v2095, %v2093
    %v2854 = vpack.c.b16 %v2096, %v2094
    %v2855 = vpack.c.b16 %v2099, %v2097
    %v2856 = vpack.c.b16 %v2100, %v2098
    %v2857 = vpack.c.b16 %v2103, %v2101
    %v2858 = vpack.c.b16 %v2104, %v2102
    %v2859 = vpack.c.b16 %v2107, %v2105
    %v2860 = vpack.c.b16 %v2108, %v2106
    %v2861 = vpack.c.b16 %v2111, %v2109
    %v2862 = vpack.c.b16 %v2112, %v2110
    %v2863 = vpack.c.b16 %v2115, %v2113
    %v2864 = vpack.c.b16 %v2116, %v2114
    %v2865 = vpack.c.b16 %v2119, %v2117
    %v2866 = vpack.c.b16 %v2120, %v2118
    %v2867 = vpack.c.b16 %v2123, %v2121
    %v2868 = vpack.c.b16 %v2124, %v2122
    %v2869 = vpack.c.b16 %v2127, %v2125
    %v2870 = vpack.c.b16 %v2128, %v2126
    %v2871 = vpack.c.b16 %v2131, %v2129
    %v2872 = vpack.c.b16 %v2132, %v2130
    %v2873 = vpack.c.b16 %v2135, %v2133
    %v2874 = vpack.c.b16 %v2136, %v2134
    %v2875 = vpack.c.b16 %v2139, %v2137
    %v2876 = vpack.c.b16 %v2140, %v2138
    %v2877 = vpack.c.b16 %v2143, %v2141
    %v2878 = vpack.c.b16 %v2144, %v2142
    %v2879 = vpack.c.b16 %v2147, %v2145
    %v2880 = vpack.c.b16 %v2148, %v2146
    %v2881 = vpack.c.b16 %v2151, %v2149
    %v2882 = vpack.c.b16 %v2152, %v2150
    %v2883 = vpack.c.b16 %v2155, %v2153
    %v2884 = vpack.c.b16 %v2156, %v2154
    %v2885 = vpack.c.b16 %v2159, %v2157
    %v2886 = vpack.c.b16 %v2160, %v2158
    %v2887 = vpack.c.b16 %v2163, %v2161
    %v2888 = vpack.c.b16 %v2164, %v2162
    %v2889 = vpack.c.b16 %v2167, %v2165
    %v2890 = vpack.c.b16 %v2168, %v2166
    %v2891 = vpack.c.b16 %v2171, %v2169
    %v2892 = vpack.c.b16 %v2172, %v2170
    %v2893 = vpack.c.b16 %v2175, %v2173
    %v2894 = vpack.c.b16 %v2176, %v2174
    %v2895 = vpack.c.b16 %v2179, %v2177
    %v2896 = vpack.c.b16 %v2180, %v2178
    %v2897 = vpack.c.b16 %v2183, %v2181
    %v2898 = vpack.c.b16 %v2184, %v2182
    %v2899 = vpack.c.b16 %v2187, %v2185
    %v2900 = vpack.c.b16 %v2188, %v2186
    %v2901 = vpack.c.b16 %v2191, %v2189
    %v2902 = vpack.c.b16 %v2192, %v2190
    %v2903 = vpack.c.b16 %v2195, %v2193
    %v2904 = vpack.c.b16 %v2196, %v2194
    %v2905 = vpack.c.b16 %v2199, %v2197
    %v2906 = vpack.c.b16 %v2200, %v2198
    %v2907 = vpack.c.b16 %v2203, %v2201
    %v2908 = vpack.c.b16 %v2204, %v2202
    %v2909 = vpack.c.b16 %v2207, %v2205
    %v2910 = vpack.c.b16 %v2208, %v2206
    %v2911 = vpack.c.b16 %v2211, %v2209
    %v2912 = vpack.c.b16 %v2212, %v2210
    %v2913 = vpack.c.b16 %v2215, %v2213
    %v2914 = vpack.c.b16 %v2216, %v2214
    %v2915 = vpack.c.b16 %v2219, %v2217
    %v2916 = vpack.c.b16 %v2220, %v2218
    %v2917 = vpack.c.b16 %v2223, %v2221
    %v2918 = vpack.c.b16 %v2224, %v2222
    %v2919 = vpack.c.b16 %v2227, %v2225
    %v2920 = vpack.c.b16 %v2228, %v2226
    %v2921 = vpack.c.b16 %v2231, %v2229
    %v2922 = vpack.c.b16 %v2232, %v2230
    %v2923 = vpack.c.b16 %v2235, %v2233
    %v2924 = vpack.c.b16 %v2236, %v2234
    %v2925 = vpack.c.b16 %v2239, %v2237
    %v2926 = vpack.c.b16 %v2240, %v2238
    %v2927 = vpack.c.b16 %v2243, %v2241
    %v2928 = vpack.c.b16 %v2244, %v2242
    %v2929 = vpack.c.b16 %v2247, %v2245
    %v2930 = vpack.c.b16 %v2248, %v2246
    %v2931 = vpack.c.b16 %v2251, %v2249
    %v2932 = vpack.c.b16 %v2252, %v2250
    %v2933 = vpack.c.b16 %v2255, %v2253
    %v2934 = vpack.c.b16 %v2256, %v2254
    %v2935 = vpack.c.b16 %v2259, %v2257
    %v2936 = vpack.c.b16 %v2260, %v2258
    %v2937 = vpack.c.b16 %v2263, %v2261
    %v2938 = vpack.c.b16 %v2264, %v2262
    %v2939 = vpack.c.b16 %v2267, %v2265
    %v2940 = vpack.c.b16 %v2268, %v2266
    %v2941 = vpack.c.b16 %v2271, %v2269
    %v2942 = vpack.c.b16 %v2272, %v2270
    %v2943 = vpack.c.b16 %v2275, %v2273
    %v2944 = vpack.c.b16 %v2276, %v2274
    %v2945 = vpack.c.b16 %v2279, %v2277
    %v2946 = vpack.c.b16 %v2280, %v2278
    %v2947 = vpack.c.b16 %v2283, %v2281
    %v2948 = vpack.c.b16 %v2284, %v2282
    %v2949 = vpack.c.b16 %v2287, %v2285
    %v2950 = vpack.c.b16 %v2288, %v2286
    %v2951 = vpack.c.b16 %v2291, %v2289
    %v2952 = vpack.c.b16 %v2292, %v2290
    %v2953 = vpack.c.b16 %v2295, %v2293
    %v2954 = vpack.c.b16 %v2296, %v2294
    %v2955 = vpack.c.b16 %v2299, %v2297
    %v2956 = vpack.c.b16 %v2300, %v2298
    %v2957 = vpack.c.b16 %v2303, %v2301
    %v2958 = vpack.c.b16 %v2304, %v2302
    %v2959 = vpack.c.b16 %v2307, %v2305
    %v2960 = vpack.c.b16 %v2308, %v2306
    %v2961 = vpack.c.b16 %v2311, %v2309
    %v2962 = vpack.c.b16 %v2312, %v2310
    %v2963 = vpack.c.b16 %v2315, %v2313
    %v2964 = vpack.c.b16 %v2316, %v2314
    %v2965 = vpack.c.b16 %v2319, %v2317
    %v2966 = vpack.c.b16 %v2320, %v2318
    %v2967 = vpack.c.b16 %v2323, %v2321
    %v2968 = vpack.c.b16 %v2324, %v2322
    %v2969 = vpack.c.b16 %v2327, %v2325
    %v2970 = vpack.c.b16 %v2328, %v2326
    %v2971 = vpack.c.b16 %v2331, %v2329
    %v2972 = vpack.c.b16 %v2332, %v2330
    %v2973 = vpack.c.b16 %v2335, %v2333
    %v2974 = vpack.c.b16 %v2336, %v2334
    %v2975 = vpack.c.b16 %v2339, %v2337
    %v2976 = vpack.c.b16 %v2340, %v2338
    %v2977 = vpack.c.b16 %v2343, %v2341
    %v2978 = vpack.c.b16 %v2344, %v2342
    %v2979 = vpack.c.b16 %v2347, %v2345
    %v2980 = vpack.c.b16 %v2348, %v2346
    %v2981 = vpack.c.b16 %v2351, %v2349
    %v2982 = vpack.c.b16 %v2352, %v2350
    %v2983 = vpack.c.b16 %v2355, %v2353
    %v2984 = vpack.c.b16 %v2356, %v2354
    %v2985 = vpack.c.b16 %v2359, %v2357
    %v2986 = vpack.c.b16 %v2360, %v2358
    %v2987 = vpack.c.b16 %v2363, %v2361
    %v2988 = vpack.c.b16 %v2364, %v2362
    %v2989 = vpack.c.b16 %v2367, %v2365
    %v2990 = vpack.c.b16 %v2368, %v2366
    %v2991 = vpack.c.b16 %v2371, %v2369
    %v2992 = vpack.c.b16 %v2372, %v2370
    %v2993 = vpack.c.b16 %v2375, %v2373
    %v2994 = vpack.c.b16 %v2376, %v2374
    %v2995 = vpack.c.b16 %v2379, %v2377
    %v2996 = vpack.c.b16 %v2380, %v2378
    %v2997 = vpack.c.b16 %v2383, %v2381
    %v2998 = vpack.c.b16 %v2384, %v2382
    %v2999 = vpack.c.b16 %v2387, %v2385
    %v3000 = vpack.c.b16 %v2388, %v2386
    %v3001 = vpack.c.b16 %v2391, %v2389
    %v3002 = vpack.c.b16 %v2392, %v2390
    %v3003 = vpack.c.b16 %v2395, %v2393
    %v3004 = vpack.c.b16 %v2396, %v2394
    %v3005 = vpack.c.b16 %v2399, %v2397
    %v3006 = vpack.c.b16 %v2400, %v2398
    %v3007 = vpack.c.b16 %v2403, %v2401
    %v3008 = vpack.c.b16 %v2404, %v2402
    %v3009 = vpack.c.b16 %v2407, %v2405
    %v3010 = vpack.c.b16 %v2408, %v2406
    %v3011 = vpack.c.b16 %v2411, %v2409
    %v3012 = vpack.c.b16 %v2412, %v2410
    %v3013 = vpack.c.b16 %v2415, %v2413
    %v3014 = vpack.c.b16 %v2416, %v2414
    %v3015 = vpack.c.b16 %v2419, %v2417
    %v3016 = vpack.c.b16 %v2420, %v2418
    %v3017 = vpack.c.b16 %v2423, %v2421
    %v3018 = vpack.c.b16 %v2424, %v2422
    %v3019 = vpack.c.b16 %v2427, %v2425
    %v3020 = vpack.c.b16 %v2428, %v2426
    %v3021 = vpack.c.b16 %v2431, %v2429
    %v3022 = vpack.c.b16 %v2432, %v2430
    %v3023 = vpack.c.b16 %v2435, %v2433
    %v3024 = vpack.c.b16 %v2436, %v2434
    %v3025 = vpack.c.b16 %v2439, %v2437
    %v3026 = vpack.c.b16 %v2440, %v2438
    %v3027 = vpack.c.b16 %v2443, %v2441
    %v3028 = vpack.c.b16 %v2444, %v2442
    %v3029 = vpack.c.b16 %v2447, %v2445
    %v3030 = vpack.c.b16 %v2448, %v2446
    %v3031 = vpack.c.b16 %v2451, %v2449
    %v3032 = vpack.c.b16 %v2452, %v2450
    %v3033 = vpack.c.b16 %v2455, %v2453
    %v3034 = vpack.c.b16 %v2456, %v2454
    %v3035 = vpack.c.b16 %v2459, %v2457
    %v3036 = vpack.c.b16 %v2460, %v2458
    %3613 = vmatpush.bf16.msra.mxu0 %v2475
    %3614 = vmatpush.bf16.msra.mxu0 %v2473
    %3615 = vmatpush.bf16.msra.mxu0 %v2471
    %3616 = vmatpush.bf16.msra.mxu0 %v2469
    %3617 = vmatpush.bf16.msra.mxu0 %v2467
    %3618 = vmatpush.bf16.msra.mxu0 %v2465
    %3619 = vmatpush.bf16.msra.mxu0 %v2463
    %3620 = vmatpush.bf16.msra.mxu0 %v2461
    %3621 = vmatmul.bf16.gmra.mxu0 %v115
    %v3622 = vpop.f32.mrf.mxu0
    %v3623 = vadd.f32 %v729, %v3622
    %v3624 = vpop.f32.mrf.mxu0
    %3625 = vdwg.mxu0
    %3626 = vmatpush.bf16.msra.mxu0 %v2491
    %3627 = vmatpush.bf16.msra.mxu0 %v2489
    %3628 = vmatpush.bf16.msra.mxu0 %v2487
    %3629 = vmatpush.bf16.msra.mxu0 %v2485
    %3630 = vmatpush.bf16.msra.mxu0 %v2483
    %3631 = vmatpush.bf16.msra.mxu0 %v2481
    %3632 = vmatpush.bf16.msra.mxu0 %v2479
    %3633 = vmatpush.bf16.msra.mxu0 %v2477
    %3634 = vmatmul.bf16.gmra.mxu0 %v116
    %v3635 = vpop.f32.mrf.mxu0
    %v3636 = vadd.f32 %v3623, %v3635
    %v3637 = vpop.f32.mrf.mxu0
    %3638 = vdwg.mxu0
    %3639 = vmatpush.bf16.msra.mxu0 %v2507
    %3640 = vmatpush.bf16.msra.mxu0 %v2505
    %3641 = vmatpush.bf16.msra.mxu0 %v2503
    %3642 = vmatpush.bf16.msra.mxu0 %v2501
    %3643 = vmatpush.bf16.msra.mxu0 %v2499
    %3644 = vmatpush.bf16.msra.mxu0 %v2497
    %3645 = vmatpush.bf16.msra.mxu0 %v2495
    %3646 = vmatpush.bf16.msra.mxu0 %v2493
    %3647 = vmatmul.bf16.gmra.mxu0 %v117
    %v3648 = vpop.f32.mrf.mxu0
    %v3649 = vadd.f32 %v3636, %v3648
    %v3650 = vpop.f32.mrf.mxu0
    %3651 = vdwg.mxu0
    %3652 = vmatpush.bf16.msra.mxu0 %v2523
    %3653 = vmatpush.bf16.msra.mxu0 %v2521
    %3654 = vmatpush.bf16.msra.mxu0 %v2519
    %3655 = vmatpush.bf16.msra.mxu0 %v2517
    %3656 = vmatpush.bf16.msra.mxu0 %v2515
    %3657 = vmatpush.bf16.msra.mxu0 %v2513
    %3658 = vmatpush.bf16.msra.mxu0 %v2511
    %3659 = vmatpush.bf16.msra.mxu0 %v2509
    %3660 = vmatmul.bf16.gmra.mxu0 %v118
    %v3661 = vpop.f32.mrf.mxu0
    %v3662 = vadd.f32 %v3649, %v3661
    %v3663 = vpop.f32.mrf.mxu0
    %3664 = vdwg.mxu0
    %3665 = vmatpush.bf16.msra.mxu0 %v2539
    %3666 = vmatpush.bf16.msra.mxu0 %v2537
    %3667 = vmatpush.bf16.msra.mxu0 %v2535
    %3668 = vmatpush.bf16.msra.mxu0 %v2533
    %3669 = vmatpush.bf16.msra.mxu0 %v2531
    %3670 = vmatpush.bf16.msra.mxu0 %v2529
    %3671 = vmatpush.bf16.msra.mxu0 %v2527
    %3672 = vmatpush.bf16.msra.mxu0 %v2525
    %3673 = vmatmul.bf16.gmra.mxu0 %v119
    %v3674 = vpop.f32.mrf.mxu0
    %v3675 = vadd.f32 %v3662, %v3674
    %v3676 = vpop.f32.mrf.mxu0
    %3677 = vdwg.mxu0
    %3678 = vmatpush.bf16.msra.mxu0 %v2555
    %3679 = vmatpush.bf16.msra.mxu0 %v2553
    %3680 = vmatpush.bf16.msra.mxu0 %v2551
    %3681 = vmatpush.bf16.msra.mxu0 %v2549
    %3682 = vmatpush.bf16.msra.mxu0 %v2547
    %3683 = vmatpush.bf16.msra.mxu0 %v2545
    %3684 = vmatpush.bf16.msra.mxu0 %v2543
    %3685 = vmatpush.bf16.msra.mxu0 %v2541
    %3686 = vmatmul.bf16.gmra.mxu0 %v120
    %v3687 = vpop.f32.mrf.mxu0
    %v3688 = vadd.f32 %v3675, %v3687
    %v3689 = vpop.f32.mrf.mxu0
    %3690 = vdwg.mxu0
    %3691 = vmatpush.bf16.msra.mxu0 %v2571
    %3692 = vmatpush.bf16.msra.mxu0 %v2569
    %3693 = vmatpush.bf16.msra.mxu0 %v2567
    %3694 = vmatpush.bf16.msra.mxu0 %v2565
    %3695 = vmatpush.bf16.msra.mxu0 %v2563
    %3696 = vmatpush.bf16.msra.mxu0 %v2561
    %3697 = vmatpush.bf16.msra.mxu0 %v2559
    %3698 = vmatpush.bf16.msra.mxu0 %v2557
    %3699 = vmatmul.bf16.gmra.mxu0 %v121
    %v3700 = vpop.f32.mrf.mxu0
    %v3701 = vadd.f32 %v3688, %v3700
    %v3702 = vpop.f32.mrf.mxu0
    %3703 = vdwg.mxu0
    %3704 = vmatpush.bf16.msra.mxu0 %v2587
    %3705 = vmatpush.bf16.msra.mxu0 %v2585
    %3706 = vmatpush.bf16.msra.mxu0 %v2583
    %3707 = vmatpush.bf16.msra.mxu0 %v2581
    %3708 = vmatpush.bf16.msra.mxu0 %v2579
    %3709 = vmatpush.bf16.msra.mxu0 %v2577
    %3710 = vmatpush.bf16.msra.mxu0 %v2575
    %3711 = vmatpush.bf16.msra.mxu0 %v2573
    %3712 = vmatmul.bf16.gmra.mxu0 %v122
    %v3713 = vpop.f32.mrf.mxu0
    %v3714 = vadd.f32 %v3701, %v3713
    %v3715 = vpop.f32.mrf.mxu0
    %3716 = vdwg.mxu0
    %3717 = vmatpush.bf16.msra.mxu0 %v2603
    %3718 = vmatpush.bf16.msra.mxu0 %v2601
    %3719 = vmatpush.bf16.msra.mxu0 %v2599
    %3720 = vmatpush.bf16.msra.mxu0 %v2597
    %3721 = vmatpush.bf16.msra.mxu0 %v2595
    %3722 = vmatpush.bf16.msra.mxu0 %v2593
    %3723 = vmatpush.bf16.msra.mxu0 %v2591
    %3724 = vmatpush.bf16.msra.mxu0 %v2589
    %3725 = vmatmul.bf16.gmra.mxu0 %v123
    %v3726 = vpop.f32.mrf.mxu0
    %v3727 = vadd.f32 %v3714, %v3726
    %v3728 = vpop.f32.mrf.mxu0
    %3729 = vdwg.mxu0
    %3730 = vmatpush.bf16.msra.mxu0 %v2619
    %3731 = vmatpush.bf16.msra.mxu0 %v2617
    %3732 = vmatpush.bf16.msra.mxu0 %v2615
    %3733 = vmatpush.bf16.msra.mxu0 %v2613
    %3734 = vmatpush.bf16.msra.mxu0 %v2611
    %3735 = vmatpush.bf16.msra.mxu0 %v2609
    %3736 = vmatpush.bf16.msra.mxu0 %v2607
    %3737 = vmatpush.bf16.msra.mxu0 %v2605
    %3738 = vmatmul.bf16.gmra.mxu0 %v124
    %v3739 = vpop.f32.mrf.mxu0
    %v3740 = vadd.f32 %v3727, %v3739
    %v3741 = vpop.f32.mrf.mxu0
    %3742 = vdwg.mxu0
    %3743 = vmatpush.bf16.msra.mxu0 %v2635
    %3744 = vmatpush.bf16.msra.mxu0 %v2633
    %3745 = vmatpush.bf16.msra.mxu0 %v2631
    %3746 = vmatpush.bf16.msra.mxu0 %v2629
    %3747 = vmatpush.bf16.msra.mxu0 %v2627
    %3748 = vmatpush.bf16.msra.mxu0 %v2625
    %3749 = vmatpush.bf16.msra.mxu0 %v2623
    %3750 = vmatpush.bf16.msra.mxu0 %v2621
    %3751 = vmatmul.bf16.gmra.mxu0 %v125
    %v3752 = vpop.f32.mrf.mxu0
    %v3753 = vadd.f32 %v3740, %v3752
    %v3754 = vpop.f32.mrf.mxu0
    %3755 = vdwg.mxu0
    %3756 = vmatpush.bf16.msra.mxu0 %v2651
    %3757 = vmatpush.bf16.msra.mxu0 %v2649
    %3758 = vmatpush.bf16.msra.mxu0 %v2647
    %3759 = vmatpush.bf16.msra.mxu0 %v2645
    %3760 = vmatpush.bf16.msra.mxu0 %v2643
    %3761 = vmatpush.bf16.msra.mxu0 %v2641
    %3762 = vmatpush.bf16.msra.mxu0 %v2639
    %3763 = vmatpush.bf16.msra.mxu0 %v2637
    %3764 = vmatmul.bf16.gmra.mxu0 %v126
    %v3765 = vpop.f32.mrf.mxu0
    %v3766 = vadd.f32 %v3753, %v3765
    %v3767 = vpop.f32.mrf.mxu0
    %3768 = vdwg.mxu0
    %3769 = vmatpush.bf16.msra.mxu0 %v2667
    %3770 = vmatpush.bf16.msra.mxu0 %v2665
    %3771 = vmatpush.bf16.msra.mxu0 %v2663
    %3772 = vmatpush.bf16.msra.mxu0 %v2661
    %3773 = vmatpush.bf16.msra.mxu0 %v2659
    %3774 = vmatpush.bf16.msra.mxu0 %v2657
    %3775 = vmatpush.bf16.msra.mxu0 %v2655
    %3776 = vmatpush.bf16.msra.mxu0 %v2653
    %3777 = vmatmul.bf16.gmra.mxu0 %v127
    %v3778 = vpop.f32.mrf.mxu0
    %v3779 = vadd.f32 %v3766, %v3778
    %v3780 = vpop.f32.mrf.mxu0
    %3781 = vdwg.mxu0
    %3782 = vmatpush.bf16.msra.mxu0 %v2683
    %3783 = vmatpush.bf16.msra.mxu0 %v2681
    %3784 = vmatpush.bf16.msra.mxu0 %v2679
    %3785 = vmatpush.bf16.msra.mxu0 %v2677
    %3786 = vmatpush.bf16.msra.mxu0 %v2675
    %3787 = vmatpush.bf16.msra.mxu0 %v2673
    %3788 = vmatpush.bf16.msra.mxu0 %v2671
    %3789 = vmatpush.bf16.msra.mxu0 %v2669
    %3790 = vmatmul.bf16.gmra.mxu0 %v128
    %v3791 = vpop.f32.mrf.mxu0
    %v3792 = vadd.f32 %v3779, %v3791
    %v3793 = vpop.f32.mrf.mxu0
    %3794 = vdwg.mxu0
    %3795 = vmatpush.bf16.msra.mxu0 %v2699
    %3796 = vmatpush.bf16.msra.mxu0 %v2697
    %3797 = vmatpush.bf16.msra.mxu0 %v2695
    %3798 = vmatpush.bf16.msra.mxu0 %v2693
    %3799 = vmatpush.bf16.msra.mxu0 %v2691
    %3800 = vmatpush.bf16.msra.mxu0 %v2689
    %3801 = vmatpush.bf16.msra.mxu0 %v2687
    %3802 = vmatpush.bf16.msra.mxu0 %v2685
    %3803 = vmatmul.bf16.gmra.mxu0 %v129
    %v3804 = vpop.f32.mrf.mxu0
    %v3805 = vadd.f32 %v3792, %v3804
    %v3806 = vpop.f32.mrf.mxu0
    %3807 = vdwg.mxu0
    %3808 = vmatpush.bf16.msra.mxu0 %v2715
    %3809 = vmatpush.bf16.msra.mxu0 %v2713
    %3810 = vmatpush.bf16.msra.mxu0 %v2711
    %3811 = vmatpush.bf16.msra.mxu0 %v2709
    %3812 = vmatpush.bf16.msra.mxu0 %v2707
    %3813 = vmatpush.bf16.msra.mxu0 %v2705
    %3814 = vmatpush.bf16.msra.mxu0 %v2703
    %3815 = vmatpush.bf16.msra.mxu0 %v2701
    %3816 = vmatmul.bf16.gmra.mxu0 %v130
    %v3817 = vpop.f32.mrf.mxu0
    %v3818 = vadd.f32 %v3805, %v3817
    %v3819 = vpop.f32.mrf.mxu0
    %3820 = vdwg.mxu0
    %3821 = vmatpush.bf16.msra.mxu0 %v2731
    %3822 = vmatpush.bf16.msra.mxu0 %v2729
    %3823 = vmatpush.bf16.msra.mxu0 %v2727
    %3824 = vmatpush.bf16.msra.mxu0 %v2725
    %3825 = vmatpush.bf16.msra.mxu0 %v2723
    %3826 = vmatpush.bf16.msra.mxu0 %v2721
    %3827 = vmatpush.bf16.msra.mxu0 %v2719
    %3828 = vmatpush.bf16.msra.mxu0 %v2717
    %3829 = vmatmul.bf16.gmra.mxu0 %v131
    %v3830 = vpop.f32.mrf.mxu0
    %v3831 = vadd.f32 %v3818, %v3830
    %v3832 = vpop.f32.mrf.mxu0
    %3833 = vdwg.mxu0
    %3834 = vmatpush.bf16.msra.mxu0 %v2747
    %3835 = vmatpush.bf16.msra.mxu0 %v2745
    %3836 = vmatpush.bf16.msra.mxu0 %v2743
    %3837 = vmatpush.bf16.msra.mxu0 %v2741
    %3838 = vmatpush.bf16.msra.mxu0 %v2739
    %3839 = vmatpush.bf16.msra.mxu0 %v2737
    %3840 = vmatpush.bf16.msra.mxu0 %v2735
    %3841 = vmatpush.bf16.msra.mxu0 %v2733
    %3842 = vmatmul.bf16.gmra.mxu0 %v132
    %v3843 = vpop.f32.mrf.mxu0
    %v3844 = vadd.f32 %v3831, %v3843
    %v3845 = vpop.f32.mrf.mxu0
    %3846 = vdwg.mxu0
    %3847 = vmatpush.bf16.msra.mxu0 %v2763
    %3848 = vmatpush.bf16.msra.mxu0 %v2761
    %3849 = vmatpush.bf16.msra.mxu0 %v2759
    %3850 = vmatpush.bf16.msra.mxu0 %v2757
    %3851 = vmatpush.bf16.msra.mxu0 %v2755
    %3852 = vmatpush.bf16.msra.mxu0 %v2753
    %3853 = vmatpush.bf16.msra.mxu0 %v2751
    %3854 = vmatpush.bf16.msra.mxu0 %v2749
    %3855 = vmatmul.bf16.gmra.mxu0 %v133
    %v3856 = vpop.f32.mrf.mxu0
    %v3857 = vadd.f32 %v3844, %v3856
    %v3858 = vpop.f32.mrf.mxu0
    %3859 = vdwg.mxu0
    %3860 = vmatpush.bf16.msra.mxu0 %v2779
    %3861 = vmatpush.bf16.msra.mxu0 %v2777
    %3862 = vmatpush.bf16.msra.mxu0 %v2775
    %3863 = vmatpush.bf16.msra.mxu0 %v2773
    %3864 = vmatpush.bf16.msra.mxu0 %v2771
    %3865 = vmatpush.bf16.msra.mxu0 %v2769
    %3866 = vmatpush.bf16.msra.mxu0 %v2767
    %3867 = vmatpush.bf16.msra.mxu0 %v2765
    %3868 = vmatmul.bf16.gmra.mxu0 %v134
    %v3869 = vpop.f32.mrf.mxu0
    %v3870 = vadd.f32 %v3857, %v3869
    %v3871 = vpop.f32.mrf.mxu0
    %3872 = vdwg.mxu0
    %3873 = vmatpush.bf16.msra.mxu0 %v2795
    %3874 = vmatpush.bf16.msra.mxu0 %v2793
    %3875 = vmatpush.bf16.msra.mxu0 %v2791
    %3876 = vmatpush.bf16.msra.mxu0 %v2789
    %3877 = vmatpush.bf16.msra.mxu0 %v2787
    %3878 = vmatpush.bf16.msra.mxu0 %v2785
    %3879 = vmatpush.bf16.msra.mxu0 %v2783
    %3880 = vmatpush.bf16.msra.mxu0 %v2781
    %3881 = vmatmul.bf16.gmra.mxu0 %v135
    %v3882 = vpop.f32.mrf.mxu0
    %v3883 = vadd.f32 %v3870, %v3882
    %v3884 = vpop.f32.mrf.mxu0
    %3885 = vdwg.mxu0
    %3886 = vmatpush.bf16.msra.mxu0 %v2811
    %3887 = vmatpush.bf16.msra.mxu0 %v2809
    %3888 = vmatpush.bf16.msra.mxu0 %v2807
    %3889 = vmatpush.bf16.msra.mxu0 %v2805
    %3890 = vmatpush.bf16.msra.mxu0 %v2803
    %3891 = vmatpush.bf16.msra.mxu0 %v2801
    %3892 = vmatpush.bf16.msra.mxu0 %v2799
    %3893 = vmatpush.bf16.msra.mxu0 %v2797
    %3894 = vmatmul.bf16.gmra.mxu0 %v136
    %v3895 = vpop.f32.mrf.mxu0
    %v3896 = vadd.f32 %v3883, %v3895
    %v3897 = vpop.f32.mrf.mxu0
    %3898 = vdwg.mxu0
    %3899 = vmatpush.bf16.msra.mxu0 %v2827
    %3900 = vmatpush.bf16.msra.mxu0 %v2825
    %3901 = vmatpush.bf16.msra.mxu0 %v2823
    %3902 = vmatpush.bf16.msra.mxu0 %v2821
    %3903 = vmatpush.bf16.msra.mxu0 %v2819
    %3904 = vmatpush.bf16.msra.mxu0 %v2817
    %3905 = vmatpush.bf16.msra.mxu0 %v2815
    %3906 = vmatpush.bf16.msra.mxu0 %v2813
    %3907 = vmatmul.bf16.gmra.mxu0 %v137
    %v3908 = vpop.f32.mrf.mxu0
    %v3909 = vadd.f32 %v3896, %v3908
    %v3910 = vpop.f32.mrf.mxu0
    %3911 = vdwg.mxu0
    %3912 = vmatpush.bf16.msra.mxu0 %v2843
    %3913 = vmatpush.bf16.msra.mxu0 %v2841
    %3914 = vmatpush.bf16.msra.mxu0 %v2839
    %3915 = vmatpush.bf16.msra.mxu0 %v2837
    %3916 = vmatpush.bf16.msra.mxu0 %v2835
    %3917 = vmatpush.bf16.msra.mxu0 %v2833
    %3918 = vmatpush.bf16.msra.mxu0 %v2831
    %3919 = vmatpush.bf16.msra.mxu0 %v2829
    %3920 = vmatmul.bf16.gmra.mxu0 %v138
    %v3921 = vpop.f32.mrf.mxu0
    %v3922 = vadd.f32 %v3909, %v3921
    %v3923 = vpop.f32.mrf.mxu0
    %3924 = vdwg.mxu0
    %3925 = vmatpush.bf16.msra.mxu0 %v2859
    %3926 = vmatpush.bf16.msra.mxu0 %v2857
    %3927 = vmatpush.bf16.msra.mxu0 %v2855
    %3928 = vmatpush.bf16.msra.mxu0 %v2853
    %3929 = vmatpush.bf16.msra.mxu0 %v2851
    %3930 = vmatpush.bf16.msra.mxu0 %v2849
    %3931 = vmatpush.bf16.msra.mxu0 %v2847
    %3932 = vmatpush.bf16.msra.mxu0 %v2845
    %3933 = vmatmul.bf16.gmra.mxu0 %v139
    %v3934 = vpop.f32.mrf.mxu0
    %v3935 = vadd.f32 %v3922, %v3934
    %v3936 = vpop.f32.mrf.mxu0
    %3937 = vdwg.mxu0
    %3938 = vmatpush.bf16.msra.mxu0 %v2875
    %3939 = vmatpush.bf16.msra.mxu0 %v2873
    %3940 = vmatpush.bf16.msra.mxu0 %v2871
    %3941 = vmatpush.bf16.msra.mxu0 %v2869
    %3942 = vmatpush.bf16.msra.mxu0 %v2867
    %3943 = vmatpush.bf16.msra.mxu0 %v2865
    %3944 = vmatpush.bf16.msra.mxu0 %v2863
    %3945 = vmatpush.bf16.msra.mxu0 %v2861
    %3946 = vmatmul.bf16.gmra.mxu0 %v140
    %v3947 = vpop.f32.mrf.mxu0
    %v3948 = vadd.f32 %v3935, %v3947
    %v3949 = vpop.f32.mrf.mxu0
    %3950 = vdwg.mxu0
    %3951 = vmatpush.bf16.msra.mxu0 %v2891
    %3952 = vmatpush.bf16.msra.mxu0 %v2889
    %3953 = vmatpush.bf16.msra.mxu0 %v2887
    %3954 = vmatpush.bf16.msra.mxu0 %v2885
    %3955 = vmatpush.bf16.msra.mxu0 %v2883
    %3956 = vmatpush.bf16.msra.mxu0 %v2881
    %3957 = vmatpush.bf16.msra.mxu0 %v2879
    %3958 = vmatpush.bf16.msra.mxu0 %v2877
    %3959 = vmatmul.bf16.gmra.mxu0 %v141
    %v3960 = vpop.f32.mrf.mxu0
    %v3961 = vadd.f32 %v3948, %v3960
    %v3962 = vpop.f32.mrf.mxu0
    %3963 = vdwg.mxu0
    %3964 = vmatpush.bf16.msra.mxu0 %v2907
    %3965 = vmatpush.bf16.msra.mxu0 %v2905
    %3966 = vmatpush.bf16.msra.mxu0 %v2903
    %3967 = vmatpush.bf16.msra.mxu0 %v2901
    %3968 = vmatpush.bf16.msra.mxu0 %v2899
    %3969 = vmatpush.bf16.msra.mxu0 %v2897
    %3970 = vmatpush.bf16.msra.mxu0 %v2895
    %3971 = vmatpush.bf16.msra.mxu0 %v2893
    %3972 = vmatmul.bf16.gmra.mxu0 %v142
    %v3973 = vpop.f32.mrf.mxu0
    %v3974 = vadd.f32 %v3961, %v3973
    %v3975 = vpop.f32.mrf.mxu0
    %3976 = vdwg.mxu0
    %3977 = vmatpush.bf16.msra.mxu0 %v2923
    %3978 = vmatpush.bf16.msra.mxu0 %v2921
    %3979 = vmatpush.bf16.msra.mxu0 %v2919
    %3980 = vmatpush.bf16.msra.mxu0 %v2917
    %3981 = vmatpush.bf16.msra.mxu0 %v2915
    %3982 = vmatpush.bf16.msra.mxu0 %v2913
    %3983 = vmatpush.bf16.msra.mxu0 %v2911
    %3984 = vmatpush.bf16.msra.mxu0 %v2909
    %3985 = vmatmul.bf16.gmra.mxu0 %v143
    %v3986 = vpop.f32.mrf.mxu0
    %v3987 = vadd.f32 %v3974, %v3986
    %v3988 = vpop.f32.mrf.mxu0
    %3989 = vdwg.mxu0
    %3990 = vmatpush.bf16.msra.mxu0 %v2939
    %3991 = vmatpush.bf16.msra.mxu0 %v2937
    %3992 = vmatpush.bf16.msra.mxu0 %v2935
    %3993 = vmatpush.bf16.msra.mxu0 %v2933
    %3994 = vmatpush.bf16.msra.mxu0 %v2931
    %3995 = vmatpush.bf16.msra.mxu0 %v2929
    %3996 = vmatpush.bf16.msra.mxu0 %v2927
    %3997 = vmatpush.bf16.msra.mxu0 %v2925
    %3998 = vmatmul.bf16.gmra.mxu0 %v144
    %v3999 = vpop.f32.mrf.mxu0
    %v4000 = vadd.f32 %v3987, %v3999
    %v4001 = vpop.f32.mrf.mxu0
    %4002 = vdwg.mxu0
    %4003 = vmatpush.bf16.msra.mxu0 %v2955
    %4004 = vmatpush.bf16.msra.mxu0 %v2953
    %4005 = vmatpush.bf16.msra.mxu0 %v2951
    %4006 = vmatpush.bf16.msra.mxu0 %v2949
    %4007 = vmatpush.bf16.msra.mxu0 %v2947
    %4008 = vmatpush.bf16.msra.mxu0 %v2945
    %4009 = vmatpush.bf16.msra.mxu0 %v2943
    %4010 = vmatpush.bf16.msra.mxu0 %v2941
    %4011 = vmatmul.bf16.gmra.mxu0 %v145
    %v4012 = vpop.f32.mrf.mxu0
    %v4013 = vadd.f32 %v4000, %v4012
    %v4014 = vpop.f32.mrf.mxu0
    %4015 = vdwg.mxu0
    %4016 = vmatpush.bf16.msra.mxu0 %v2971
    %4017 = vmatpush.bf16.msra.mxu0 %v2969
    %4018 = vmatpush.bf16.msra.mxu0 %v2967
    %4019 = vmatpush.bf16.msra.mxu0 %v2965
    %4020 = vmatpush.bf16.msra.mxu0 %v2963
    %4021 = vmatpush.bf16.msra.mxu0 %v2961
    %4022 = vmatpush.bf16.msra.mxu0 %v2959
    %4023 = vmatpush.bf16.msra.mxu0 %v2957
    %4024 = vmatmul.bf16.gmra.mxu0 %v146
    %v4025 = vpop.f32.mrf.mxu0
    %v4026 = vadd.f32 %v4013, %v4025
    %v4027 = vpop.f32.mrf.mxu0
    %4028 = vdwg.mxu0
    %4029 = vmatpush.bf16.msra.mxu0 %v2987
    %4030 = vmatpush.bf16.msra.mxu0 %v2985
    %4031 = vmatpush.bf16.msra.mxu0 %v2983
    %4032 = vmatpush.bf16.msra.mxu0 %v2981
    %4033 = vmatpush.bf16.msra.mxu0 %v2979
    %4034 = vmatpush.bf16.msra.mxu0 %v2977
    %4035 = vmatpush.bf16.msra.mxu0 %v2975
    %4036 = vmatpush.bf16.msra.mxu0 %v2973
    %4037 = vmatmul.bf16.gmra.mxu0 %v147
    %v4038 = vpop.f32.mrf.mxu0
    %v4039 = vadd.f32 %v4026, %v4038
    %v4040 = vpop.f32.mrf.mxu0
    %4041 = vdwg.mxu0
    %4042 = vmatpush.bf16.msra.mxu0 %v3003
    %4043 = vmatpush.bf16.msra.mxu0 %v3001
    %4044 = vmatpush.bf16.msra.mxu0 %v2999
    %4045 = vmatpush.bf16.msra.mxu0 %v2997
    %4046 = vmatpush.bf16.msra.mxu0 %v2995
    %4047 = vmatpush.bf16.msra.mxu0 %v2993
    %4048 = vmatpush.bf16.msra.mxu0 %v2991
    %4049 = vmatpush.bf16.msra.mxu0 %v2989
    %4050 = vmatmul.bf16.gmra.mxu0 %v148
    %v4051 = vpop.f32.mrf.mxu0
    %v4052 = vadd.f32 %v4039, %v4051
    %v4053 = vpop.f32.mrf.mxu0
    %4054 = vdwg.mxu0
    %4055 = vmatpush.bf16.msra.mxu0 %v3019
    %4056 = vmatpush.bf16.msra.mxu0 %v3017
    %4057 = vmatpush.bf16.msra.mxu0 %v3015
    %4058 = vmatpush.bf16.msra.mxu0 %v3013
    %4059 = vmatpush.bf16.msra.mxu0 %v3011
    %4060 = vmatpush.bf16.msra.mxu0 %v3009
    %4061 = vmatpush.bf16.msra.mxu0 %v3007
    %4062 = vmatpush.bf16.msra.mxu0 %v3005
    %4063 = vmatmul.bf16.gmra.mxu0 %v149
    %v4064 = vpop.f32.mrf.mxu0
    %v4065 = vadd.f32 %v4052, %v4064
    %v4066 = vpop.f32.mrf.mxu0
    %4067 = vdwg.mxu0
    %4068 = vmatpush.bf16.msra.mxu0 %v3035
    %4069 = vmatpush.bf16.msra.mxu0 %v3033
    %4070 = vmatpush.bf16.msra.mxu0 %v3031
    %4071 = vmatpush.bf16.msra.mxu0 %v3029
    %4072 = vmatpush.bf16.msra.mxu0 %v3027
    %4073 = vmatpush.bf16.msra.mxu0 %v3025
    %4074 = vmatpush.bf16.msra.mxu0 %v3023
    %4075 = vmatpush.bf16.msra.mxu0 %v3021
    %4076 = vmatmul.bf16.gmra.mxu0 %v150
    %v4077 = vpop.f32.mrf.mxu0
    %v4078 = vadd.f32 %v4065, %v4077
    %v4079 = vpop.f32.mrf.mxu0
    %4080 = vdwg.mxu0
    %4081 = vmatpush.bf16.msra.mxu0 %v2476
    %4082 = vmatpush.bf16.msra.mxu0 %v2474
    %4083 = vmatpush.bf16.msra.mxu0 %v2472
    %4084 = vmatpush.bf16.msra.mxu0 %v2470
    %4085 = vmatpush.bf16.msra.mxu0 %v2468
    %4086 = vmatpush.bf16.msra.mxu0 %v2466
    %4087 = vmatpush.bf16.msra.mxu0 %v2464
    %4088 = vmatpush.bf16.msra.mxu0 %v2462
    %4089 = vmatmul.bf16.gmra.mxu0 %v115
    %v4090 = vpop.f32.mrf.mxu0
    %v4091 = vadd.f32 %v730, %v4090
    %v4092 = vpop.f32.mrf.mxu0
    %4093 = vdwg.mxu0
    %4094 = vmatpush.bf16.msra.mxu0 %v2492
    %4095 = vmatpush.bf16.msra.mxu0 %v2490
    %4096 = vmatpush.bf16.msra.mxu0 %v2488
    %4097 = vmatpush.bf16.msra.mxu0 %v2486
    %4098 = vmatpush.bf16.msra.mxu0 %v2484
    %4099 = vmatpush.bf16.msra.mxu0 %v2482
    %4100 = vmatpush.bf16.msra.mxu0 %v2480
    %4101 = vmatpush.bf16.msra.mxu0 %v2478
    %4102 = vmatmul.bf16.gmra.mxu0 %v116
    %v4103 = vpop.f32.mrf.mxu0
    %v4104 = vadd.f32 %v4091, %v4103
    %v4105 = vpop.f32.mrf.mxu0
    %4106 = vdwg.mxu0
    %4107 = vmatpush.bf16.msra.mxu0 %v2508
    %4108 = vmatpush.bf16.msra.mxu0 %v2506
    %4109 = vmatpush.bf16.msra.mxu0 %v2504
    %4110 = vmatpush.bf16.msra.mxu0 %v2502
    %4111 = vmatpush.bf16.msra.mxu0 %v2500
    %4112 = vmatpush.bf16.msra.mxu0 %v2498
    %4113 = vmatpush.bf16.msra.mxu0 %v2496
    %4114 = vmatpush.bf16.msra.mxu0 %v2494
    %4115 = vmatmul.bf16.gmra.mxu0 %v117
    %v4116 = vpop.f32.mrf.mxu0
    %v4117 = vadd.f32 %v4104, %v4116
    %v4118 = vpop.f32.mrf.mxu0
    %4119 = vdwg.mxu0
    %4120 = vmatpush.bf16.msra.mxu0 %v2524
    %4121 = vmatpush.bf16.msra.mxu0 %v2522
    %4122 = vmatpush.bf16.msra.mxu0 %v2520
    %4123 = vmatpush.bf16.msra.mxu0 %v2518
    %4124 = vmatpush.bf16.msra.mxu0 %v2516
    %4125 = vmatpush.bf16.msra.mxu0 %v2514
    %4126 = vmatpush.bf16.msra.mxu0 %v2512
    %4127 = vmatpush.bf16.msra.mxu0 %v2510
    %4128 = vmatmul.bf16.gmra.mxu0 %v118
    %v4129 = vpop.f32.mrf.mxu0
    %v4130 = vadd.f32 %v4117, %v4129
    %v4131 = vpop.f32.mrf.mxu0
    %4132 = vdwg.mxu0
    %4133 = vmatpush.bf16.msra.mxu0 %v2540
    %4134 = vmatpush.bf16.msra.mxu0 %v2538
    %4135 = vmatpush.bf16.msra.mxu0 %v2536
    %4136 = vmatpush.bf16.msra.mxu0 %v2534
    %4137 = vmatpush.bf16.msra.mxu0 %v2532
    %4138 = vmatpush.bf16.msra.mxu0 %v2530
    %4139 = vmatpush.bf16.msra.mxu0 %v2528
    %4140 = vmatpush.bf16.msra.mxu0 %v2526
    %4141 = vmatmul.bf16.gmra.mxu0 %v119
    %v4142 = vpop.f32.mrf.mxu0
    %v4143 = vadd.f32 %v4130, %v4142
    %v4144 = vpop.f32.mrf.mxu0
    %4145 = vdwg.mxu0
    %4146 = vmatpush.bf16.msra.mxu0 %v2556
    %4147 = vmatpush.bf16.msra.mxu0 %v2554
    %4148 = vmatpush.bf16.msra.mxu0 %v2552
    %4149 = vmatpush.bf16.msra.mxu0 %v2550
    %4150 = vmatpush.bf16.msra.mxu0 %v2548
    %4151 = vmatpush.bf16.msra.mxu0 %v2546
    %4152 = vmatpush.bf16.msra.mxu0 %v2544
    %4153 = vmatpush.bf16.msra.mxu0 %v2542
    %4154 = vmatmul.bf16.gmra.mxu0 %v120
    %v4155 = vpop.f32.mrf.mxu0
    %v4156 = vadd.f32 %v4143, %v4155
    %v4157 = vpop.f32.mrf.mxu0
    %4158 = vdwg.mxu0
    %4159 = vmatpush.bf16.msra.mxu0 %v2572
    %4160 = vmatpush.bf16.msra.mxu0 %v2570
    %4161 = vmatpush.bf16.msra.mxu0 %v2568
    %4162 = vmatpush.bf16.msra.mxu0 %v2566
    %4163 = vmatpush.bf16.msra.mxu0 %v2564
    %4164 = vmatpush.bf16.msra.mxu0 %v2562
    %4165 = vmatpush.bf16.msra.mxu0 %v2560
    %4166 = vmatpush.bf16.msra.mxu0 %v2558
    %4167 = vmatmul.bf16.gmra.mxu0 %v121
    %v4168 = vpop.f32.mrf.mxu0
    %v4169 = vadd.f32 %v4156, %v4168
    %v4170 = vpop.f32.mrf.mxu0
    %4171 = vdwg.mxu0
    %4172 = vmatpush.bf16.msra.mxu0 %v2588
    %4173 = vmatpush.bf16.msra.mxu0 %v2586
    %4174 = vmatpush.bf16.msra.mxu0 %v2584
    %4175 = vmatpush.bf16.msra.mxu0 %v2582
    %4176 = vmatpush.bf16.msra.mxu0 %v2580
    %4177 = vmatpush.bf16.msra.mxu0 %v2578
    %4178 = vmatpush.bf16.msra.mxu0 %v2576
    %4179 = vmatpush.bf16.msra.mxu0 %v2574
    %4180 = vmatmul.bf16.gmra.mxu0 %v122
    %v4181 = vpop.f32.mrf.mxu0
    %v4182 = vadd.f32 %v4169, %v4181
    %v4183 = vpop.f32.mrf.mxu0
    %4184 = vdwg.mxu0
    %4185 = vmatpush.bf16.msra.mxu0 %v2604
    %4186 = vmatpush.bf16.msra.mxu0 %v2602
    %4187 = vmatpush.bf16.msra.mxu0 %v2600
    %4188 = vmatpush.bf16.msra.mxu0 %v2598
    %4189 = vmatpush.bf16.msra.mxu0 %v2596
    %4190 = vmatpush.bf16.msra.mxu0 %v2594
    %4191 = vmatpush.bf16.msra.mxu0 %v2592
    %4192 = vmatpush.bf16.msra.mxu0 %v2590
    %4193 = vmatmul.bf16.gmra.mxu0 %v123
    %v4194 = vpop.f32.mrf.mxu0
    %v4195 = vadd.f32 %v4182, %v4194
    %v4196 = vpop.f32.mrf.mxu0
    %4197 = vdwg.mxu0
    %4198 = vmatpush.bf16.msra.mxu0 %v2620
    %4199 = vmatpush.bf16.msra.mxu0 %v2618
    %4200 = vmatpush.bf16.msra.mxu0 %v2616
    %4201 = vmatpush.bf16.msra.mxu0 %v2614
    %4202 = vmatpush.bf16.msra.mxu0 %v2612
    %4203 = vmatpush.bf16.msra.mxu0 %v2610
    %4204 = vmatpush.bf16.msra.mxu0 %v2608
    %4205 = vmatpush.bf16.msra.mxu0 %v2606
    %4206 = vmatmul.bf16.gmra.mxu0 %v124
    %v4207 = vpop.f32.mrf.mxu0
    %v4208 = vadd.f32 %v4195, %v4207
    %v4209 = vpop.f32.mrf.mxu0
    %4210 = vdwg.mxu0
    %4211 = vmatpush.bf16.msra.mxu0 %v2636
    %4212 = vmatpush.bf16.msra.mxu0 %v2634
    %4213 = vmatpush.bf16.msra.mxu0 %v2632
    %4214 = vmatpush.bf16.msra.mxu0 %v2630
    %4215 = vmatpush.bf16.msra.mxu0 %v2628
    %4216 = vmatpush.bf16.msra.mxu0 %v2626
    %4217 = vmatpush.bf16.msra.mxu0 %v2624
    %4218 = vmatpush.bf16.msra.mxu0 %v2622
    %4219 = vmatmul.bf16.gmra.mxu0 %v125
    %v4220 = vpop.f32.mrf.mxu0
    %v4221 = vadd.f32 %v4208, %v4220
    %v4222 = vpop.f32.mrf.mxu0
    %4223 = vdwg.mxu0
    %4224 = vmatpush.bf16.msra.mxu0 %v2652
    %4225 = vmatpush.bf16.msra.mxu0 %v2650
    %4226 = vmatpush.bf16.msra.mxu0 %v2648
    %4227 = vmatpush.bf16.msra.mxu0 %v2646
    %4228 = vmatpush.bf16.msra.mxu0 %v2644
    %4229 = vmatpush.bf16.msra.mxu0 %v2642
    %4230 = vmatpush.bf16.msra.mxu0 %v2640
    %4231 = vmatpush.bf16.msra.mxu0 %v2638
    %4232 = vmatmul.bf16.gmra.mxu0 %v126
    %v4233 = vpop.f32.mrf.mxu0
    %v4234 = vadd.f32 %v4221, %v4233
    %v4235 = vpop.f32.mrf.mxu0
    %4236 = vdwg.mxu0
    %4237 = vmatpush.bf16.msra.mxu0 %v2668
    %4238 = vmatpush.bf16.msra.mxu0 %v2666
    %4239 = vmatpush.bf16.msra.mxu0 %v2664
    %4240 = vmatpush.bf16.msra.mxu0 %v2662
    %4241 = vmatpush.bf16.msra.mxu0 %v2660
    %4242 = vmatpush.bf16.msra.mxu0 %v2658
    %4243 = vmatpush.bf16.msra.mxu0 %v2656
    %4244 = vmatpush.bf16.msra.mxu0 %v2654
    %4245 = vmatmul.bf16.gmra.mxu0 %v127
    %v4246 = vpop.f32.mrf.mxu0
    %v4247 = vadd.f32 %v4234, %v4246
    %v4248 = vpop.f32.mrf.mxu0
    %4249 = vdwg.mxu0
    %4250 = vmatpush.bf16.msra.mxu0 %v2684
    %4251 = vmatpush.bf16.msra.mxu0 %v2682
    %4252 = vmatpush.bf16.msra.mxu0 %v2680
    %4253 = vmatpush.bf16.msra.mxu0 %v2678
    %4254 = vmatpush.bf16.msra.mxu0 %v2676
    %4255 = vmatpush.bf16.msra.mxu0 %v2674
    %4256 = vmatpush.bf16.msra.mxu0 %v2672
    %4257 = vmatpush.bf16.msra.mxu0 %v2670
    %4258 = vmatmul.bf16.gmra.mxu0 %v128
    %v4259 = vpop.f32.mrf.mxu0
    %v4260 = vadd.f32 %v4247, %v4259
    %v4261 = vpop.f32.mrf.mxu0
    %4262 = vdwg.mxu0
    %4263 = vmatpush.bf16.msra.mxu0 %v2700
    %4264 = vmatpush.bf16.msra.mxu0 %v2698
    %4265 = vmatpush.bf16.msra.mxu0 %v2696
    %4266 = vmatpush.bf16.msra.mxu0 %v2694
    %4267 = vmatpush.bf16.msra.mxu0 %v2692
    %4268 = vmatpush.bf16.msra.mxu0 %v2690
    %4269 = vmatpush.bf16.msra.mxu0 %v2688
    %4270 = vmatpush.bf16.msra.mxu0 %v2686
    %4271 = vmatmul.bf16.gmra.mxu0 %v129
    %v4272 = vpop.f32.mrf.mxu0
    %v4273 = vadd.f32 %v4260, %v4272
    %v4274 = vpop.f32.mrf.mxu0
    %4275 = vdwg.mxu0
    %4276 = vmatpush.bf16.msra.mxu0 %v2716
    %4277 = vmatpush.bf16.msra.mxu0 %v2714
    %4278 = vmatpush.bf16.msra.mxu0 %v2712
    %4279 = vmatpush.bf16.msra.mxu0 %v2710
    %4280 = vmatpush.bf16.msra.mxu0 %v2708
    %4281 = vmatpush.bf16.msra.mxu0 %v2706
    %4282 = vmatpush.bf16.msra.mxu0 %v2704
    %4283 = vmatpush.bf16.msra.mxu0 %v2702
    %4284 = vmatmul.bf16.gmra.mxu0 %v130
    %v4285 = vpop.f32.mrf.mxu0
    %v4286 = vadd.f32 %v4273, %v4285
    %v4287 = vpop.f32.mrf.mxu0
    %4288 = vdwg.mxu0
    %4289 = vmatpush.bf16.msra.mxu0 %v2732
    %4290 = vmatpush.bf16.msra.mxu0 %v2730
    %4291 = vmatpush.bf16.msra.mxu0 %v2728
    %4292 = vmatpush.bf16.msra.mxu0 %v2726
    %4293 = vmatpush.bf16.msra.mxu0 %v2724
    %4294 = vmatpush.bf16.msra.mxu0 %v2722
    %4295 = vmatpush.bf16.msra.mxu0 %v2720
    %4296 = vmatpush.bf16.msra.mxu0 %v2718
    %4297 = vmatmul.bf16.gmra.mxu0 %v131
    %v4298 = vpop.f32.mrf.mxu0
    %v4299 = vadd.f32 %v4286, %v4298
    %v4300 = vpop.f32.mrf.mxu0
    %4301 = vdwg.mxu0
    %4302 = vmatpush.bf16.msra.mxu0 %v2748
    %4303 = vmatpush.bf16.msra.mxu0 %v2746
    %4304 = vmatpush.bf16.msra.mxu0 %v2744
    %4305 = vmatpush.bf16.msra.mxu0 %v2742
    %4306 = vmatpush.bf16.msra.mxu0 %v2740
    %4307 = vmatpush.bf16.msra.mxu0 %v2738
    %4308 = vmatpush.bf16.msra.mxu0 %v2736
    %4309 = vmatpush.bf16.msra.mxu0 %v2734
    %4310 = vmatmul.bf16.gmra.mxu0 %v132
    %v4311 = vpop.f32.mrf.mxu0
    %v4312 = vadd.f32 %v4299, %v4311
    %v4313 = vpop.f32.mrf.mxu0
    %4314 = vdwg.mxu0
    %4315 = vmatpush.bf16.msra.mxu0 %v2764
    %4316 = vmatpush.bf16.msra.mxu0 %v2762
    %4317 = vmatpush.bf16.msra.mxu0 %v2760
    %4318 = vmatpush.bf16.msra.mxu0 %v2758
    %4319 = vmatpush.bf16.msra.mxu0 %v2756
    %4320 = vmatpush.bf16.msra.mxu0 %v2754
    %4321 = vmatpush.bf16.msra.mxu0 %v2752
    %4322 = vmatpush.bf16.msra.mxu0 %v2750
    %4323 = vmatmul.bf16.gmra.mxu0 %v133
    %v4324 = vpop.f32.mrf.mxu0
    %v4325 = vadd.f32 %v4312, %v4324
    %v4326 = vpop.f32.mrf.mxu0
    %4327 = vdwg.mxu0
    %4328 = vmatpush.bf16.msra.mxu0 %v2780
    %4329 = vmatpush.bf16.msra.mxu0 %v2778
    %4330 = vmatpush.bf16.msra.mxu0 %v2776
    %4331 = vmatpush.bf16.msra.mxu0 %v2774
    %4332 = vmatpush.bf16.msra.mxu0 %v2772
    %4333 = vmatpush.bf16.msra.mxu0 %v2770
    %4334 = vmatpush.bf16.msra.mxu0 %v2768
    %4335 = vmatpush.bf16.msra.mxu0 %v2766
    %4336 = vmatmul.bf16.gmra.mxu0 %v134
    %v4337 = vpop.f32.mrf.mxu0
    %v4338 = vadd.f32 %v4325, %v4337
    %v4339 = vpop.f32.mrf.mxu0
    %4340 = vdwg.mxu0
    %4341 = vmatpush.bf16.msra.mxu0 %v2796
    %4342 = vmatpush.bf16.msra.mxu0 %v2794
    %4343 = vmatpush.bf16.msra.mxu0 %v2792
    %4344 = vmatpush.bf16.msra.mxu0 %v2790
    %4345 = vmatpush.bf16.msra.mxu0 %v2788
    %4346 = vmatpush.bf16.msra.mxu0 %v2786
    %4347 = vmatpush.bf16.msra.mxu0 %v2784
    %4348 = vmatpush.bf16.msra.mxu0 %v2782
    %4349 = vmatmul.bf16.gmra.mxu0 %v135
    %v4350 = vpop.f32.mrf.mxu0
    %v4351 = vadd.f32 %v4338, %v4350
    %v4352 = vpop.f32.mrf.mxu0
    %4353 = vdwg.mxu0
    %4354 = vmatpush.bf16.msra.mxu0 %v2812
    %4355 = vmatpush.bf16.msra.mxu0 %v2810
    %4356 = vmatpush.bf16.msra.mxu0 %v2808
    %4357 = vmatpush.bf16.msra.mxu0 %v2806
    %4358 = vmatpush.bf16.msra.mxu0 %v2804
    %4359 = vmatpush.bf16.msra.mxu0 %v2802
    %4360 = vmatpush.bf16.msra.mxu0 %v2800
    %4361 = vmatpush.bf16.msra.mxu0 %v2798
    %4362 = vmatmul.bf16.gmra.mxu0 %v136
    %v4363 = vpop.f32.mrf.mxu0
    %v4364 = vadd.f32 %v4351, %v4363
    %v4365 = vpop.f32.mrf.mxu0
    %4366 = vdwg.mxu0
    %4367 = vmatpush.bf16.msra.mxu0 %v2828
    %4368 = vmatpush.bf16.msra.mxu0 %v2826
    %4369 = vmatpush.bf16.msra.mxu0 %v2824
    %4370 = vmatpush.bf16.msra.mxu0 %v2822
    %4371 = vmatpush.bf16.msra.mxu0 %v2820
    %4372 = vmatpush.bf16.msra.mxu0 %v2818
    %4373 = vmatpush.bf16.msra.mxu0 %v2816
    %4374 = vmatpush.bf16.msra.mxu0 %v2814
    %4375 = vmatmul.bf16.gmra.mxu0 %v137
    %v4376 = vpop.f32.mrf.mxu0
    %v4377 = vadd.f32 %v4364, %v4376
    %v4378 = vpop.f32.mrf.mxu0
    %4379 = vdwg.mxu0
    %4380 = vmatpush.bf16.msra.mxu0 %v2844
    %4381 = vmatpush.bf16.msra.mxu0 %v2842
    %4382 = vmatpush.bf16.msra.mxu0 %v2840
    %4383 = vmatpush.bf16.msra.mxu0 %v2838
    %4384 = vmatpush.bf16.msra.mxu0 %v2836
    %4385 = vmatpush.bf16.msra.mxu0 %v2834
    %4386 = vmatpush.bf16.msra.mxu0 %v2832
    %4387 = vmatpush.bf16.msra.mxu0 %v2830
    %4388 = vmatmul.bf16.gmra.mxu0 %v138
    %v4389 = vpop.f32.mrf.mxu0
    %v4390 = vadd.f32 %v4377, %v4389
    %v4391 = vpop.f32.mrf.mxu0
    %4392 = vdwg.mxu0
    %4393 = vmatpush.bf16.msra.mxu0 %v2860
    %4394 = vmatpush.bf16.msra.mxu0 %v2858
    %4395 = vmatpush.bf16.msra.mxu0 %v2856
    %4396 = vmatpush.bf16.msra.mxu0 %v2854
    %4397 = vmatpush.bf16.msra.mxu0 %v2852
    %4398 = vmatpush.bf16.msra.mxu0 %v2850
    %4399 = vmatpush.bf16.msra.mxu0 %v2848
    %4400 = vmatpush.bf16.msra.mxu0 %v2846
    %4401 = vmatmul.bf16.gmra.mxu0 %v139
    %v4402 = vpop.f32.mrf.mxu0
    %v4403 = vadd.f32 %v4390, %v4402
    %v4404 = vpop.f32.mrf.mxu0
    %4405 = vdwg.mxu0
    %4406 = vmatpush.bf16.msra.mxu0 %v2876
    %4407 = vmatpush.bf16.msra.mxu0 %v2874
    %4408 = vmatpush.bf16.msra.mxu0 %v2872
    %4409 = vmatpush.bf16.msra.mxu0 %v2870
    %4410 = vmatpush.bf16.msra.mxu0 %v2868
    %4411 = vmatpush.bf16.msra.mxu0 %v2866
    %4412 = vmatpush.bf16.msra.mxu0 %v2864
    %4413 = vmatpush.bf16.msra.mxu0 %v2862
    %4414 = vmatmul.bf16.gmra.mxu0 %v140
    %v4415 = vpop.f32.mrf.mxu0
    %v4416 = vadd.f32 %v4403, %v4415
    %v4417 = vpop.f32.mrf.mxu0
    %4418 = vdwg.mxu0
    %4419 = vmatpush.bf16.msra.mxu0 %v2892
    %4420 = vmatpush.bf16.msra.mxu0 %v2890
    %4421 = vmatpush.bf16.msra.mxu0 %v2888
    %4422 = vmatpush.bf16.msra.mxu0 %v2886
    %4423 = vmatpush.bf16.msra.mxu0 %v2884
    %4424 = vmatpush.bf16.msra.mxu0 %v2882
    %4425 = vmatpush.bf16.msra.mxu0 %v2880
    %4426 = vmatpush.bf16.msra.mxu0 %v2878
    %4427 = vmatmul.bf16.gmra.mxu0 %v141
    %v4428 = vpop.f32.mrf.mxu0
    %v4429 = vadd.f32 %v4416, %v4428
    %v4430 = vpop.f32.mrf.mxu0
    %4431 = vdwg.mxu0
    %4432 = vmatpush.bf16.msra.mxu0 %v2908
    %4433 = vmatpush.bf16.msra.mxu0 %v2906
    %4434 = vmatpush.bf16.msra.mxu0 %v2904
    %4435 = vmatpush.bf16.msra.mxu0 %v2902
    %4436 = vmatpush.bf16.msra.mxu0 %v2900
    %4437 = vmatpush.bf16.msra.mxu0 %v2898
    %4438 = vmatpush.bf16.msra.mxu0 %v2896
    %4439 = vmatpush.bf16.msra.mxu0 %v2894
    %4440 = vmatmul.bf16.gmra.mxu0 %v142
    %v4441 = vpop.f32.mrf.mxu0
    %v4442 = vadd.f32 %v4429, %v4441
    %v4443 = vpop.f32.mrf.mxu0
    %4444 = vdwg.mxu0
    %4445 = vmatpush.bf16.msra.mxu0 %v2924
    %4446 = vmatpush.bf16.msra.mxu0 %v2922
    %4447 = vmatpush.bf16.msra.mxu0 %v2920
    %4448 = vmatpush.bf16.msra.mxu0 %v2918
    %4449 = vmatpush.bf16.msra.mxu0 %v2916
    %4450 = vmatpush.bf16.msra.mxu0 %v2914
    %4451 = vmatpush.bf16.msra.mxu0 %v2912
    %4452 = vmatpush.bf16.msra.mxu0 %v2910
    %4453 = vmatmul.bf16.gmra.mxu0 %v143
    %v4454 = vpop.f32.mrf.mxu0
    %v4455 = vadd.f32 %v4442, %v4454
    %v4456 = vpop.f32.mrf.mxu0
    %4457 = vdwg.mxu0
    %4458 = vmatpush.bf16.msra.mxu0 %v2940
    %4459 = vmatpush.bf16.msra.mxu0 %v2938
    %4460 = vmatpush.bf16.msra.mxu0 %v2936
    %4461 = vmatpush.bf16.msra.mxu0 %v2934
    %4462 = vmatpush.bf16.msra.mxu0 %v2932
    %4463 = vmatpush.bf16.msra.mxu0 %v2930
    %4464 = vmatpush.bf16.msra.mxu0 %v2928
    %4465 = vmatpush.bf16.msra.mxu0 %v2926
    %4466 = vmatmul.bf16.gmra.mxu0 %v144
    %v4467 = vpop.f32.mrf.mxu0
    %v4468 = vadd.f32 %v4455, %v4467
    %v4469 = vpop.f32.mrf.mxu0
    %4470 = vdwg.mxu0
    %4471 = vmatpush.bf16.msra.mxu0 %v2956
    %4472 = vmatpush.bf16.msra.mxu0 %v2954
    %4473 = vmatpush.bf16.msra.mxu0 %v2952
    %4474 = vmatpush.bf16.msra.mxu0 %v2950
    %4475 = vmatpush.bf16.msra.mxu0 %v2948
    %4476 = vmatpush.bf16.msra.mxu0 %v2946
    %4477 = vmatpush.bf16.msra.mxu0 %v2944
    %4478 = vmatpush.bf16.msra.mxu0 %v2942
    %4479 = vmatmul.bf16.gmra.mxu0 %v145
    %v4480 = vpop.f32.mrf.mxu0
    %v4481 = vadd.f32 %v4468, %v4480
    %v4482 = vpop.f32.mrf.mxu0
    %4483 = vdwg.mxu0
    %4484 = vmatpush.bf16.msra.mxu0 %v2972
    %4485 = vmatpush.bf16.msra.mxu0 %v2970
    %4486 = vmatpush.bf16.msra.mxu0 %v2968
    %4487 = vmatpush.bf16.msra.mxu0 %v2966
    %4488 = vmatpush.bf16.msra.mxu0 %v2964
    %4489 = vmatpush.bf16.msra.mxu0 %v2962
    %4490 = vmatpush.bf16.msra.mxu0 %v2960
    %4491 = vmatpush.bf16.msra.mxu0 %v2958
    %4492 = vmatmul.bf16.gmra.mxu0 %v146
    %v4493 = vpop.f32.mrf.mxu0
    %v4494 = vadd.f32 %v4481, %v4493
    %v4495 = vpop.f32.mrf.mxu0
    %4496 = vdwg.mxu0
    %4497 = vmatpush.bf16.msra.mxu0 %v2988
    %4498 = vmatpush.bf16.msra.mxu0 %v2986
    %4499 = vmatpush.bf16.msra.mxu0 %v2984
    %4500 = vmatpush.bf16.msra.mxu0 %v2982
    %4501 = vmatpush.bf16.msra.mxu0 %v2980
    %4502 = vmatpush.bf16.msra.mxu0 %v2978
    %4503 = vmatpush.bf16.msra.mxu0 %v2976
    %4504 = vmatpush.bf16.msra.mxu0 %v2974
    %4505 = vmatmul.bf16.gmra.mxu0 %v147
    %v4506 = vpop.f32.mrf.mxu0
    %v4507 = vadd.f32 %v4494, %v4506
    %v4508 = vpop.f32.mrf.mxu0
    %4509 = vdwg.mxu0
    %4510 = vmatpush.bf16.msra.mxu0 %v3004
    %4511 = vmatpush.bf16.msra.mxu0 %v3002
    %4512 = vmatpush.bf16.msra.mxu0 %v3000
    %4513 = vmatpush.bf16.msra.mxu0 %v2998
    %4514 = vmatpush.bf16.msra.mxu0 %v2996
    %4515 = vmatpush.bf16.msra.mxu0 %v2994
    %4516 = vmatpush.bf16.msra.mxu0 %v2992
    %4517 = vmatpush.bf16.msra.mxu0 %v2990
    %4518 = vmatmul.bf16.gmra.mxu0 %v148
    %v4519 = vpop.f32.mrf.mxu0
    %v4520 = vadd.f32 %v4507, %v4519
    %v4521 = vpop.f32.mrf.mxu0
    %4522 = vdwg.mxu0
    %4523 = vmatpush.bf16.msra.mxu0 %v3020
    %4524 = vmatpush.bf16.msra.mxu0 %v3018
    %4525 = vmatpush.bf16.msra.mxu0 %v3016
    %4526 = vmatpush.bf16.msra.mxu0 %v3014
    %4527 = vmatpush.bf16.msra.mxu0 %v3012
    %4528 = vmatpush.bf16.msra.mxu0 %v3010
    %4529 = vmatpush.bf16.msra.mxu0 %v3008
    %4530 = vmatpush.bf16.msra.mxu0 %v3006
    %4531 = vmatmul.bf16.gmra.mxu0 %v149
    %v4532 = vpop.f32.mrf.mxu0
    %v4533 = vadd.f32 %v4520, %v4532
    %v4534 = vpop.f32.mrf.mxu0
    %4535 = vdwg.mxu0
    %4536 = vmatpush.bf16.msra.mxu0 %v3036
    %4537 = vmatpush.bf16.msra.mxu0 %v3034
    %4538 = vmatpush.bf16.msra.mxu0 %v3032
    %4539 = vmatpush.bf16.msra.mxu0 %v3030
    %4540 = vmatpush.bf16.msra.mxu0 %v3028
    %4541 = vmatpush.bf16.msra.mxu0 %v3026
    %4542 = vmatpush.bf16.msra.mxu0 %v3024
    %4543 = vmatpush.bf16.msra.mxu0 %v3022
    %4544 = vmatmul.bf16.gmra.mxu0 %v150
    %v4545 = vpop.f32.mrf.mxu0
    %v4546 = vadd.f32 %v4533, %v4545
    %v4547 = vpop.f32.mrf.mxu0
    %4548 = vdwg.mxu0
    %v4551 = vrot.slane %v4546, 6
    %vm4552 = vcmask 1041408
    %v4553 = vsel %vm4552, %v4078, %v4551
    %vm4555 = vcmask 683010
    %vm4556 = vmor %vm4555, %vm4552
    %4557 = vst.msk [vmem:[#allocation2] sm:$0xf] %vm4556, %v4553
    // Predicated region
    $region14: #{tpu_custom_call.1} parent=1 // pred_check
      _
    $region15: #{tpu_custom_call.1} parent=1 // pred_check_branch
      %4559 = sbr.rel (0) target = $region17
    $region16: #{tpu_custom_call.1} parent=1 // pred_region
      %4561 = vsyncadd [#allocation3], 0
      %s4563 = sshll.u32 [#allocation2], 4
      %s4564 = int_to_ptr.vmem [resolvable:$true] %s4563
      %s4565 = sshll.u32 %s3, 4
      %s4566 = int_to_ptr.hbm [resolvable:$true] %s4565
      %4568 = dma.vmem_to_hbm [thread:$0]  %s4564, 64, %s4566, [#allocation3]
    $region17: #{tpu_custom_call.1} parent=1 // pred_fallthru
      _
    // Predicated region
    $region18: #{tpu_custom_call.1} parent=1 // pred_check
      _
    $region19: #{tpu_custom_call.1} parent=1 // pred_check_branch
      %4570 = sbr.rel (0) target = $region21
    $region20: #{tpu_custom_call.1} parent=1 // pred_region
      %4572 = dma.done [#allocation3], 64
    $region21: #{tpu_custom_call.1} parent=1 // pred_fallthru
      _
    %4573 = vsyncpa [#allocation3], 1

</llo_original>
